<compile_context>
chip_gen: v5e
topology: v5e:2x2
jax: 0.10.0
libtpu: 0.0.40
codegen_flags: <defaults>
</compile_context>

<pallas_src>
import jax
import jax.numpy as jnp
from jax.experimental import pallas as pl
from jax.experimental.pallas import tpu as pltpu

# Model hyper-parameters (match the PyTorch module).
S     = 5            # number of spectral convolution supports (= nfreq of SpectralDesign)
NOUT1 = 64           # ML3Layer SpectConv branch width
NOUT2 = 2            # ML3Layer gated tanh*tanh branch width
NIN   = NOUT1 + NOUT2  # 66 = per-layer output width / layer 2-3 input width

# Set to jnp.bfloat16 on v6e/v7x for 2x MXU throughput at larger N; keep f32 by default
# so numerics match the PyTorch reference exactly at these tiny sizes.
MXU_DTYPE = jnp.float32


def build_gnnml3_forward(batch, n_nodes, f_in, *, mxu_dtype=MXU_DTYPE):
    """Returns a fused forward(supports, x, node_mask, params) callable.

    supports : (S, B*N, B*N) block-diagonal dense convolution supports
    x        : (B*N, f_in)   node features (batch folded into node axis)
    node_mask: (B*N, 1)      1.0 for valid nodes (handles padded graphs)
    """
    BN = batch * n_nodes

    def ml3_layer(c, x, ws_ref, bc_ref, wa_ref, ba_ref, wb_ref, bb_ref):
        # --- SpectConv branch: h_s = C_s @ x, stacked along features, ONE weight matmul ---
        hs = [jnp.dot(c[s], x.astype(mxu_dtype), preferred_element_type=jnp.float32)
              for s in range(S)]
        h = jnp.concatenate(hs, axis=-1)                                   # (BN, S*Fin)
        conv = jnp.dot(h.astype(mxu_dtype), ws_ref[...].astype(mxu_dtype),
                       preferred_element_type=jnp.float32) + bc_ref[...]
        conv = jnp.maximum(conv, 0.0)                                      # (BN, 64)
        # --- gated branch: tanh(fc11(x)) * tanh(fc12(x))  (EUP tanh, f32) ---
        ga = jnp.tanh(jnp.dot(x, wa_ref[...], preferred_element_type=jnp.float32)
                      + ba_ref[...])
        gb = jnp.tanh(jnp.dot(x, wb_ref[...], preferred_element_type=jnp.float32)
                      + bb_ref[...])
        return jnp.concatenate([conv, ga * gb], axis=-1)                   # (BN, 66)

    def kernel(c_ref, x_ref, mask_ref,
               ws1, bc1, wa1, ba1, wb1, bb1,
               ws2, bc2, wa2, ba2, wb2, bb2,
               ws3, bc3, wa3, ba3, wb3, bb3,
               wf1, bf1, wf2, bf2,
               o_ref):
        c = c_ref[...].astype(mxu_dtype)            # (S, BN, BN) block-diag supports
        x = x_ref[...].astype(jnp.float32)          # dropout(p=0.2) = identity in eval mode

        x = ml3_layer(c, x, ws1, bc1, wa1, ba1, wb1, bb1)   # (BN, 66)
        x = ml3_layer(c, x, ws2, bc2, wa2, ba2, wb2, bb2)   # (BN, 66)
        x = ml3_layer(c, x, ws3, bc3, wa3, ba3, wb3, bb3)   # (BN, 66)

        # global_mean_pool with per-graph node mask
        mask = mask_ref[...]                                             # (BN, 1)
        xm = (x * mask).reshape(batch, n_nodes, NIN)
        summed = jnp.sum(xm, axis=1)                                     # (B, 66)
        counts = jnp.sum(mask.reshape(batch, n_nodes, 1), axis=1)        # (B, 1)
        pooled = summed / counts                                         # (B, 66)

        h = jnp.dot(pooled, wf1[...], preferred_element_type=jnp.float32) + bf1[...]
        h = jnp.maximum(h, 0.0)                                          # relu(fc1(.))
        o = jnp.dot(h, wf2[...], preferred_element_type=jnp.float32) + bf2[...]
        o_ref[...] = o.astype(o_ref.dtype)                               # fc2, no activation

    def forward(supports, x, node_mask, params):
        args = [supports, x, node_mask]
        for l in (1, 2, 3):
            args += [params[f"ws{l}"], params[f"bc{l}"],
                     params[f"wa{l}"], params[f"ba{l}"],
                     params[f"wb{l}"], params[f"bb{l}"]]
        args += [params["w_fc1"], params["b_fc1"], params["w_fc2"], params["b_fc2"]]

        def _full_spec(arr):
            zeros = (0,) * arr.ndim
            return pl.BlockSpec(arr.shape, lambda i, _z=zeros: _z)

        in_specs = [_full_spec(a) for a in args]

        # Advisory cost estimate (lets XLA schedule support/param prep around the call).
        flops = 0
        fin = f_in
        for _ in range(3):
            flops += 2 * S * BN * BN * fin          # S support matmuls (C_s @ x)
            flops += 2 * BN * (S * fin) * NOUT1     # stacked weight matmul
            flops += 2 * 2 * BN * fin * NOUT2       # fc11 + fc12
            fin = NIN
        flops += 2 * batch * NIN * 32 + 2 * batch * 32 * 1
        transcendentals = 3 * 2 * BN * NOUT2        # tanh evaluations
        bytes_accessed = sum(int(a.size) * a.dtype.itemsize for a in args) + batch * 4

        return pl.pallas_call(
            kernel,
            out_shape=jax.ShapeDtypeStruct((batch, 1), jnp.float32),
            grid=(1,),
            in_specs=in_specs,
            out_specs=pl.BlockSpec((batch, 1), lambda i: (0, 0)),
            compiler_params=pltpu.CompilerParams(dimension_semantics=("arbitrary",)),
            cost_estimate=pl.CostEstimate(flops=flops,
                                          transcendentals=transcendentals,
                                          bytes_accessed=bytes_accessed),
        )(*args)

    return forward


# ---------------------------------------------------------------------------
# Pure-JAX reference (same math, un-fused) for a sanity check.
# ---------------------------------------------------------------------------
def gnnml3_reference(supports, x, node_mask, params, batch, n_nodes):
    hp = jax.lax.Precision.HIGHEST

    def layer(x, l):
        fin = x.shape[-1]
        w3 = params[f"ws{l}"].reshape(S, fin, NOUT1)
        conv = sum(jnp.dot(jnp.dot(supports[s], x, precision=hp), w3[s], precision=hp)
                   for s in range(S)) + params[f"bc{l}"]
        conv = jnp.maximum(conv, 0.0)
        ga = jnp.tanh(jnp.dot(x, params[f"wa{l}"], precision=hp) + params[f"ba{l}"])
        gb = jnp.tanh(jnp.dot(x, params[f"wb{l}"], precision=hp) + params[f"bb{l}"])
        return jnp.concatenate([conv, ga * gb], axis=-1)

    for l in (1, 2, 3):
        x = layer(x, l)
    xm = (x * node_mask).reshape(batch, n_nodes, NIN)
    counts = jnp.sum(node_mask.reshape(batch, n_nodes, 1), axis=1)
    pooled = jnp.sum(xm, axis=1) / counts
    h = jnp.maximum(jnp.dot(pooled, params["w_fc1"], precision=hp) + params["b_fc1"], 0.0)
    return jnp.dot(h, params["w_fc2"], precision=hp) + params["b_fc2"]


# ---------------------------------------------------------------------------
# Glue: synthetic graphs + SpectralDesign-style dense supports (plain JAX, host side).
# ---------------------------------------------------------------------------
def ring_adj(n, chord=None):
    idx = jnp.arange(n)
    a = jnp.zeros((n, n), jnp.float32)
    a = a.at[idx, (idx + 1) % n].set(1.0)
    a = a.at[(idx + 1) % n, idx].set(1.0)
    if chord is not None:
        j = (idx * chord + 3) % n
        a = a.at[idx, j].set(1.0)
        a = a.at[j, idx].set(1.0)
    return a * (1.0 - jnp.eye(n, dtype=jnp.float32))   # no self loops


def spectral_supports(adj, nfreq=S, recfield=2, bandwidth=5.0):
    """Dense analogue of SpectralDesign: nfreq Gaussian band-pass spectral filters of the
    normalized Laplacian, masked to the `recfield`-hop receptive field."""
    n = adj.shape[0]
    deg = adj.sum(axis=1)
    d_inv_sqrt = jnp.where(deg > 0, 1.0 / jnp.sqrt(deg), 0.0)
    a_norm = adj * d_inv_sqrt[:, None] * d_inv_sqrt[None, :]
    lap = jnp.eye(n, dtype=adj.dtype) - a_norm                 # eigenvalues in [0, 2]
    lam, u = jnp.linalg.eigh(lap)
    hop = jnp.eye(n, dtype=adj.dtype) + adj
    mask = hop
    for _ in range(recfield - 1):
        mask = mask @ hop
    mask = (mask > 0).astype(adj.dtype)
    centers = jnp.linspace(0.0, 2.0, nfreq)
    sups = []
    for s in range(nfreq):
        f = jnp.exp(-bandwidth * (lam - centers[s]) ** 2)
        sups.append(mask * ((u * f[None, :]) @ u.T))
    return jnp.stack(sups, axis=0)                             # (nfreq, n, n)


def block_diag_supports(per_graph):
    """[ (S, N, N) ] * B  ->  (S, B*N, B*N) block-diagonal."""
    b_graphs = len(per_graph)
    s_, n, _ = per_graph[0].shape
    out = jnp.zeros((s_, b_graphs * n, b_graphs * n), jnp.float32)
    for b, c in enumerate(per_graph):
        out = out.at[:, b * n:(b + 1) * n, b * n:(b + 1) * n].set(c)
    return out


if __name__ == "__main__":
    # Small synthetic shapes: 2 graphs, 64 nodes each, 5 input node features
    # (stand-in for dataset.num_features after the SpectralDesign transform).
    B, N, F_IN = 2, 64, 5
    BN = B * N

    key = jax.random.PRNGKey(0)
    ks = jax.random.split(key, 8)

    def glorot(k, shape):
        fan_in, fan_out = shape[-2], shape[-1]
        lim = jnp.sqrt(6.0 / (fan_in + fan_out))
        return jax.random.uniform(k, shape, jnp.float32, -lim, lim)

    def layer_params(k, fin):
        kk = jax.random.split(k, 3)
        return dict(
            ws=glorot(kk[0], (S, fin, NOUT1)).reshape(S * fin, NOUT1),  # stacked SpectConv W
            bc=jnp.zeros((1, NOUT1), jnp.float32),
            wa=glorot(kk[1], (fin, NOUT2)), ba=jnp.zeros((1, NOUT2), jnp.float32),
            wb=glorot(kk[2], (fin, NOUT2)), bb=jnp.zeros((1, NOUT2), jnp.float32),
        )

    params = {}
    fins = [F_IN, NIN, NIN]
    for li in range(3):
        for name, v in layer_params(ks[li], fins[li]).items():
            params[f"{name}{li + 1}"] = v
    params["w_fc1"] = glorot(ks[3], (NIN, 32))
    params["b_fc1"] = 0.01 * jnp.ones((1, 32), jnp.float32)
    params["w_fc2"] = glorot(ks[4], (32, 1))
    params["b_fc2"] = jnp.zeros((1, 1), jnp.float32)

    x = jax.random.normal(ks[5], (BN, F_IN), jnp.float32)
    node_mask = jnp.ones((BN, 1), jnp.float32)   # all graphs fully populated here

    a0 = ring_adj(N)                  # graph 0: ring
    a1 = ring_adj(N, chord=7)         # graph 1: ring + chords
    supports = block_diag_supports([spectral_supports(a0), spectral_supports(a1)])

    forward = jax.jit(build_gnnml3_forward(B, N, F_IN))
    out = forward(supports, x, node_mask, params)
    jax.block_until_ready(out)

    assert out.shape == (B, 1) and out.dtype == jnp.float32
    assert bool(jnp.all(jnp.isfinite(out)))
    ref = gnnml3_reference(supports, x, node_mask, params, B, N)
    assert bool(jnp.allclose(out, ref, rtol=5e-2, atol=5e-2))
    # TODO(synk): training-mode dropout (p=0.2) is not implemented; eval semantics only.
    print("KERNEL_OK")
</pallas_src>

<mosaic_0001>
module attributes {stable_mosaic.version = 11 : i64} {
  func.func @kernel(%arg0: i32, %arg1: memref<5x128x128xf32, #tpu.memory_space<vmem>>, %arg2: memref<128x5xf32, #tpu.memory_space<vmem>>, %arg3: memref<128x1xf32, #tpu.memory_space<vmem>>, %arg4: memref<25x64xf32, #tpu.memory_space<vmem>>, %arg5: memref<1x64xf32, #tpu.memory_space<vmem>>, %arg6: memref<5x2xf32, #tpu.memory_space<vmem>>, %arg7: memref<1x2xf32, #tpu.memory_space<vmem>>, %arg8: memref<5x2xf32, #tpu.memory_space<vmem>>, %arg9: memref<1x2xf32, #tpu.memory_space<vmem>>, %arg10: memref<330x64xf32, #tpu.memory_space<vmem>>, %arg11: memref<1x64xf32, #tpu.memory_space<vmem>>, %arg12: memref<66x2xf32, #tpu.memory_space<vmem>>, %arg13: memref<1x2xf32, #tpu.memory_space<vmem>>, %arg14: memref<66x2xf32, #tpu.memory_space<vmem>>, %arg15: memref<1x2xf32, #tpu.memory_space<vmem>>, %arg16: memref<330x64xf32, #tpu.memory_space<vmem>>, %arg17: memref<1x64xf32, #tpu.memory_space<vmem>>, %arg18: memref<66x2xf32, #tpu.memory_space<vmem>>, %arg19: memref<1x2xf32, #tpu.memory_space<vmem>>, %arg20: memref<66x2xf32, #tpu.memory_space<vmem>>, %arg21: memref<1x2xf32, #tpu.memory_space<vmem>>, %arg22: memref<66x32xf32, #tpu.memory_space<vmem>>, %arg23: memref<1x32xf32, #tpu.memory_space<vmem>>, %arg24: memref<32x1xf32, #tpu.memory_space<vmem>>, %arg25: memref<1x1xf32, #tpu.memory_space<vmem>>, %arg26: memref<2x1xf32, #tpu.memory_space<vmem>>) attributes {dimension_semantics = [#tpu.dimension_semantics<arbitrary>], iteration_bounds = array<i64: 1>, scalar_prefetch = 0 : i64, scratch_operands = 0 : i64, tpu.core_type = #tpu.core_type<tc>, window_params = [{pipeline_mode = #tpu.pipeline_mode<synchronous>, transform_indices = @transform_0, window_bounds = array<i64: 5, 128, 128>}, {pipeline_mode = #tpu.pipeline_mode<synchronous>, transform_indices = @transform_1, window_bounds = array<i64: 128, 5>}, {pipeline_mode = #tpu.pipeline_mode<synchronous>, transform_indices = @transform_2, window_bounds = array<i64: 128, 1>}, {pipeline_mode = #tpu.pipeline_mode<synchronous>, transform_indices = @transform_3, window_bounds = array<i64: 25, 64>}, {pipeline_mode = #tpu.pipeline_mode<synchronous>, transform_indices = @transform_4, window_bounds = array<i64: 1, 64>}, {pipeline_mode = #tpu.pipeline_mode<synchronous>, transform_indices = @transform_5, window_bounds = array<i64: 5, 2>}, {pipeline_mode = #tpu.pipeline_mode<synchronous>, transform_indices = @transform_6, window_bounds = array<i64: 1, 2>}, {pipeline_mode = #tpu.pipeline_mode<synchronous>, transform_indices = @transform_7, window_bounds = array<i64: 5, 2>}, {pipeline_mode = #tpu.pipeline_mode<synchronous>, transform_indices = @transform_8, window_bounds = array<i64: 1, 2>}, {pipeline_mode = #tpu.pipeline_mode<synchronous>, transform_indices = @transform_9, window_bounds = array<i64: 330, 64>}, {pipeline_mode = #tpu.pipeline_mode<synchronous>, transform_indices = @transform_10, window_bounds = array<i64: 1, 64>}, {pipeline_mode = #tpu.pipeline_mode<synchronous>, transform_indices = @transform_11, window_bounds = array<i64: 66, 2>}, {pipeline_mode = #tpu.pipeline_mode<synchronous>, transform_indices = @transform_12, window_bounds = array<i64: 1, 2>}, {pipeline_mode = #tpu.pipeline_mode<synchronous>, transform_indices = @transform_13, window_bounds = array<i64: 66, 2>}, {pipeline_mode = #tpu.pipeline_mode<synchronous>, transform_indices = @transform_14, window_bounds = array<i64: 1, 2>}, {pipeline_mode = #tpu.pipeline_mode<synchronous>, transform_indices = @transform_15, window_bounds = array<i64: 330, 64>}, {pipeline_mode = #tpu.pipeline_mode<synchronous>, transform_indices = @transform_16, window_bounds = array<i64: 1, 64>}, {pipeline_mode = #tpu.pipeline_mode<synchronous>, transform_indices = @transform_17, window_bounds = array<i64: 66, 2>}, {pipeline_mode = #tpu.pipeline_mode<synchronous>, transform_indices = @transform_18, window_bounds = array<i64: 1, 2>}, {pipeline_mode = #tpu.pipeline_mode<synchronous>, transform_indices = @transform_19, window_bounds = array<i64: 66, 2>}, {pipeline_mode = #tpu.pipeline_mode<synchronous>, transform_indices = @transform_20, window_bounds = array<i64: 1, 2>}, {pipeline_mode = #tpu.pipeline_mode<synchronous>, transform_indices = @transform_21, window_bounds = array<i64: 66, 32>}, {pipeline_mode = #tpu.pipeline_mode<synchronous>, transform_indices = @transform_22, window_bounds = array<i64: 1, 32>}, {pipeline_mode = #tpu.pipeline_mode<synchronous>, transform_indices = @transform_23, window_bounds = array<i64: 32, 1>}, {pipeline_mode = #tpu.pipeline_mode<synchronous>, transform_indices = @transform_24, window_bounds = array<i64: 1, 1>}, {pipeline_mode = #tpu.pipeline_mode<synchronous>, transform_indices = @transform_25, window_bounds = array<i64: 2, 1>}]} {
    %c0 = arith.constant 0 : index
    %c0_0 = arith.constant 0 : index
    %c0_1 = arith.constant 0 : index
    %0 = vector.load %arg1[%c0, %c0_0, %c0_1] : memref<5x128x128xf32, #tpu.memory_space<vmem>>, vector<5x128x128xf32>
    %c0_2 = arith.constant 0 : index
    %c0_3 = arith.constant 0 : index
    %1 = vector.load %arg2[%c0_2, %c0_3] : memref<128x5xf32, #tpu.memory_space<vmem>>, vector<128x5xf32>
    %2 = vector.extract_strided_slice %0 {offsets = [0, 0, 0], sizes = [1, 128, 128], strides = [1, 1, 1]} : vector<5x128x128xf32> to vector<1x128x128xf32>
    %3 = vector.shape_cast %2 : vector<1x128x128xf32> to vector<128x128xf32>
    %cst = arith.constant dense<0.000000e+00> : vector<128x5xf32>
    %4 = tpu.matmul %3, %1, %cst {dimension_numbers = #tpu.dot_dimension_numbers<[1], [0], [0], [1], [0, 0, 1, 1], [], []>} : vector<128x128xf32>, vector<128x5xf32>, vector<128x5xf32> -> vector<128x5xf32>
    %5 = vector.extract_strided_slice %0 {offsets = [1, 0, 0], sizes = [1, 128, 128], strides = [1, 1, 1]} : vector<5x128x128xf32> to vector<1x128x128xf32>
    %6 = vector.shape_cast %5 : vector<1x128x128xf32> to vector<128x128xf32>
    %cst_4 = arith.constant dense<0.000000e+00> : vector<128x5xf32>
    %7 = tpu.matmul %6, %1, %cst_4 {dimension_numbers = #tpu.dot_dimension_numbers<[1], [0], [0], [1], [0, 0, 1, 1], [], []>} : vector<128x128xf32>, vector<128x5xf32>, vector<128x5xf32> -> vector<128x5xf32>
    %8 = vector.extract_strided_slice %0 {offsets = [2, 0, 0], sizes = [1, 128, 128], strides = [1, 1, 1]} : vector<5x128x128xf32> to vector<1x128x128xf32>
    %9 = vector.shape_cast %8 : vector<1x128x128xf32> to vector<128x128xf32>
    %cst_5 = arith.constant dense<0.000000e+00> : vector<128x5xf32>
    %10 = tpu.matmul %9, %1, %cst_5 {dimension_numbers = #tpu.dot_dimension_numbers<[1], [0], [0], [1], [0, 0, 1, 1], [], []>} : vector<128x128xf32>, vector<128x5xf32>, vector<128x5xf32> -> vector<128x5xf32>
    %11 = vector.extract_strided_slice %0 {offsets = [3, 0, 0], sizes = [1, 128, 128], strides = [1, 1, 1]} : vector<5x128x128xf32> to vector<1x128x128xf32>
    %12 = vector.shape_cast %11 : vector<1x128x128xf32> to vector<128x128xf32>
    %cst_6 = arith.constant dense<0.000000e+00> : vector<128x5xf32>
    %13 = tpu.matmul %12, %1, %cst_6 {dimension_numbers = #tpu.dot_dimension_numbers<[1], [0], [0], [1], [0, 0, 1, 1], [], []>} : vector<128x128xf32>, vector<128x5xf32>, vector<128x5xf32> -> vector<128x5xf32>
    %14 = vector.extract_strided_slice %0 {offsets = [4, 0, 0], sizes = [1, 128, 128], strides = [1, 1, 1]} : vector<5x128x128xf32> to vector<1x128x128xf32>
    %15 = vector.shape_cast %14 : vector<1x128x128xf32> to vector<128x128xf32>
    %cst_7 = arith.constant dense<0.000000e+00> : vector<128x5xf32>
    %16 = tpu.matmul %15, %1, %cst_7 {dimension_numbers = #tpu.dot_dimension_numbers<[1], [0], [0], [1], [0, 0, 1, 1], [], []>} : vector<128x128xf32>, vector<128x5xf32>, vector<128x5xf32> -> vector<128x5xf32>
    %17 = tpu.concatenate %4, %7, %10, %13, %16 in 1 : vector<128x5xf32>, vector<128x5xf32>, vector<128x5xf32>, vector<128x5xf32>, vector<128x5xf32> -> vector<128x25xf32>
    %c0_8 = arith.constant 0 : index
    %c0_9 = arith.constant 0 : index
    %18 = vector.load %arg4[%c0_8, %c0_9] : memref<25x64xf32, #tpu.memory_space<vmem>>, vector<25x64xf32>
    %cst_10 = arith.constant dense<0.000000e+00> : vector<128x64xf32>
    %19 = tpu.matmul %17, %18, %cst_10 {dimension_numbers = #tpu.dot_dimension_numbers<[1], [0], [0], [1], [0, 0, 1, 1], [], []>} : vector<128x25xf32>, vector<25x64xf32>, vector<128x64xf32> -> vector<128x64xf32>
    %c0_11 = arith.constant 0 : index
    %c0_12 = arith.constant 0 : index
    %20 = vector.load %arg5[%c0_11, %c0_12] : memref<1x64xf32, #tpu.memory_space<vmem>>, vector<1x64xf32>
    %21 = vector.broadcast %20 : vector<1x64xf32> to vector<128x64xf32>
    %22 = arith.addf %19, %21 : vector<128x64xf32>
    %cst_13 = arith.constant 0.000000e+00 : f32
    %23 = vector.broadcast %cst_13 : f32 to vector<128x64xf32>
    %24 = arith.maximumf %22, %23 : vector<128x64xf32>
    %c0_14 = arith.constant 0 : index
    %c0_15 = arith.constant 0 : index
    %25 = vector.load %arg6[%c0_14, %c0_15] : memref<5x2xf32, #tpu.memory_space<vmem>>, vector<5x2xf32>
    %cst_16 = arith.constant dense<0.000000e+00> : vector<128x2xf32>
    %26 = tpu.matmul %1, %25, %cst_16 {dimension_numbers = #tpu.dot_dimension_numbers<[1], [0], [0], [1], [0, 0, 1, 1], [], []>} : vector<128x5xf32>, vector<5x2xf32>, vector<128x2xf32> -> vector<128x2xf32>
    %c0_17 = arith.constant 0 : index
    %c0_18 = arith.constant 0 : index
    %27 = vector.load %arg7[%c0_17, %c0_18] : memref<1x2xf32, #tpu.memory_space<vmem>>, vector<1x2xf32>
    %28 = vector.broadcast %27 : vector<1x2xf32> to vector<128x2xf32>
    %29 = arith.addf %26, %28 : vector<128x2xf32>
    %30 = math.tanh %29 : vector<128x2xf32>
    %c0_19 = arith.constant 0 : index
    %c0_20 = arith.constant 0 : index
    %31 = vector.load %arg8[%c0_19, %c0_20] : memref<5x2xf32, #tpu.memory_space<vmem>>, vector<5x2xf32>
    %cst_21 = arith.constant dense<0.000000e+00> : vector<128x2xf32>
    %32 = tpu.matmul %1, %31, %cst_21 {dimension_numbers = #tpu.dot_dimension_numbers<[1], [0], [0], [1], [0, 0, 1, 1], [], []>} : vector<128x5xf32>, vector<5x2xf32>, vector<128x2xf32> -> vector<128x2xf32>
    %c0_22 = arith.constant 0 : index
    %c0_23 = arith.constant 0 : index
    %33 = vector.load %arg9[%c0_22, %c0_23] : memref<1x2xf32, #tpu.memory_space<vmem>>, vector<1x2xf32>
    %34 = vector.broadcast %33 : vector<1x2xf32> to vector<128x2xf32>
    %35 = arith.addf %32, %34 : vector<128x2xf32>
    %36 = math.tanh %35 : vector<128x2xf32>
    %37 = arith.mulf %30, %36 : vector<128x2xf32>
    %38 = tpu.concatenate %24, %37 in 1 : vector<128x64xf32>, vector<128x2xf32> -> vector<128x66xf32>
    %39 = vector.extract_strided_slice %0 {offsets = [0, 0, 0], sizes = [1, 128, 128], strides = [1, 1, 1]} : vector<5x128x128xf32> to vector<1x128x128xf32>
    %40 = vector.shape_cast %39 : vector<1x128x128xf32> to vector<128x128xf32>
    %cst_24 = arith.constant dense<0.000000e+00> : vector<128x66xf32>
    %41 = tpu.matmul %40, %38, %cst_24 {dimension_numbers = #tpu.dot_dimension_numbers<[1], [0], [0], [1], [0, 0, 1, 1], [], []>} : vector<128x128xf32>, vector<128x66xf32>, vector<128x66xf32> -> vector<128x66xf32>
    %42 = vector.extract_strided_slice %0 {offsets = [1, 0, 0], sizes = [1, 128, 128], strides = [1, 1, 1]} : vector<5x128x128xf32> to vector<1x128x128xf32>
    %43 = vector.shape_cast %42 : vector<1x128x128xf32> to vector<128x128xf32>
    %cst_25 = arith.constant dense<0.000000e+00> : vector<128x66xf32>
    %44 = tpu.matmul %43, %38, %cst_25 {dimension_numbers = #tpu.dot_dimension_numbers<[1], [0], [0], [1], [0, 0, 1, 1], [], []>} : vector<128x128xf32>, vector<128x66xf32>, vector<128x66xf32> -> vector<128x66xf32>
    %45 = vector.extract_strided_slice %0 {offsets = [2, 0, 0], sizes = [1, 128, 128], strides = [1, 1, 1]} : vector<5x128x128xf32> to vector<1x128x128xf32>
    %46 = vector.shape_cast %45 : vector<1x128x128xf32> to vector<128x128xf32>
    %cst_26 = arith.constant dense<0.000000e+00> : vector<128x66xf32>
    %47 = tpu.matmul %46, %38, %cst_26 {dimension_numbers = #tpu.dot_dimension_numbers<[1], [0], [0], [1], [0, 0, 1, 1], [], []>} : vector<128x128xf32>, vector<128x66xf32>, vector<128x66xf32> -> vector<128x66xf32>
    %48 = vector.extract_strided_slice %0 {offsets = [3, 0, 0], sizes = [1, 128, 128], strides = [1, 1, 1]} : vector<5x128x128xf32> to vector<1x128x128xf32>
    %49 = vector.shape_cast %48 : vector<1x128x128xf32> to vector<128x128xf32>
    %cst_27 = arith.constant dense<0.000000e+00> : vector<128x66xf32>
    %50 = tpu.matmul %49, %38, %cst_27 {dimension_numbers = #tpu.dot_dimension_numbers<[1], [0], [0], [1], [0, 0, 1, 1], [], []>} : vector<128x128xf32>, vector<128x66xf32>, vector<128x66xf32> -> vector<128x66xf32>
    %51 = vector.extract_strided_slice %0 {offsets = [4, 0, 0], sizes = [1, 128, 128], strides = [1, 1, 1]} : vector<5x128x128xf32> to vector<1x128x128xf32>
    %52 = vector.shape_cast %51 : vector<1x128x128xf32> to vector<128x128xf32>
    %cst_28 = arith.constant dense<0.000000e+00> : vector<128x66xf32>
    %53 = tpu.matmul %52, %38, %cst_28 {dimension_numbers = #tpu.dot_dimension_numbers<[1], [0], [0], [1], [0, 0, 1, 1], [], []>} : vector<128x128xf32>, vector<128x66xf32>, vector<128x66xf32> -> vector<128x66xf32>
    %54 = tpu.concatenate %41, %44, %47, %50, %53 in 1 : vector<128x66xf32>, vector<128x66xf32>, vector<128x66xf32>, vector<128x66xf32>, vector<128x66xf32> -> vector<128x330xf32>
    %c0_29 = arith.constant 0 : index
    %c0_30 = arith.constant 0 : index
    %55 = vector.load %arg10[%c0_29, %c0_30] : memref<330x64xf32, #tpu.memory_space<vmem>>, vector<330x64xf32>
    %cst_31 = arith.constant dense<0.000000e+00> : vector<128x64xf32>
    %56 = tpu.matmul %54, %55, %cst_31 {dimension_numbers = #tpu.dot_dimension_numbers<[1], [0], [0], [1], [0, 0, 1, 1], [], []>} : vector<128x330xf32>, vector<330x64xf32>, vector<128x64xf32> -> vector<128x64xf32>
    %c0_32 = arith.constant 0 : index
    %c0_33 = arith.constant 0 : index
    %57 = vector.load %arg11[%c0_32, %c0_33] : memref<1x64xf32, #tpu.memory_space<vmem>>, vector<1x64xf32>
    %58 = vector.broadcast %57 : vector<1x64xf32> to vector<128x64xf32>
    %59 = arith.addf %56, %58 : vector<128x64xf32>
    %cst_34 = arith.constant 0.000000e+00 : f32
    %60 = vector.broadcast %cst_34 : f32 to vector<128x64xf32>
    %61 = arith.maximumf %59, %60 : vector<128x64xf32>
    %c0_35 = arith.constant 0 : index
    %c0_36 = arith.constant 0 : index
    %62 = vector.load %arg12[%c0_35, %c0_36] : memref<66x2xf32, #tpu.memory_space<vmem>>, vector<66x2xf32>
    %cst_37 = arith.constant dense<0.000000e+00> : vector<128x2xf32>
    %63 = tpu.matmul %38, %62, %cst_37 {dimension_numbers = #tpu.dot_dimension_numbers<[1], [0], [0], [1], [0, 0, 1, 1], [], []>} : vector<128x66xf32>, vector<66x2xf32>, vector<128x2xf32> -> vector<128x2xf32>
    %c0_38 = arith.constant 0 : index
    %c0_39 = arith.constant 0 : index
    %64 = vector.load %arg13[%c0_38, %c0_39] : memref<1x2xf32, #tpu.memory_space<vmem>>, vector<1x2xf32>
    %65 = vector.broadcast %64 : vector<1x2xf32> to vector<128x2xf32>
    %66 = arith.addf %63, %65 : vector<128x2xf32>
    %67 = math.tanh %66 : vector<128x2xf32>
    %c0_40 = arith.constant 0 : index
    %c0_41 = arith.constant 0 : index
    %68 = vector.load %arg14[%c0_40, %c0_41] : memref<66x2xf32, #tpu.memory_space<vmem>>, vector<66x2xf32>
    %cst_42 = arith.constant dense<0.000000e+00> : vector<128x2xf32>
    %69 = tpu.matmul %38, %68, %cst_42 {dimension_numbers = #tpu.dot_dimension_numbers<[1], [0], [0], [1], [0, 0, 1, 1], [], []>} : vector<128x66xf32>, vector<66x2xf32>, vector<128x2xf32> -> vector<128x2xf32>
    %c0_43 = arith.constant 0 : index
    %c0_44 = arith.constant 0 : index
    %70 = vector.load %arg15[%c0_43, %c0_44] : memref<1x2xf32, #tpu.memory_space<vmem>>, vector<1x2xf32>
    %71 = vector.broadcast %70 : vector<1x2xf32> to vector<128x2xf32>
    %72 = arith.addf %69, %71 : vector<128x2xf32>
    %73 = math.tanh %72 : vector<128x2xf32>
    %74 = arith.mulf %67, %73 : vector<128x2xf32>
    %75 = tpu.concatenate %61, %74 in 1 : vector<128x64xf32>, vector<128x2xf32> -> vector<128x66xf32>
    %76 = vector.extract_strided_slice %0 {offsets = [0, 0, 0], sizes = [1, 128, 128], strides = [1, 1, 1]} : vector<5x128x128xf32> to vector<1x128x128xf32>
    %77 = vector.shape_cast %76 : vector<1x128x128xf32> to vector<128x128xf32>
    %cst_45 = arith.constant dense<0.000000e+00> : vector<128x66xf32>
    %78 = tpu.matmul %77, %75, %cst_45 {dimension_numbers = #tpu.dot_dimension_numbers<[1], [0], [0], [1], [0, 0, 1, 1], [], []>} : vector<128x128xf32>, vector<128x66xf32>, vector<128x66xf32> -> vector<128x66xf32>
    %79 = vector.extract_strided_slice %0 {offsets = [1, 0, 0], sizes = [1, 128, 128], strides = [1, 1, 1]} : vector<5x128x128xf32> to vector<1x128x128xf32>
    %80 = vector.shape_cast %79 : vector<1x128x128xf32> to vector<128x128xf32>
    %cst_46 = arith.constant dense<0.000000e+00> : vector<128x66xf32>
    %81 = tpu.matmul %80, %75, %cst_46 {dimension_numbers = #tpu.dot_dimension_numbers<[1], [0], [0], [1], [0, 0, 1, 1], [], []>} : vector<128x128xf32>, vector<128x66xf32>, vector<128x66xf32> -> vector<128x66xf32>
    %82 = vector.extract_strided_slice %0 {offsets = [2, 0, 0], sizes = [1, 128, 128], strides = [1, 1, 1]} : vector<5x128x128xf32> to vector<1x128x128xf32>
    %83 = vector.shape_cast %82 : vector<1x128x128xf32> to vector<128x128xf32>
    %cst_47 = arith.constant dense<0.000000e+00> : vector<128x66xf32>
    %84 = tpu.matmul %83, %75, %cst_47 {dimension_numbers = #tpu.dot_dimension_numbers<[1], [0], [0], [1], [0, 0, 1, 1], [], []>} : vector<128x128xf32>, vector<128x66xf32>, vector<128x66xf32> -> vector<128x66xf32>
    %85 = vector.extract_strided_slice %0 {offsets = [3, 0, 0], sizes = [1, 128, 128], strides = [1, 1, 1]} : vector<5x128x128xf32> to vector<1x128x128xf32>
    %86 = vector.shape_cast %85 : vector<1x128x128xf32> to vector<128x128xf32>
    %cst_48 = arith.constant dense<0.000000e+00> : vector<128x66xf32>
    %87 = tpu.matmul %86, %75, %cst_48 {dimension_numbers = #tpu.dot_dimension_numbers<[1], [0], [0], [1], [0, 0, 1, 1], [], []>} : vector<128x128xf32>, vector<128x66xf32>, vector<128x66xf32> -> vector<128x66xf32>
    %88 = vector.extract_strided_slice %0 {offsets = [4, 0, 0], sizes = [1, 128, 128], strides = [1, 1, 1]} : vector<5x128x128xf32> to vector<1x128x128xf32>
    %89 = vector.shape_cast %88 : vector<1x128x128xf32> to vector<128x128xf32>
    %cst_49 = arith.constant dense<0.000000e+00> : vector<128x66xf32>
    %90 = tpu.matmul %89, %75, %cst_49 {dimension_numbers = #tpu.dot_dimension_numbers<[1], [0], [0], [1], [0, 0, 1, 1], [], []>} : vector<128x128xf32>, vector<128x66xf32>, vector<128x66xf32> -> vector<128x66xf32>
    %91 = tpu.concatenate %78, %81, %84, %87, %90 in 1 : vector<128x66xf32>, vector<128x66xf32>, vector<128x66xf32>, vector<128x66xf32>, vector<128x66xf32> -> vector<128x330xf32>
    %c0_50 = arith.constant 0 : index
    %c0_51 = arith.constant 0 : index
    %92 = vector.load %arg16[%c0_50, %c0_51] : memref<330x64xf32, #tpu.memory_space<vmem>>, vector<330x64xf32>
    %cst_52 = arith.constant dense<0.000000e+00> : vector<128x64xf32>
    %93 = tpu.matmul %91, %92, %cst_52 {dimension_numbers = #tpu.dot_dimension_numbers<[1], [0], [0], [1], [0, 0, 1, 1], [], []>} : vector<128x330xf32>, vector<330x64xf32>, vector<128x64xf32> -> vector<128x64xf32>
    %c0_53 = arith.constant 0 : index
    %c0_54 = arith.constant 0 : index
    %94 = vector.load %arg17[%c0_53, %c0_54] : memref<1x64xf32, #tpu.memory_space<vmem>>, vector<1x64xf32>
    %95 = vector.broadcast %94 : vector<1x64xf32> to vector<128x64xf32>
    %96 = arith.addf %93, %95 : vector<128x64xf32>
    %cst_55 = arith.constant 0.000000e+00 : f32
    %97 = vector.broadcast %cst_55 : f32 to vector<128x64xf32>
    %98 = arith.maximumf %96, %97 : vector<128x64xf32>
    %c0_56 = arith.constant 0 : index
    %c0_57 = arith.constant 0 : index
    %99 = vector.load %arg18[%c0_56, %c0_57] : memref<66x2xf32, #tpu.memory_space<vmem>>, vector<66x2xf32>
    %cst_58 = arith.constant dense<0.000000e+00> : vector<128x2xf32>
    %100 = tpu.matmul %75, %99, %cst_58 {dimension_numbers = #tpu.dot_dimension_numbers<[1], [0], [0], [1], [0, 0, 1, 1], [], []>} : vector<128x66xf32>, vector<66x2xf32>, vector<128x2xf32> -> vector<128x2xf32>
    %c0_59 = arith.constant 0 : index
    %c0_60 = arith.constant 0 : index
    %101 = vector.load %arg19[%c0_59, %c0_60] : memref<1x2xf32, #tpu.memory_space<vmem>>, vector<1x2xf32>
    %102 = vector.broadcast %101 : vector<1x2xf32> to vector<128x2xf32>
    %103 = arith.addf %100, %102 : vector<128x2xf32>
    %104 = math.tanh %103 : vector<128x2xf32>
    %c0_61 = arith.constant 0 : index
    %c0_62 = arith.constant 0 : index
    %105 = vector.load %arg20[%c0_61, %c0_62] : memref<66x2xf32, #tpu.memory_space<vmem>>, vector<66x2xf32>
    %cst_63 = arith.constant dense<0.000000e+00> : vector<128x2xf32>
    %106 = tpu.matmul %75, %105, %cst_63 {dimension_numbers = #tpu.dot_dimension_numbers<[1], [0], [0], [1], [0, 0, 1, 1], [], []>} : vector<128x66xf32>, vector<66x2xf32>, vector<128x2xf32> -> vector<128x2xf32>
    %c0_64 = arith.constant 0 : index
    %c0_65 = arith.constant 0 : index
    %107 = vector.load %arg21[%c0_64, %c0_65] : memref<1x2xf32, #tpu.memory_space<vmem>>, vector<1x2xf32>
    %108 = vector.broadcast %107 : vector<1x2xf32> to vector<128x2xf32>
    %109 = arith.addf %106, %108 : vector<128x2xf32>
    %110 = math.tanh %109 : vector<128x2xf32>
    %111 = arith.mulf %104, %110 : vector<128x2xf32>
    %112 = tpu.concatenate %98, %111 in 1 : vector<128x64xf32>, vector<128x2xf32> -> vector<128x66xf32>
    %c0_66 = arith.constant 0 : index
    %c0_67 = arith.constant 0 : index
    %113 = vector.load %arg3[%c0_66, %c0_67] : memref<128x1xf32, #tpu.memory_space<vmem>>, vector<128x1xf32>
    %114 = vector.broadcast %113 : vector<128x1xf32> to vector<128x66xf32>
    %115 = arith.mulf %112, %114 : vector<128x66xf32>
    %116 = vector.shape_cast %115 : vector<128x66xf32> to vector<2x64x66xf32>
    %cst_68 = arith.constant dense<0.000000e+00> : vector<2x66xf32>
    %117 = vector.multi_reduction <add>, %116, %cst_68 [1] : vector<2x64x66xf32> to vector<2x66xf32>
    %118 = vector.shape_cast %113 : vector<128x1xf32> to vector<2x64x1xf32>
    %cst_69 = arith.constant dense<0.000000e+00> : vector<2x1xf32>
    %119 = vector.multi_reduction <add>, %118, %cst_69 [1] : vector<2x64x1xf32> to vector<2x1xf32>
    %120 = vector.broadcast %119 : vector<2x1xf32> to vector<2x66xf32>
    %121 = arith.divf %117, %120 : vector<2x66xf32>
    %c0_70 = arith.constant 0 : index
    %c0_71 = arith.constant 0 : index
    %122 = vector.load %arg22[%c0_70, %c0_71] : memref<66x32xf32, #tpu.memory_space<vmem>>, vector<66x32xf32>
    %cst_72 = arith.constant dense<0.000000e+00> : vector<2x32xf32>
    %123 = tpu.matmul %121, %122, %cst_72 {dimension_numbers = #tpu.dot_dimension_numbers<[1], [0], [0], [1], [0, 0, 1, 1], [], []>} : vector<2x66xf32>, vector<66x32xf32>, vector<2x32xf32> -> vector<2x32xf32>
    %c0_73 = arith.constant 0 : index
    %c0_74 = arith.constant 0 : index
    %124 = vector.load %arg23[%c0_73, %c0_74] : memref<1x32xf32, #tpu.memory_space<vmem>>, vector<1x32xf32>
    %125 = vector.broadcast %124 : vector<1x32xf32> to vector<2x32xf32>
    %126 = arith.addf %123, %125 : vector<2x32xf32>
    %cst_75 = arith.constant 0.000000e+00 : f32
    %127 = vector.broadcast %cst_75 : f32 to vector<2x32xf32>
    %128 = arith.maximumf %126, %127 : vector<2x32xf32>
    %c0_76 = arith.constant 0 : index
    %c0_77 = arith.constant 0 : index
    %129 = vector.load %arg24[%c0_76, %c0_77] : memref<32x1xf32, #tpu.memory_space<vmem>>, vector<32x1xf32>
    %cst_78 = arith.constant dense<0.000000e+00> : vector<2x1xf32>
    %130 = tpu.matmul %128, %129, %cst_78 {dimension_numbers = #tpu.dot_dimension_numbers<[1], [0], [0], [1], [0, 0, 1, 1], [], []>} : vector<2x32xf32>, vector<32x1xf32>, vector<2x1xf32> -> vector<2x1xf32>
    %c0_79 = arith.constant 0 : index
    %c0_80 = arith.constant 0 : index
    %131 = vector.load %arg25[%c0_79, %c0_80] : memref<1x1xf32, #tpu.memory_space<vmem>>, vector<1x1xf32>
    %132 = vector.broadcast %131 : vector<1x1xf32> to vector<2x1xf32>
    %133 = arith.addf %130, %132 : vector<2x1xf32>
    %c0_81 = arith.constant 0 : index
    %c0_82 = arith.constant 0 : index
    %134 = vector.load %arg26[%c0_81, %c0_82] : memref<2x1xf32, #tpu.memory_space<vmem>>, vector<2x1xf32>
    tpu.vector_store %arg26[%c0_81, %c0_82], %133 {strides = array<i32>} : memref<2x1xf32, #tpu.memory_space<vmem>>, vector<2x1xf32>,
    return
  }
  func.func @transform_0(%arg0: i32) -> (i32, i32, i32) {
    %c0_i32 = arith.constant 0 : i32
    %c0_i32_0 = arith.constant 0 : i32
    %c0_i32_1 = arith.constant 0 : i32
    %c0_i32_2 = arith.constant 0 : i32
    return %c0_i32, %c0_i32_0, %c0_i32_1 : i32, i32, i32
  }
  func.func @transform_1(%arg0: i32) -> (i32, i32) {
    %c0_i32 = arith.constant 0 : i32
    %c0_i32_0 = arith.constant 0 : i32
    %c0_i32_1 = arith.constant 0 : i32
    return %c0_i32, %c0_i32_0 : i32, i32
  }
  func.func @transform_2(%arg0: i32) -> (i32, i32) {
    %c0_i32 = arith.constant 0 : i32
    %c0_i32_0 = arith.constant 0 : i32
    %c0_i32_1 = arith.constant 0 : i32
    return %c0_i32, %c0_i32_0 : i32, i32
  }
  func.func @transform_3(%arg0: i32) -> (i32, i32) {
    %c0_i32 = arith.constant 0 : i32
    %c0_i32_0 = arith.constant 0 : i32
    %c0_i32_1 = arith.constant 0 : i32
    return %c0_i32, %c0_i32_0 : i32, i32
  }
  func.func @transform_4(%arg0: i32) -> (i32, i32) {
    %c0_i32 = arith.constant 0 : i32
    %c0_i32_0 = arith.constant 0 : i32
    %c0_i32_1 = arith.constant 0 : i32
    return %c0_i32, %c0_i32_0 : i32, i32
  }
  func.func @transform_5(%arg0: i32) -> (i32, i32) {
    %c0_i32 = arith.constant 0 : i32
    %c0_i32_0 = arith.constant 0 : i32
    %c0_i32_1 = arith.constant 0 : i32
    return %c0_i32, %c0_i32_0 : i32, i32
  }
  func.func @transform_6(%arg0: i32) -> (i32, i32) {
    %c0_i32 = arith.constant 0 : i32
    %c0_i32_0 = arith.constant 0 : i32
    %c0_i32_1 = arith.constant 0 : i32
    return %c0_i32, %c0_i32_0 : i32, i32
  }
  func.func @transform_7(%arg0: i32) -> (i32, i32) {
    %c0_i32 = arith.constant 0 : i32
    %c0_i32_0 = arith.constant 0 : i32
    %c0_i32_1 = arith.constant 0 : i32
    return %c0_i32, %c0_i32_0 : i32, i32
  }
  func.func @transform_8(%arg0: i32) -> (i32, i32) {
    %c0_i32 = arith.constant 0 : i32
    %c0_i32_0 = arith.constant 0 : i32
    %c0_i32_1 = arith.constant 0 : i32
    return %c0_i32, %c0_i32_0 : i32, i32
  }
  func.func @transform_9(%arg0: i32) -> (i32, i32) {
    %c0_i32 = arith.constant 0 : i32
    %c0_i32_0 = arith.constant 0 : i32
    %c0_i32_1 = arith.constant 0 : i32
    return %c0_i32, %c0_i32_0 : i32, i32
  }
  func.func @transform_10(%arg0: i32) -> (i32, i32) {
    %c0_i32 = arith.constant 0 : i32
    %c0_i32_0 = arith.constant 0 : i32
    %c0_i32_1 = arith.constant 0 : i32
    return %c0_i32, %c0_i32_0 : i32, i32
  }
  func.func @transform_11(%arg0: i32) -> (i32, i32) {
    %c0_i32 = arith.constant 0 : i32
    %c0_i32_0 = arith.constant 0 : i32
    %c0_i32_1 = arith.constant 0 : i32
    return %c0_i32, %c0_i32_0 : i32, i32
  }
  func.func @transform_12(%arg0: i32) -> (i32, i32) {
    %c0_i32 = arith.constant 0 : i32
    %c0_i32_0 = arith.constant 0 : i32
    %c0_i32_1 = arith.constant 0 : i32
    return %c0_i32, %c0_i32_0 : i32, i32
  }
  func.func @transform_13(%arg0: i32) -> (i32, i32) {
    %c0_i32 = arith.constant 0 : i32
    %c0_i32_0 = arith.constant 0 : i32
    %c0_i32_1 = arith.constant 0 : i32
    return %c0_i32, %c0_i32_0 : i32, i32
  }
  func.func @transform_14(%arg0: i32) -> (i32, i32) {
    %c0_i32 = arith.constant 0 : i32
    %c0_i32_0 = arith.constant 0 : i32
    %c0_i32_1 = arith.constant 0 : i32
    return %c0_i32, %c0_i32_0 : i32, i32
  }
  func.func @transform_15(%arg0: i32) -> (i32, i32) {
    %c0_i32 = arith.constant 0 : i32
    %c0_i32_0 = arith.constant 0 : i32
    %c0_i32_1 = arith.constant 0 : i32
    return %c0_i32, %c0_i32_0 : i32, i32
  }
  func.func @transform_16(%arg0: i32) -> (i32, i32) {
    %c0_i32 = arith.constant 0 : i32
    %c0_i32_0 = arith.constant 0 : i32
    %c0_i32_1 = arith.constant 0 : i32
    return %c0_i32, %c0_i32_0 : i32, i32
  }
  func.func @transform_17(%arg0: i32) -> (i32, i32) {
    %c0_i32 = arith.constant 0 : i32
    %c0_i32_0 = arith.constant 0 : i32
    %c0_i32_1 = arith.constant 0 : i32
    return %c0_i32, %c0_i32_0 : i32, i32
  }
  func.func @transform_18(%arg0: i32) -> (i32, i32) {
    %c0_i32 = arith.constant 0 : i32
    %c0_i32_0 = arith.constant 0 : i32
    %c0_i32_1 = arith.constant 0 : i32
    return %c0_i32, %c0_i32_0 : i32, i32
  }
  func.func @transform_19(%arg0: i32) -> (i32, i32) {
    %c0_i32 = arith.constant 0 : i32
    %c0_i32_0 = arith.constant 0 : i32
    %c0_i32_1 = arith.constant 0 : i32
    return %c0_i32, %c0_i32_0 : i32, i32
  }
  func.func @transform_20(%arg0: i32) -> (i32, i32) {
    %c0_i32 = arith.constant 0 : i32
    %c0_i32_0 = arith.constant 0 : i32
    %c0_i32_1 = arith.constant 0 : i32
    return %c0_i32, %c0_i32_0 : i32, i32
  }
  func.func @transform_21(%arg0: i32) -> (i32, i32) {
    %c0_i32 = arith.constant 0 : i32
    %c0_i32_0 = arith.constant 0 : i32
    %c0_i32_1 = arith.constant 0 : i32
    return %c0_i32, %c0_i32_0 : i32, i32
  }
  func.func @transform_22(%arg0: i32) -> (i32, i32) {
    %c0_i32 = arith.constant 0 : i32
    %c0_i32_0 = arith.constant 0 : i32
    %c0_i32_1 = arith.constant 0 : i32
    return %c0_i32, %c0_i32_0 : i32, i32
  }
  func.func @transform_23(%arg0: i32) -> (i32, i32) {
    %c0_i32 = arith.constant 0 : i32
    %c0_i32_0 = arith.constant 0 : i32
    %c0_i32_1 = arith.constant 0 : i32
    return %c0_i32, %c0_i32_0 : i32, i32
  }
  func.func @transform_24(%arg0: i32) -> (i32, i32) {
    %c0_i32 = arith.constant 0 : i32
    %c0_i32_0 = arith.constant 0 : i32
    %c0_i32_1 = arith.constant 0 : i32
    return %c0_i32, %c0_i32_0 : i32, i32
  }
  func.func @transform_25(%arg0: i32) -> (i32, i32) {
    %c0_i32 = arith.constant 0 : i32
    %c0_i32_0 = arith.constant 0 : i32
    %c0_i32_1 = arith.constant 0 : i32
    return %c0_i32, %c0_i32_0 : i32, i32
  }
}

</mosaic_0001>

<llo_original>
// kernel: forward.1
$region0: #{forward.1}
  #allocation0 [shape = 'u32[]', space=smem, size = 0x4, offset = 0x4, fixed_abs, tag = 'smem constant byte address 0x4 - core index']
  #allocation1 [shape = 'u32[72,128]{1,0:T(1,128)}', space=vmem, size = 0x9000, scoped, tag = 'internal scratch']
  #allocation2 [shape = 'f32[1,1]{1,0:T(1,128)S(1)}', space=vmem, size = 0x200, scoped, tag = 'scoped memory for forward.1']
  %s0 = inlined_call_operand.vmem [shape: f32[5,128,128], index: 0, kind: input, shape index: {}]
  %s1 = inlined_call_operand.vmem [shape: f32[128,5], index: 1, kind: input, shape index: {}]
  %s2 = inlined_call_operand.vmem [shape: f32[128,1], index: 2, kind: input, shape index: {}]
  %s3 = inlined_call_operand.vmem [shape: f32[25,64], index: 3, kind: input, shape index: {}]
  %s4 = inlined_call_operand.vmem [shape: f32[1,64], index: 4, kind: input, shape index: {}]
  %s5 = inlined_call_operand.vmem [shape: f32[5,2], index: 5, kind: input, shape index: {}]
  %s6 = inlined_call_operand.vmem [shape: f32[1,2], index: 6, kind: input, shape index: {}]
  %s7 = inlined_call_operand.vmem [shape: f32[5,2], index: 7, kind: input, shape index: {}]
  %s8 = inlined_call_operand.vmem [shape: f32[1,2], index: 8, kind: input, shape index: {}]
  %s9 = inlined_call_operand.vmem [shape: f32[330,64], index: 9, kind: input, shape index: {}]
  %s10 = inlined_call_operand.vmem [shape: f32[1,64], index: 10, kind: input, shape index: {}]
  %s11 = inlined_call_operand.vmem [shape: f32[66,2], index: 11, kind: input, shape index: {}]
  %s12 = inlined_call_operand.vmem [shape: f32[1,2], index: 12, kind: input, shape index: {}]
  %s13 = inlined_call_operand.vmem [shape: f32[66,2], index: 13, kind: input, shape index: {}]
  %s14 = inlined_call_operand.vmem [shape: f32[1,2], index: 14, kind: input, shape index: {}]
  %s15 = inlined_call_operand.vmem [shape: f32[330,64], index: 15, kind: input, shape index: {}]
  %s16 = inlined_call_operand.vmem [shape: f32[1,64], index: 16, kind: input, shape index: {}]
  %s17 = inlined_call_operand.vmem [shape: f32[66,2], index: 17, kind: input, shape index: {}]
  %s18 = inlined_call_operand.vmem [shape: f32[1,2], index: 18, kind: input, shape index: {}]
  %s19 = inlined_call_operand.vmem [shape: f32[66,2], index: 19, kind: input, shape index: {}]
  %s20 = inlined_call_operand.vmem [shape: f32[1,2], index: 20, kind: input, shape index: {}]
  %s21 = inlined_call_operand.vmem [shape: f32[66,32], index: 21, kind: input, shape index: {}]
  %s22 = inlined_call_operand.vmem [shape: f32[1,32], index: 22, kind: input, shape index: {}]
  %s23 = inlined_call_operand.vmem [shape: f32[32,1], index: 23, kind: input, shape index: {}]
  %s24 = inlined_call_operand.<no memory space> [shape: f32[1,1], index: 24, kind: input, shape index: {}]
  %s25 = inlined_call_operand.vmem [shape: f32[2,1], index: 25, kind: output, shape index: {}]
  %s26 = sld [smem:[#allocation0]]
  $region110: #{forward.1} parent=0
    _
  %s28 = ssub.s32 1, %s26
  %s29 = scalar_select 0, %s28, %s26
  %v30 = vstv %s24
  %31 = vst [vmem:[#allocation2] sm:$0x1] %v30
  // Predicated region
  $region2: #{forward.1} parent=0 // pred_check
    _
  $region3: #{forward.1} parent=0 // pred_check_branch
    %33 = sbr.rel (0) target = $region5
  $region4: #{forward.1} parent=0 // pred_region
    _
  $region5: #{forward.1} parent=0 // pred_fallthru
    _
  // Predicated region
  $region6: #{forward.1} parent=0 // pred_check
    _
  $region7: #{forward.1} parent=0 // pred_check_branch
    %35 = sbr.rel (0) target = $region9
  $region8: #{forward.1} parent=0 // pred_region
    _
  $region9: #{forward.1} parent=0 // pred_fallthru
    _
  // Predicated region
  $region10: #{forward.1} parent=0 // pred_check
    _
  $region11: #{forward.1} parent=0 // pred_check_branch
    %37 = sbr.rel (0) target = $region13
  $region12: #{forward.1} parent=0 // pred_region
    _
  $region13: #{forward.1} parent=0 // pred_fallthru
    _
  // Predicated region
  $region14: #{forward.1} parent=0 // pred_check
    _
  $region15: #{forward.1} parent=0 // pred_check_branch
    %39 = sbr.rel (0) target = $region17
  $region16: #{forward.1} parent=0 // pred_region
    _
  $region17: #{forward.1} parent=0 // pred_fallthru
    _
  // Predicated region
  $region18: #{forward.1} parent=0 // pred_check
    _
  $region19: #{forward.1} parent=0 // pred_check_branch
    %41 = sbr.rel (0) target = $region21
  $region20: #{forward.1} parent=0 // pred_region
    _
  $region21: #{forward.1} parent=0 // pred_fallthru
    _
  // Predicated region
  $region22: #{forward.1} parent=0 // pred_check
    _
  $region23: #{forward.1} parent=0 // pred_check_branch
    %43 = sbr.rel (0) target = $region25
  $region24: #{forward.1} parent=0 // pred_region
    _
  $region25: #{forward.1} parent=0 // pred_fallthru
    _
  // Predicated region
  $region26: #{forward.1} parent=0 // pred_check
    _
  $region27: #{forward.1} parent=0 // pred_check_branch
    %45 = sbr.rel (0) target = $region29
  $region28: #{forward.1} parent=0 // pred_region
    _
  $region29: #{forward.1} parent=0 // pred_fallthru
    _
  // Predicated region
  $region30: #{forward.1} parent=0 // pred_check
    _
  $region31: #{forward.1} parent=0 // pred_check_branch
    %47 = sbr.rel (0) target = $region33
  $region32: #{forward.1} parent=0 // pred_region
    _
  $region33: #{forward.1} parent=0 // pred_fallthru
    _
  // Predicated region
  $region34: #{forward.1} parent=0 // pred_check
    _
  $region35: #{forward.1} parent=0 // pred_check_branch
    %49 = sbr.rel (0) target = $region37
  $region36: #{forward.1} parent=0 // pred_region
    _
  $region37: #{forward.1} parent=0 // pred_fallthru
    _
  // Predicated region
  $region38: #{forward.1} parent=0 // pred_check
    _
  $region39: #{forward.1} parent=0 // pred_check_branch
    %51 = sbr.rel (0) target = $region41
  $region40: #{forward.1} parent=0 // pred_region
    _
  $region41: #{forward.1} parent=0 // pred_fallthru
    _
  // Predicated region
  $region42: #{forward.1} parent=0 // pred_check
    _
  $region43: #{forward.1} parent=0 // pred_check_branch
    %53 = sbr.rel (0) target = $region45
  $region44: #{forward.1} parent=0 // pred_region
    _
  $region45: #{forward.1} parent=0 // pred_fallthru
    _
  // Predicated region
  $region46: #{forward.1} parent=0 // pred_check
    _
  $region47: #{forward.1} parent=0 // pred_check_branch
    %55 = sbr.rel (0) target = $region49
  $region48: #{forward.1} parent=0 // pred_region
    _
  $region49: #{forward.1} parent=0 // pred_fallthru
    _
  // Predicated region
  $region50: #{forward.1} parent=0 // pred_check
    _
  $region51: #{forward.1} parent=0 // pred_check_branch
    %57 = sbr.rel (0) target = $region53
  $region52: #{forward.1} parent=0 // pred_region
    _
  $region53: #{forward.1} parent=0 // pred_fallthru
    _
  // Predicated region
  $region54: #{forward.1} parent=0 // pred_check
    _
  $region55: #{forward.1} parent=0 // pred_check_branch
    %59 = sbr.rel (0) target = $region57
  $region56: #{forward.1} parent=0 // pred_region
    _
  $region57: #{forward.1} parent=0 // pred_fallthru
    _
  // Predicated region
  $region58: #{forward.1} parent=0 // pred_check
    _
  $region59: #{forward.1} parent=0 // pred_check_branch
    %61 = sbr.rel (0) target = $region61
  $region60: #{forward.1} parent=0 // pred_region
    _
  $region61: #{forward.1} parent=0 // pred_fallthru
    _
  // Predicated region
  $region62: #{forward.1} parent=0 // pred_check
    _
  $region63: #{forward.1} parent=0 // pred_check_branch
    %63 = sbr.rel (0) target = $region65
  $region64: #{forward.1} parent=0 // pred_region
    _
  $region65: #{forward.1} parent=0 // pred_fallthru
    _
  // Predicated region
  $region66: #{forward.1} parent=0 // pred_check
    _
  $region67: #{forward.1} parent=0 // pred_check_branch
    %65 = sbr.rel (0) target = $region69
  $region68: #{forward.1} parent=0 // pred_region
    _
  $region69: #{forward.1} parent=0 // pred_fallthru
    _
  // Predicated region
  $region70: #{forward.1} parent=0 // pred_check
    _
  $region71: #{forward.1} parent=0 // pred_check_branch
    %67 = sbr.rel (0) target = $region73
  $region72: #{forward.1} parent=0 // pred_region
    _
  $region73: #{forward.1} parent=0 // pred_fallthru
    _
  // Predicated region
  $region74: #{forward.1} parent=0 // pred_check
    _
  $region75: #{forward.1} parent=0 // pred_check_branch
    %69 = sbr.rel (0) target = $region77
  $region76: #{forward.1} parent=0 // pred_region
    _
  $region77: #{forward.1} parent=0 // pred_fallthru
    _
  // Predicated region
  $region78: #{forward.1} parent=0 // pred_check
    _
  $region79: #{forward.1} parent=0 // pred_check_branch
    %71 = sbr.rel (0) target = $region81
  $region80: #{forward.1} parent=0 // pred_region
    _
  $region81: #{forward.1} parent=0 // pred_fallthru
    _
  // Predicated region
  $region82: #{forward.1} parent=0 // pred_check
    _
  $region83: #{forward.1} parent=0 // pred_check_branch
    %73 = sbr.rel (0) target = $region85
  $region84: #{forward.1} parent=0 // pred_region
    _
  $region85: #{forward.1} parent=0 // pred_fallthru
    _
  // Predicated region
  $region86: #{forward.1} parent=0 // pred_check
    _
  $region87: #{forward.1} parent=0 // pred_check_branch
    %75 = sbr.rel (0) target = $region89
  $region88: #{forward.1} parent=0 // pred_region
    _
  $region89: #{forward.1} parent=0 // pred_fallthru
    _
  // Predicated region
  $region90: #{forward.1} parent=0 // pred_check
    _
  $region91: #{forward.1} parent=0 // pred_check_branch
    %77 = sbr.rel (0) target = $region93
  $region92: #{forward.1} parent=0 // pred_region
    _
  $region93: #{forward.1} parent=0 // pred_fallthru
    _
  // Predicated region
  $region94: #{forward.1} parent=0 // pred_check
    _
  $region95: #{forward.1} parent=0 // pred_check_branch
    %79 = sbr.rel (0) target = $region97
  $region96: #{forward.1} parent=0 // pred_region
    _
  $region97: #{forward.1} parent=0 // pred_fallthru
    _
  // Predicated region
  $region98: #{forward.1} parent=0 // pred_check
    _
  $region99: #{forward.1} parent=0 // pred_check_branch
    %81 = sbr.rel (0) target = $region101
  $region100: #{forward.1} parent=0 // pred_region
    _
  $region101: #{forward.1} parent=0 // pred_fallthru
    _
  %v82 = vld [vmem:[%s0] sm:$0xff]
  %v83 = vld [vmem:[%s0 + $0x8] sm:$0xff]
  %v84 = vld [vmem:[%s0 + $0x10] sm:$0xff]
  %v85 = vld [vmem:[%s0 + $0x18] sm:$0xff]
  %v86 = vld [vmem:[%s0 + $0x20] sm:$0xff]
  %v87 = vld [vmem:[%s0 + $0x28] sm:$0xff]
  %v88 = vld [vmem:[%s0 + $0x30] sm:$0xff]
  %v89 = vld [vmem:[%s0 + $0x38] sm:$0xff]
  %v90 = vld [vmem:[%s0 + $0x40] sm:$0xff]
  %v91 = vld [vmem:[%s0 + $0x48] sm:$0xff]
  %v92 = vld [vmem:[%s0 + $0x50] sm:$0xff]
  %v93 = vld [vmem:[%s0 + $0x58] sm:$0xff]
  %v94 = vld [vmem:[%s0 + $0x60] sm:$0xff]
  %v95 = vld [vmem:[%s0 + $0x68] sm:$0xff]
  %v96 = vld [vmem:[%s0 + $0x70] sm:$0xff]
  %v97 = vld [vmem:[%s0 + $0x78] sm:$0xff]
  %v98 = vld [vmem:[%s0 + $0x80] sm:$0xff]
  %v99 = vld [vmem:[%s0 + $0x88] sm:$0xff]
  %v100 = vld [vmem:[%s0 + $0x90] sm:$0xff]
  %v101 = vld [vmem:[%s0 + $0x98] sm:$0xff]
  %v102 = vld [vmem:[%s0 + $0xa0] sm:$0xff]
  %v103 = vld [vmem:[%s0 + $0xa8] sm:$0xff]
  %v104 = vld [vmem:[%s0 + $0xb0] sm:$0xff]
  %v105 = vld [vmem:[%s0 + $0xb8] sm:$0xff]
  %v106 = vld [vmem:[%s0 + $0xc0] sm:$0xff]
  %v107 = vld [vmem:[%s0 + $0xc8] sm:$0xff]
  %v108 = vld [vmem:[%s0 + $0xd0] sm:$0xff]
  %v109 = vld [vmem:[%s0 + $0xd8] sm:$0xff]
  %v110 = vld [vmem:[%s0 + $0xe0] sm:$0xff]
  %v111 = vld [vmem:[%s0 + $0xe8] sm:$0xff]
  %v112 = vld [vmem:[%s0 + $0xf0] sm:$0xff]
  %v113 = vld [vmem:[%s0 + $0xf8] sm:$0xff]
  %v114 = vld [vmem:[%s0 + $0x100] sm:$0xff]
  %v115 = vld [vmem:[%s0 + $0x108] sm:$0xff]
  %v116 = vld [vmem:[%s0 + $0x110] sm:$0xff]
  %v117 = vld [vmem:[%s0 + $0x118] sm:$0xff]
  %v118 = vld [vmem:[%s0 + $0x120] sm:$0xff]
  %v119 = vld [vmem:[%s0 + $0x128] sm:$0xff]
  %v120 = vld [vmem:[%s0 + $0x130] sm:$0xff]
  %v121 = vld [vmem:[%s0 + $0x138] sm:$0xff]
  %v122 = vld [vmem:[%s0 + $0x140] sm:$0xff]
  %v123 = vld [vmem:[%s0 + $0x148] sm:$0xff]
  %v124 = vld [vmem:[%s0 + $0x150] sm:$0xff]
  %v125 = vld [vmem:[%s0 + $0x158] sm:$0xff]
  %v126 = vld [vmem:[%s0 + $0x160] sm:$0xff]
  %v127 = vld [vmem:[%s0 + $0x168] sm:$0xff]
  %v128 = vld [vmem:[%s0 + $0x170] sm:$0xff]
  %v129 = vld [vmem:[%s0 + $0x178] sm:$0xff]
  %v130 = vld [vmem:[%s0 + $0x180] sm:$0xff]
  %v131 = vld [vmem:[%s0 + $0x188] sm:$0xff]
  %v132 = vld [vmem:[%s0 + $0x190] sm:$0xff]
  %v133 = vld [vmem:[%s0 + $0x198] sm:$0xff]
  %v134 = vld [vmem:[%s0 + $0x1a0] sm:$0xff]
  %v135 = vld [vmem:[%s0 + $0x1a8] sm:$0xff]
  %v136 = vld [vmem:[%s0 + $0x1b0] sm:$0xff]
  %v137 = vld [vmem:[%s0 + $0x1b8] sm:$0xff]
  %v138 = vld [vmem:[%s0 + $0x1c0] sm:$0xff]
  %v139 = vld [vmem:[%s0 + $0x1c8] sm:$0xff]
  %v140 = vld [vmem:[%s0 + $0x1d0] sm:$0xff]
  %v141 = vld [vmem:[%s0 + $0x1d8] sm:$0xff]
  %v142 = vld [vmem:[%s0 + $0x1e0] sm:$0xff]
  %v143 = vld [vmem:[%s0 + $0x1e8] sm:$0xff]
  %v144 = vld [vmem:[%s0 + $0x1f0] sm:$0xff]
  %v145 = vld [vmem:[%s0 + $0x1f8] sm:$0xff]
  %v146 = vld [vmem:[%s0 + $0x200] sm:$0xff]
  %v147 = vld [vmem:[%s0 + $0x208] sm:$0xff]
  %v148 = vld [vmem:[%s0 + $0x210] sm:$0xff]
  %v149 = vld [vmem:[%s0 + $0x218] sm:$0xff]
  %v150 = vld [vmem:[%s0 + $0x220] sm:$0xff]
  %v151 = vld [vmem:[%s0 + $0x228] sm:$0xff]
  %v152 = vld [vmem:[%s0 + $0x230] sm:$0xff]
  %v153 = vld [vmem:[%s0 + $0x238] sm:$0xff]
  %v154 = vld [vmem:[%s0 + $0x240] sm:$0xff]
  %v155 = vld [vmem:[%s0 + $0x248] sm:$0xff]
  %v156 = vld [vmem:[%s0 + $0x250] sm:$0xff]
  %v157 = vld [vmem:[%s0 + $0x258] sm:$0xff]
  %v158 = vld [vmem:[%s0 + $0x260] sm:$0xff]
  %v159 = vld [vmem:[%s0 + $0x268] sm:$0xff]
  %v160 = vld [vmem:[%s0 + $0x270] sm:$0xff]
  %v161 = vld [vmem:[%s0 + $0x278] sm:$0xff]
  %v162 = vld [vmem:[%s1] sm:$0xff]
  %v163 = vld [vmem:[%s1 + $0x8] sm:$0xff]
  %v164 = vld [vmem:[%s1 + $0x10] sm:$0xff]
  %v165 = vld [vmem:[%s1 + $0x18] sm:$0xff]
  %v166 = vld [vmem:[%s1 + $0x20] sm:$0xff]
  %v167 = vld [vmem:[%s1 + $0x28] sm:$0xff]
  %v168 = vld [vmem:[%s1 + $0x30] sm:$0xff]
  %v169 = vld [vmem:[%s1 + $0x38] sm:$0xff]
  %v170 = vld [vmem:[%s1 + $0x40] sm:$0xff]
  %v171 = vld [vmem:[%s1 + $0x48] sm:$0xff]
  %v172 = vld [vmem:[%s1 + $0x50] sm:$0xff]
  %v173 = vld [vmem:[%s1 + $0x58] sm:$0xff]
  %v174 = vld [vmem:[%s1 + $0x60] sm:$0xff]
  %v175 = vld [vmem:[%s1 + $0x68] sm:$0xff]
  %v176 = vld [vmem:[%s1 + $0x70] sm:$0xff]
  %v177 = vld [vmem:[%s1 + $0x78] sm:$0xff]
  %178 = vmatpush.msra.mxu0 %v177
  %179 = vmatpush.msra.mxu0 %v176
  %180 = vmatpush.msra.mxu0 %v175
  %181 = vmatpush.msra.mxu0 %v174
  %182 = vmatpush.msra.mxu0 %v173
  %183 = vmatpush.msra.mxu0 %v172
  %184 = vmatpush.msra.mxu0 %v171
  %185 = vmatpush.msra.mxu0 %v170
  %186 = vmatpush.msra.mxu0 %v169
  %187 = vmatpush.msra.mxu0 %v168
  %188 = vmatpush.msra.mxu0 %v167
  %189 = vmatpush.msra.mxu0 %v166
  %190 = vmatpush.msra.mxu0 %v165
  %191 = vmatpush.msra.mxu0 %v164
  %192 = vmatpush.msra.mxu0 %v163
  %193 = vmatpush.msra.mxu0 %v162
  %194 = vmatmul.f32.gmra.mxu0 %v82
  %v195 = vpop.f32.mrf.mxu0
  %v196 = vadd.f32 0.0, %v195
  %197 = vmatmul.f32.gmra.mxu0 %v83
  %v198 = vpop.f32.mrf.mxu0
  %v199 = vadd.f32 0.0, %v198
  %200 = vmatmul.f32.gmra.mxu0 %v84
  %v201 = vpop.f32.mrf.mxu0
  %v202 = vadd.f32 0.0, %v201
  %203 = vmatmul.f32.gmra.mxu0 %v85
  %v204 = vpop.f32.mrf.mxu0
  %v205 = vadd.f32 0.0, %v204
  %206 = vmatmul.f32.gmra.mxu0 %v86
  %v207 = vpop.f32.mrf.mxu0
  %v208 = vadd.f32 0.0, %v207
  %209 = vmatmul.f32.gmra.mxu0 %v87
  %v210 = vpop.f32.mrf.mxu0
  %v211 = vadd.f32 0.0, %v210
  %212 = vmatmul.f32.gmra.mxu0 %v88
  %v213 = vpop.f32.mrf.mxu0
  %v214 = vadd.f32 0.0, %v213
  %215 = vmatmul.f32.gmra.mxu0 %v89
  %v216 = vpop.f32.mrf.mxu0
  %v217 = vadd.f32 0.0, %v216
  %218 = vmatmul.f32.gmra.mxu0 %v90
  %v219 = vpop.f32.mrf.mxu0
  %v220 = vadd.f32 0.0, %v219
  %221 = vmatmul.f32.gmra.mxu0 %v91
  %v222 = vpop.f32.mrf.mxu0
  %v223 = vadd.f32 0.0, %v222
  %224 = vmatmul.f32.gmra.mxu0 %v92
  %v225 = vpop.f32.mrf.mxu0
  %v226 = vadd.f32 0.0, %v225
  %227 = vmatmul.f32.gmra.mxu0 %v93
  %v228 = vpop.f32.mrf.mxu0
  %v229 = vadd.f32 0.0, %v228
  %230 = vmatmul.f32.gmra.mxu0 %v94
  %v231 = vpop.f32.mrf.mxu0
  %v232 = vadd.f32 0.0, %v231
  %233 = vmatmul.f32.gmra.mxu0 %v95
  %v234 = vpop.f32.mrf.mxu0
  %v235 = vadd.f32 0.0, %v234
  %236 = vmatmul.f32.gmra.mxu0 %v96
  %v237 = vpop.f32.mrf.mxu0
  %v238 = vadd.f32 0.0, %v237
  %239 = vmatmul.f32.gmra.mxu0 %v97
  %v240 = vpop.f32.mrf.mxu0
  %v241 = vadd.f32 0.0, %v240
  %242 = vdwg.mxu0
  %243 = vmatpush.msra.mxu0 %v177
  %244 = vmatpush.msra.mxu0 %v176
  %245 = vmatpush.msra.mxu0 %v175
  %246 = vmatpush.msra.mxu0 %v174
  %247 = vmatpush.msra.mxu0 %v173
  %248 = vmatpush.msra.mxu0 %v172
  %249 = vmatpush.msra.mxu0 %v171
  %250 = vmatpush.msra.mxu0 %v170
  %251 = vmatpush.msra.mxu0 %v169
  %252 = vmatpush.msra.mxu0 %v168
  %253 = vmatpush.msra.mxu0 %v167
  %254 = vmatpush.msra.mxu0 %v166
  %255 = vmatpush.msra.mxu0 %v165
  %256 = vmatpush.msra.mxu0 %v164
  %257 = vmatpush.msra.mxu0 %v163
  %258 = vmatpush.msra.mxu0 %v162
  %259 = vmatmul.f32.gmra.mxu0 %v98
  %v260 = vpop.f32.mrf.mxu0
  %v261 = vadd.f32 0.0, %v260
  %262 = vmatmul.f32.gmra.mxu0 %v99
  %v263 = vpop.f32.mrf.mxu0
  %v264 = vadd.f32 0.0, %v263
  %265 = vmatmul.f32.gmra.mxu0 %v100
  %v266 = vpop.f32.mrf.mxu0
  %v267 = vadd.f32 0.0, %v266
  %268 = vmatmul.f32.gmra.mxu0 %v101
  %v269 = vpop.f32.mrf.mxu0
  %v270 = vadd.f32 0.0, %v269
  %271 = vmatmul.f32.gmra.mxu0 %v102
  %v272 = vpop.f32.mrf.mxu0
  %v273 = vadd.f32 0.0, %v272
  %274 = vmatmul.f32.gmra.mxu0 %v103
  %v275 = vpop.f32.mrf.mxu0
  %v276 = vadd.f32 0.0, %v275
  %277 = vmatmul.f32.gmra.mxu0 %v104
  %v278 = vpop.f32.mrf.mxu0
  %v279 = vadd.f32 0.0, %v278
  %280 = vmatmul.f32.gmra.mxu0 %v105
  %v281 = vpop.f32.mrf.mxu0
  %v282 = vadd.f32 0.0, %v281
  %283 = vmatmul.f32.gmra.mxu0 %v106
  %v284 = vpop.f32.mrf.mxu0
  %v285 = vadd.f32 0.0, %v284
  %286 = vmatmul.f32.gmra.mxu0 %v107
  %v287 = vpop.f32.mrf.mxu0
  %v288 = vadd.f32 0.0, %v287
  %289 = vmatmul.f32.gmra.mxu0 %v108
  %v290 = vpop.f32.mrf.mxu0
  %v291 = vadd.f32 0.0, %v290
  %292 = vmatmul.f32.gmra.mxu0 %v109
  %v293 = vpop.f32.mrf.mxu0
  %v294 = vadd.f32 0.0, %v293
  %295 = vmatmul.f32.gmra.mxu0 %v110
  %v296 = vpop.f32.mrf.mxu0
  %v297 = vadd.f32 0.0, %v296
  %298 = vmatmul.f32.gmra.mxu0 %v111
  %v299 = vpop.f32.mrf.mxu0
  %v300 = vadd.f32 0.0, %v299
  %301 = vmatmul.f32.gmra.mxu0 %v112
  %v302 = vpop.f32.mrf.mxu0
  %v303 = vadd.f32 0.0, %v302
  %304 = vmatmul.f32.gmra.mxu0 %v113
  %v305 = vpop.f32.mrf.mxu0
  %v306 = vadd.f32 0.0, %v305
  %307 = vdwg.mxu0
  %308 = vmatpush.msra.mxu0 %v177
  %309 = vmatpush.msra.mxu0 %v176
  %310 = vmatpush.msra.mxu0 %v175
  %311 = vmatpush.msra.mxu0 %v174
  %312 = vmatpush.msra.mxu0 %v173
  %313 = vmatpush.msra.mxu0 %v172
  %314 = vmatpush.msra.mxu0 %v171
  %315 = vmatpush.msra.mxu0 %v170
  %316 = vmatpush.msra.mxu0 %v169
  %317 = vmatpush.msra.mxu0 %v168
  %318 = vmatpush.msra.mxu0 %v167
  %319 = vmatpush.msra.mxu0 %v166
  %320 = vmatpush.msra.mxu0 %v165
  %321 = vmatpush.msra.mxu0 %v164
  %322 = vmatpush.msra.mxu0 %v163
  %323 = vmatpush.msra.mxu0 %v162
  %324 = vmatmul.f32.gmra.mxu0 %v114
  %v325 = vpop.f32.mrf.mxu0
  %v326 = vadd.f32 0.0, %v325
  %327 = vmatmul.f32.gmra.mxu0 %v115
  %v328 = vpop.f32.mrf.mxu0
  %v329 = vadd.f32 0.0, %v328
  %330 = vmatmul.f32.gmra.mxu0 %v116
  %v331 = vpop.f32.mrf.mxu0
  %v332 = vadd.f32 0.0, %v331
  %333 = vmatmul.f32.gmra.mxu0 %v117
  %v334 = vpop.f32.mrf.mxu0
  %v335 = vadd.f32 0.0, %v334
  %336 = vmatmul.f32.gmra.mxu0 %v118
  %v337 = vpop.f32.mrf.mxu0
  %v338 = vadd.f32 0.0, %v337
  %339 = vmatmul.f32.gmra.mxu0 %v119
  %v340 = vpop.f32.mrf.mxu0
  %v341 = vadd.f32 0.0, %v340
  %342 = vmatmul.f32.gmra.mxu0 %v120
  %v343 = vpop.f32.mrf.mxu0
  %v344 = vadd.f32 0.0, %v343
  %345 = vmatmul.f32.gmra.mxu0 %v121
  %v346 = vpop.f32.mrf.mxu0
  %v347 = vadd.f32 0.0, %v346
  %348 = vmatmul.f32.gmra.mxu0 %v122
  %v349 = vpop.f32.mrf.mxu0
  %v350 = vadd.f32 0.0, %v349
  %351 = vmatmul.f32.gmra.mxu0 %v123
  %v352 = vpop.f32.mrf.mxu0
  %v353 = vadd.f32 0.0, %v352
  %354 = vmatmul.f32.gmra.mxu0 %v124
  %v355 = vpop.f32.mrf.mxu0
  %v356 = vadd.f32 0.0, %v355
  %357 = vmatmul.f32.gmra.mxu0 %v125
  %v358 = vpop.f32.mrf.mxu0
  %v359 = vadd.f32 0.0, %v358
  %360 = vmatmul.f32.gmra.mxu0 %v126
  %v361 = vpop.f32.mrf.mxu0
  %v362 = vadd.f32 0.0, %v361
  %363 = vmatmul.f32.gmra.mxu0 %v127
  %v364 = vpop.f32.mrf.mxu0
  %v365 = vadd.f32 0.0, %v364
  %366 = vmatmul.f32.gmra.mxu0 %v128
  %v367 = vpop.f32.mrf.mxu0
  %v368 = vadd.f32 0.0, %v367
  %369 = vmatmul.f32.gmra.mxu0 %v129
  %v370 = vpop.f32.mrf.mxu0
  %v371 = vadd.f32 0.0, %v370
  %372 = vdwg.mxu0
  %373 = vmatpush.msra.mxu0 %v177
  %374 = vmatpush.msra.mxu0 %v176
  %375 = vmatpush.msra.mxu0 %v175
  %376 = vmatpush.msra.mxu0 %v174
  %377 = vmatpush.msra.mxu0 %v173
  %378 = vmatpush.msra.mxu0 %v172
  %379 = vmatpush.msra.mxu0 %v171
  %380 = vmatpush.msra.mxu0 %v170
  %381 = vmatpush.msra.mxu0 %v169
  %382 = vmatpush.msra.mxu0 %v168
  %383 = vmatpush.msra.mxu0 %v167
  %384 = vmatpush.msra.mxu0 %v166
  %385 = vmatpush.msra.mxu0 %v165
  %386 = vmatpush.msra.mxu0 %v164
  %387 = vmatpush.msra.mxu0 %v163
  %388 = vmatpush.msra.mxu0 %v162
  %389 = vmatmul.f32.gmra.mxu0 %v130
  %v390 = vpop.f32.mrf.mxu0
  %v391 = vadd.f32 0.0, %v390
  %392 = vmatmul.f32.gmra.mxu0 %v131
  %v393 = vpop.f32.mrf.mxu0
  %v394 = vadd.f32 0.0, %v393
  %395 = vmatmul.f32.gmra.mxu0 %v132
  %v396 = vpop.f32.mrf.mxu0
  %v397 = vadd.f32 0.0, %v396
  %398 = vmatmul.f32.gmra.mxu0 %v133
  %v399 = vpop.f32.mrf.mxu0
  %v400 = vadd.f32 0.0, %v399
  %401 = vmatmul.f32.gmra.mxu0 %v134
  %v402 = vpop.f32.mrf.mxu0
  %v403 = vadd.f32 0.0, %v402
  %404 = vmatmul.f32.gmra.mxu0 %v135
  %v405 = vpop.f32.mrf.mxu0
  %v406 = vadd.f32 0.0, %v405
  %407 = vmatmul.f32.gmra.mxu0 %v136
  %v408 = vpop.f32.mrf.mxu0
  %v409 = vadd.f32 0.0, %v408
  %410 = vmatmul.f32.gmra.mxu0 %v137
  %v411 = vpop.f32.mrf.mxu0
  %v412 = vadd.f32 0.0, %v411
  %413 = vmatmul.f32.gmra.mxu0 %v138
  %v414 = vpop.f32.mrf.mxu0
  %v415 = vadd.f32 0.0, %v414
  %416 = vmatmul.f32.gmra.mxu0 %v139
  %v417 = vpop.f32.mrf.mxu0
  %v418 = vadd.f32 0.0, %v417
  %419 = vmatmul.f32.gmra.mxu0 %v140
  %v420 = vpop.f32.mrf.mxu0
  %v421 = vadd.f32 0.0, %v420
  %422 = vmatmul.f32.gmra.mxu0 %v141
  %v423 = vpop.f32.mrf.mxu0
  %v424 = vadd.f32 0.0, %v423
  %425 = vmatmul.f32.gmra.mxu0 %v142
  %v426 = vpop.f32.mrf.mxu0
  %v427 = vadd.f32 0.0, %v426
  %428 = vmatmul.f32.gmra.mxu0 %v143
  %v429 = vpop.f32.mrf.mxu0
  %v430 = vadd.f32 0.0, %v429
  %431 = vmatmul.f32.gmra.mxu0 %v144
  %v432 = vpop.f32.mrf.mxu0
  %v433 = vadd.f32 0.0, %v432
  %434 = vmatmul.f32.gmra.mxu0 %v145
  %v435 = vpop.f32.mrf.mxu0
  %v436 = vadd.f32 0.0, %v435
  %437 = vdwg.mxu0
  %438 = vmatpush.msra.mxu0 %v177
  %439 = vmatpush.msra.mxu0 %v176
  %440 = vmatpush.msra.mxu0 %v175
  %441 = vmatpush.msra.mxu0 %v174
  %442 = vmatpush.msra.mxu0 %v173
  %443 = vmatpush.msra.mxu0 %v172
  %444 = vmatpush.msra.mxu0 %v171
  %445 = vmatpush.msra.mxu0 %v170
  %446 = vmatpush.msra.mxu0 %v169
  %447 = vmatpush.msra.mxu0 %v168
  %448 = vmatpush.msra.mxu0 %v167
  %449 = vmatpush.msra.mxu0 %v166
  %450 = vmatpush.msra.mxu0 %v165
  %451 = vmatpush.msra.mxu0 %v164
  %452 = vmatpush.msra.mxu0 %v163
  %453 = vmatpush.msra.mxu0 %v162
  %454 = vmatmul.f32.gmra.mxu0 %v146
  %v455 = vpop.f32.mrf.mxu0
  %v456 = vadd.f32 0.0, %v455
  %457 = vmatmul.f32.gmra.mxu0 %v147
  %v458 = vpop.f32.mrf.mxu0
  %v459 = vadd.f32 0.0, %v458
  %460 = vmatmul.f32.gmra.mxu0 %v148
  %v461 = vpop.f32.mrf.mxu0
  %v462 = vadd.f32 0.0, %v461
  %463 = vmatmul.f32.gmra.mxu0 %v149
  %v464 = vpop.f32.mrf.mxu0
  %v465 = vadd.f32 0.0, %v464
  %466 = vmatmul.f32.gmra.mxu0 %v150
  %v467 = vpop.f32.mrf.mxu0
  %v468 = vadd.f32 0.0, %v467
  %469 = vmatmul.f32.gmra.mxu0 %v151
  %v470 = vpop.f32.mrf.mxu0
  %v471 = vadd.f32 0.0, %v470
  %472 = vmatmul.f32.gmra.mxu0 %v152
  %v473 = vpop.f32.mrf.mxu0
  %v474 = vadd.f32 0.0, %v473
  %475 = vmatmul.f32.gmra.mxu0 %v153
  %v476 = vpop.f32.mrf.mxu0
  %v477 = vadd.f32 0.0, %v476
  %478 = vmatmul.f32.gmra.mxu0 %v154
  %v479 = vpop.f32.mrf.mxu0
  %v480 = vadd.f32 0.0, %v479
  %481 = vmatmul.f32.gmra.mxu0 %v155
  %v482 = vpop.f32.mrf.mxu0
  %v483 = vadd.f32 0.0, %v482
  %484 = vmatmul.f32.gmra.mxu0 %v156
  %v485 = vpop.f32.mrf.mxu0
  %v486 = vadd.f32 0.0, %v485
  %487 = vmatmul.f32.gmra.mxu0 %v157
  %v488 = vpop.f32.mrf.mxu0
  %v489 = vadd.f32 0.0, %v488
  %490 = vmatmul.f32.gmra.mxu0 %v158
  %v491 = vpop.f32.mrf.mxu0
  %v492 = vadd.f32 0.0, %v491
  %493 = vmatmul.f32.gmra.mxu0 %v159
  %v494 = vpop.f32.mrf.mxu0
  %v495 = vadd.f32 0.0, %v494
  %496 = vmatmul.f32.gmra.mxu0 %v160
  %v497 = vpop.f32.mrf.mxu0
  %v498 = vadd.f32 0.0, %v497
  %499 = vmatmul.f32.gmra.mxu0 %v161
  %v500 = vpop.f32.mrf.mxu0
  %v501 = vadd.f32 0.0, %v500
  %502 = vdwg.mxu0
  %519 = vrot.lane.b32.xlu0 %v261, 5
  %v520 = vpop.permute.xlu0 %519
  %521 = vrot.lane.b32.xlu0 %v264, 5
  %v522 = vpop.permute.xlu0 %521
  %523 = vrot.lane.b32.xlu0 %v267, 5
  %v524 = vpop.permute.xlu0 %523
  %525 = vrot.lane.b32.xlu0 %v270, 5
  %v526 = vpop.permute.xlu0 %525
  %527 = vrot.lane.b32.xlu0 %v273, 5
  %v528 = vpop.permute.xlu0 %527
  %529 = vrot.lane.b32.xlu0 %v276, 5
  %v530 = vpop.permute.xlu0 %529
  %531 = vrot.lane.b32.xlu0 %v279, 5
  %v532 = vpop.permute.xlu0 %531
  %533 = vrot.lane.b32.xlu0 %v282, 5
  %v534 = vpop.permute.xlu0 %533
  %535 = vrot.lane.b32.xlu0 %v285, 5
  %v536 = vpop.permute.xlu0 %535
  %537 = vrot.lane.b32.xlu0 %v288, 5
  %v538 = vpop.permute.xlu0 %537
  %539 = vrot.lane.b32.xlu0 %v291, 5
  %v540 = vpop.permute.xlu0 %539
  %541 = vrot.lane.b32.xlu0 %v294, 5
  %v542 = vpop.permute.xlu0 %541
  %543 = vrot.lane.b32.xlu0 %v297, 5
  %v544 = vpop.permute.xlu0 %543
  %545 = vrot.lane.b32.xlu0 %v300, 5
  %v546 = vpop.permute.xlu0 %545
  %547 = vrot.lane.b32.xlu0 %v303, 5
  %v548 = vpop.permute.xlu0 %547
  %549 = vrot.lane.b32.xlu0 %v306, 5
  %v550 = vpop.permute.xlu0 %549
  %583 = vrot.lane.b32.xlu0 %v326, 10
  %v584 = vpop.permute.xlu0 %583
  %585 = vrot.lane.b32.xlu0 %v329, 10
  %v586 = vpop.permute.xlu0 %585
  %587 = vrot.lane.b32.xlu0 %v332, 10
  %v588 = vpop.permute.xlu0 %587
  %589 = vrot.lane.b32.xlu0 %v335, 10
  %v590 = vpop.permute.xlu0 %589
  %591 = vrot.lane.b32.xlu0 %v338, 10
  %v592 = vpop.permute.xlu0 %591
  %593 = vrot.lane.b32.xlu0 %v341, 10
  %v594 = vpop.permute.xlu0 %593
  %595 = vrot.lane.b32.xlu0 %v344, 10
  %v596 = vpop.permute.xlu0 %595
  %597 = vrot.lane.b32.xlu0 %v347, 10
  %v598 = vpop.permute.xlu0 %597
  %599 = vrot.lane.b32.xlu0 %v350, 10
  %v600 = vpop.permute.xlu0 %599
  %601 = vrot.lane.b32.xlu0 %v353, 10
  %v602 = vpop.permute.xlu0 %601
  %603 = vrot.lane.b32.xlu0 %v356, 10
  %v604 = vpop.permute.xlu0 %603
  %605 = vrot.lane.b32.xlu0 %v359, 10
  %v606 = vpop.permute.xlu0 %605
  %607 = vrot.lane.b32.xlu0 %v362, 10
  %v608 = vpop.permute.xlu0 %607
  %609 = vrot.lane.b32.xlu0 %v365, 10
  %v610 = vpop.permute.xlu0 %609
  %611 = vrot.lane.b32.xlu0 %v368, 10
  %v612 = vpop.permute.xlu0 %611
  %613 = vrot.lane.b32.xlu0 %v371, 10
  %v614 = vpop.permute.xlu0 %613
  %647 = vrot.lane.b32.xlu0 %v391, 15
  %v648 = vpop.permute.xlu0 %647
  %649 = vrot.lane.b32.xlu0 %v394, 15
  %v650 = vpop.permute.xlu0 %649
  %651 = vrot.lane.b32.xlu0 %v397, 15
  %v652 = vpop.permute.xlu0 %651
  %653 = vrot.lane.b32.xlu0 %v400, 15
  %v654 = vpop.permute.xlu0 %653
  %655 = vrot.lane.b32.xlu0 %v403, 15
  %v656 = vpop.permute.xlu0 %655
  %657 = vrot.lane.b32.xlu0 %v406, 15
  %v658 = vpop.permute.xlu0 %657
  %659 = vrot.lane.b32.xlu0 %v409, 15
  %v660 = vpop.permute.xlu0 %659
  %661 = vrot.lane.b32.xlu0 %v412, 15
  %v662 = vpop.permute.xlu0 %661
  %663 = vrot.lane.b32.xlu0 %v415, 15
  %v664 = vpop.permute.xlu0 %663
  %665 = vrot.lane.b32.xlu0 %v418, 15
  %v666 = vpop.permute.xlu0 %665
  %667 = vrot.lane.b32.xlu0 %v421, 15
  %v668 = vpop.permute.xlu0 %667
  %669 = vrot.lane.b32.xlu0 %v424, 15
  %v670 = vpop.permute.xlu0 %669
  %671 = vrot.lane.b32.xlu0 %v427, 15
  %v672 = vpop.permute.xlu0 %671
  %673 = vrot.lane.b32.xlu0 %v430, 15
  %v674 = vpop.permute.xlu0 %673
  %675 = vrot.lane.b32.xlu0 %v433, 15
  %v676 = vpop.permute.xlu0 %675
  %677 = vrot.lane.b32.xlu0 %v436, 15
  %v678 = vpop.permute.xlu0 %677
  %711 = vrot.lane.b32.xlu0 %v456, 20
  %v712 = vpop.permute.xlu0 %711
  %713 = vrot.lane.b32.xlu0 %v459, 20
  %v714 = vpop.permute.xlu0 %713
  %715 = vrot.lane.b32.xlu0 %v462, 20
  %v716 = vpop.permute.xlu0 %715
  %717 = vrot.lane.b32.xlu0 %v465, 20
  %v718 = vpop.permute.xlu0 %717
  %719 = vrot.lane.b32.xlu0 %v468, 20
  %v720 = vpop.permute.xlu0 %719
  %721 = vrot.lane.b32.xlu0 %v471, 20
  %v722 = vpop.permute.xlu0 %721
  %723 = vrot.lane.b32.xlu0 %v474, 20
  %v724 = vpop.permute.xlu0 %723
  %725 = vrot.lane.b32.xlu0 %v477, 20
  %v726 = vpop.permute.xlu0 %725
  %727 = vrot.lane.b32.xlu0 %v480, 20
  %v728 = vpop.permute.xlu0 %727
  %729 = vrot.lane.b32.xlu0 %v483, 20
  %v730 = vpop.permute.xlu0 %729
  %731 = vrot.lane.b32.xlu0 %v486, 20
  %v732 = vpop.permute.xlu0 %731
  %733 = vrot.lane.b32.xlu0 %v489, 20
  %v734 = vpop.permute.xlu0 %733
  %735 = vrot.lane.b32.xlu0 %v492, 20
  %v736 = vpop.permute.xlu0 %735
  %737 = vrot.lane.b32.xlu0 %v495, 20
  %v738 = vpop.permute.xlu0 %737
  %739 = vrot.lane.b32.xlu0 %v498, 20
  %v740 = vpop.permute.xlu0 %739
  %741 = vrot.lane.b32.xlu0 %v501, 20
  %v742 = vpop.permute.xlu0 %741
  %vm759 = vcmask 39936
  %v760 = vsel %vm759, %v196, %v520
  %v761 = vsel %vm759, %v199, %v522
  %v762 = vsel %vm759, %v202, %v524
  %v763 = vsel %vm759, %v205, %v526
  %v764 = vsel %vm759, %v208, %v528
  %v765 = vsel %vm759, %v211, %v530
  %v766 = vsel %vm759, %v214, %v532
  %v767 = vsel %vm759, %v217, %v534
  %v768 = vsel %vm759, %v220, %v536
  %v769 = vsel %vm759, %v223, %v538
  %v770 = vsel %vm759, %v226, %v540
  %v771 = vsel %vm759, %v229, %v542
  %v772 = vsel %vm759, %v232, %v544
  %v773 = vsel %vm759, %v235, %v546
  %v774 = vsel %vm759, %v238, %v548
  %v775 = vsel %vm759, %v241, %v550
  %vm776 = vcmask 80896
  %v777 = vsel %vm776, %v760, %v584
  %v778 = vsel %vm776, %v761, %v586
  %v779 = vsel %vm776, %v762, %v588
  %v780 = vsel %vm776, %v763, %v590
  %v781 = vsel %vm776, %v764, %v592
  %v782 = vsel %vm776, %v765, %v594
  %v783 = vsel %vm776, %v766, %v596
  %v784 = vsel %vm776, %v767, %v598
  %v785 = vsel %vm776, %v768, %v600
  %v786 = vsel %vm776, %v769, %v602
  %v787 = vsel %vm776, %v770, %v604
  %v788 = vsel %vm776, %v771, %v606
  %v789 = vsel %vm776, %v772, %v608
  %v790 = vsel %vm776, %v773, %v610
  %v791 = vsel %vm776, %v774, %v612
  %v792 = vsel %vm776, %v775, %v614
  %vm793 = vcmask 121856
  %v794 = vsel %vm793, %v777, %v648
  %v795 = vsel %vm793, %v778, %v650
  %v796 = vsel %vm793, %v779, %v652
  %v797 = vsel %vm793, %v780, %v654
  %v798 = vsel %vm793, %v781, %v656
  %v799 = vsel %vm793, %v782, %v658
  %v800 = vsel %vm793, %v783, %v660
  %v801 = vsel %vm793, %v784, %v662
  %v802 = vsel %vm793, %v785, %v664
  %v803 = vsel %vm793, %v786, %v666
  %v804 = vsel %vm793, %v787, %v668
  %v805 = vsel %vm793, %v788, %v670
  %v806 = vsel %vm793, %v789, %v672
  %v807 = vsel %vm793, %v790, %v674
  %v808 = vsel %vm793, %v791, %v676
  %v809 = vsel %vm793, %v792, %v678
  %vm810 = vcmask 162816
  %v811 = vsel %vm810, %v794, %v712
  %v812 = vsel %vm810, %v795, %v714
  %v813 = vsel %vm810, %v796, %v716
  %v814 = vsel %vm810, %v797, %v718
  %v815 = vsel %vm810, %v798, %v720
  %v816 = vsel %vm810, %v799, %v722
  %v817 = vsel %vm810, %v800, %v724
  %v818 = vsel %vm810, %v801, %v726
  %v819 = vsel %vm810, %v802, %v728
  %v820 = vsel %vm810, %v803, %v730
  %v821 = vsel %vm810, %v804, %v732
  %v822 = vsel %vm810, %v805, %v734
  %v823 = vsel %vm810, %v806, %v736
  %v824 = vsel %vm810, %v807, %v738
  %v825 = vsel %vm810, %v808, %v740
  %v826 = vsel %vm810, %v809, %v742
  %v827 = vld [vmem:[%s3] sm:$0xff]
  %v828 = vld [vmem:[%s3 + $0x8] sm:$0xff]
  %v829 = vld [vmem:[%s3 + $0x10] sm:$0xff]
  %v830 = vld [vmem:[%s3 + $0x18] sm:$0x1]
  %v831 = vld [vmem:[%s4] sm:$0x1]
  %v833 = vperm.slane %v831, 0
  %vm835 = vcmask 203776
  %v837 = vsel %vm835, %v811, 0
  %v840 = vsel %vm835, %v812, 0
  %v843 = vsel %vm835, %v813, 0
  %v846 = vsel %vm835, %v814, 0
  %v849 = vsel %vm835, %v815, 0
  %v852 = vsel %vm835, %v816, 0
  %v855 = vsel %vm835, %v817, 0
  %v858 = vsel %vm835, %v818, 0
  %v861 = vsel %vm835, %v819, 0
  %v864 = vsel %vm835, %v820, 0
  %v867 = vsel %vm835, %v821, 0
  %v870 = vsel %vm835, %v822, 0
  %v873 = vsel %vm835, %v823, 0
  %v876 = vsel %vm835, %v824, 0
  %v879 = vsel %vm835, %v825, 0
  %v882 = vsel %vm835, %v826, 0
  %vm884 = vcmask 1040384
  %v886 = vsel %vm884, %v830, 0
  %888 = vmatpush.msra.mxu0 0.0
  %889 = vmatpush.msra.mxu0 0.0
  %890 = vmatpush.msra.mxu0 0.0
  %891 = vmatpush.msra.mxu0 0.0
  %892 = vmatpush.msra.mxu0 0.0
  %893 = vmatpush.msra.mxu0 0.0
  %894 = vmatpush.msra.mxu0 0.0
  %895 = vmatpush.msra.mxu0 0.0
  %896 = vmatpush.msra.mxu0 0.0
  %897 = vmatpush.msra.mxu0 0.0
  %898 = vmatpush.msra.mxu0 0.0
  %899 = vmatpush.msra.mxu0 0.0
  %900 = vmatpush.msra.mxu0 %v886
  %901 = vmatpush.msra.mxu0 %v829
  %902 = vmatpush.msra.mxu0 %v828
  %903 = vmatpush.msra.mxu0 %v827
  %904 = vmatmul.f32.gmra.mxu0 %v837
  %v905 = vpop.f32.mrf.mxu0
  %v906 = vadd.f32 %v833, %v905
  %907 = vmatmul.f32.gmra.mxu0 %v840
  %v908 = vpop.f32.mrf.mxu0
  %v909 = vadd.f32 %v833, %v908
  %910 = vmatmul.f32.gmra.mxu0 %v843
  %v911 = vpop.f32.mrf.mxu0
  %v912 = vadd.f32 %v833, %v911
  %913 = vmatmul.f32.gmra.mxu0 %v846
  %v914 = vpop.f32.mrf.mxu0
  %v915 = vadd.f32 %v833, %v914
  %916 = vmatmul.f32.gmra.mxu0 %v849
  %v917 = vpop.f32.mrf.mxu0
  %v918 = vadd.f32 %v833, %v917
  %919 = vmatmul.f32.gmra.mxu0 %v852
  %v920 = vpop.f32.mrf.mxu0
  %v921 = vadd.f32 %v833, %v920
  %922 = vmatmul.f32.gmra.mxu0 %v855
  %v923 = vpop.f32.mrf.mxu0
  %v924 = vadd.f32 %v833, %v923
  %925 = vmatmul.f32.gmra.mxu0 %v858
  %v926 = vpop.f32.mrf.mxu0
  %v927 = vadd.f32 %v833, %v926
  %928 = vmatmul.f32.gmra.mxu0 %v861
  %v929 = vpop.f32.mrf.mxu0
  %v930 = vadd.f32 %v833, %v929
  %931 = vmatmul.f32.gmra.mxu0 %v864
  %v932 = vpop.f32.mrf.mxu0
  %v933 = vadd.f32 %v833, %v932
  %934 = vmatmul.f32.gmra.mxu0 %v867
  %v935 = vpop.f32.mrf.mxu0
  %v936 = vadd.f32 %v833, %v935
  %937 = vmatmul.f32.gmra.mxu0 %v870
  %v938 = vpop.f32.mrf.mxu0
  %v939 = vadd.f32 %v833, %v938
  %940 = vmatmul.f32.gmra.mxu0 %v873
  %v941 = vpop.f32.mrf.mxu0
  %v942 = vadd.f32 %v833, %v941
  %943 = vmatmul.f32.gmra.mxu0 %v876
  %v944 = vpop.f32.mrf.mxu0
  %v945 = vadd.f32 %v833, %v944
  %946 = vmatmul.f32.gmra.mxu0 %v879
  %v947 = vpop.f32.mrf.mxu0
  %v948 = vadd.f32 %v833, %v947
  %949 = vmatmul.f32.gmra.mxu0 %v882
  %v950 = vpop.f32.mrf.mxu0
  %v951 = vadd.f32 %v833, %v950
  %952 = vdwg.mxu0
  %v953 = vmax.f32 %v906, 0.0
  %v954 = vmax.f32 %v909, 0.0
  %v955 = vmax.f32 %v912, 0.0
  %v956 = vmax.f32 %v915, 0.0
  %v957 = vmax.f32 %v918, 0.0
  %v958 = vmax.f32 %v921, 0.0
  %v959 = vmax.f32 %v924, 0.0
  %v960 = vmax.f32 %v927, 0.0
  %v961 = vmax.f32 %v930, 0.0
  %v962 = vmax.f32 %v933, 0.0
  %v963 = vmax.f32 %v936, 0.0
  %v964 = vmax.f32 %v939, 0.0
  %v965 = vmax.f32 %v942, 0.0
  %v966 = vmax.f32 %v945, 0.0
  %v967 = vmax.f32 %v948, 0.0
  %v968 = vmax.f32 %v951, 0.0
  %v969 = vld [vmem:[%s5] sm:$0x1f]
  %v970 = vld [vmem:[%s6] sm:$0x1]
  %v972 = vperm.slane %v970, 0
  %v975 = vsel %vm759, %v162, 0
  %v978 = vsel %vm759, %v163, 0
  %v981 = vsel %vm759, %v164, 0
  %v984 = vsel %vm759, %v165, 0
  %v987 = vsel %vm759, %v166, 0
  %v990 = vsel %vm759, %v167, 0
  %v993 = vsel %vm759, %v168, 0
  %v996 = vsel %vm759, %v169, 0
  %v999 = vsel %vm759, %v170, 0
  %v1002 = vsel %vm759, %v171, 0
  %v1005 = vsel %vm759, %v172, 0
  %v1008 = vsel %vm759, %v173, 0
  %v1011 = vsel %vm759, %v174, 0
  %v1014 = vsel %vm759, %v175, 0
  %v1017 = vsel %vm759, %v176, 0
  %v1020 = vsel %vm759, %v177, 0
  %vm1022 = vcmask 1044480
  %v1024 = vsel %vm1022, %v969, 0
  %1026 = vmatpush.msra.mxu0 0.0
  %1027 = vmatpush.msra.mxu0 0.0
  %1028 = vmatpush.msra.mxu0 0.0
  %1029 = vmatpush.msra.mxu0 0.0
  %1030 = vmatpush.msra.mxu0 0.0
  %1031 = vmatpush.msra.mxu0 0.0
  %1032 = vmatpush.msra.mxu0 0.0
  %1033 = vmatpush.msra.mxu0 0.0
  %1034 = vmatpush.msra.mxu0 0.0
  %1035 = vmatpush.msra.mxu0 0.0
  %1036 = vmatpush.msra.mxu0 0.0
  %1037 = vmatpush.msra.mxu0 0.0
  %1038 = vmatpush.msra.mxu0 0.0
  %1039 = vmatpush.msra.mxu0 0.0
  %1040 = vmatpush.msra.mxu0 0.0
  %1041 = vmatpush.msra.mxu0 %v1024
  %1042 = vmatmul.f32.gmra.mxu0 %v975
  %v1043 = vpop.f32.mrf.mxu0
  %v1044 = vadd.f32 %v972, %v1043
  %1045 = vmatmul.f32.gmra.mxu0 %v978
  %v1046 = vpop.f32.mrf.mxu0
  %v1047 = vadd.f32 %v972, %v1046
  %1048 = vmatmul.f32.gmra.mxu0 %v981
  %v1049 = vpop.f32.mrf.mxu0
  %v1050 = vadd.f32 %v972, %v1049
  %1051 = vmatmul.f32.gmra.mxu0 %v984
  %v1052 = vpop.f32.mrf.mxu0
  %v1053 = vadd.f32 %v972, %v1052
  %1054 = vmatmul.f32.gmra.mxu0 %v987
  %v1055 = vpop.f32.mrf.mxu0
  %v1056 = vadd.f32 %v972, %v1055
  %1057 = vmatmul.f32.gmra.mxu0 %v990
  %v1058 = vpop.f32.mrf.mxu0
  %v1059 = vadd.f32 %v972, %v1058
  %1060 = vmatmul.f32.gmra.mxu0 %v993
  %v1061 = vpop.f32.mrf.mxu0
  %v1062 = vadd.f32 %v972, %v1061
  %1063 = vmatmul.f32.gmra.mxu0 %v996
  %v1064 = vpop.f32.mrf.mxu0
  %v1065 = vadd.f32 %v972, %v1064
  %1066 = vmatmul.f32.gmra.mxu0 %v999
  %v1067 = vpop.f32.mrf.mxu0
  %v1068 = vadd.f32 %v972, %v1067
  %1069 = vmatmul.f32.gmra.mxu0 %v1002
  %v1070 = vpop.f32.mrf.mxu0
  %v1071 = vadd.f32 %v972, %v1070
  %1072 = vmatmul.f32.gmra.mxu0 %v1005
  %v1073 = vpop.f32.mrf.mxu0
  %v1074 = vadd.f32 %v972, %v1073
  %1075 = vmatmul.f32.gmra.mxu0 %v1008
  %v1076 = vpop.f32.mrf.mxu0
  %v1077 = vadd.f32 %v972, %v1076
  %1078 = vmatmul.f32.gmra.mxu0 %v1011
  %v1079 = vpop.f32.mrf.mxu0
  %v1080 = vadd.f32 %v972, %v1079
  %1081 = vmatmul.f32.gmra.mxu0 %v1014
  %v1082 = vpop.f32.mrf.mxu0
  %v1083 = vadd.f32 %v972, %v1082
  %1084 = vmatmul.f32.gmra.mxu0 %v1017
  %v1085 = vpop.f32.mrf.mxu0
  %v1086 = vadd.f32 %v972, %v1085
  %1087 = vmatmul.f32.gmra.mxu0 %v1020
  %v1088 = vpop.f32.mrf.mxu0
  %v1089 = vadd.f32 %v972, %v1088
  %1090 = vdwg.mxu0
  %v1091 = vtanh.pop %v1044
  %v1092 = vtanh.pop %v1047
  %v1093 = vtanh.pop %v1050
  %v1094 = vtanh.pop %v1053
  %v1095 = vtanh.pop %v1056
  %v1096 = vtanh.pop %v1059
  %v1097 = vtanh.pop %v1062
  %v1098 = vtanh.pop %v1065
  %v1099 = vtanh.pop %v1068
  %v1100 = vtanh.pop %v1071
  %v1101 = vtanh.pop %v1074
  %v1102 = vtanh.pop %v1077
  %v1103 = vtanh.pop %v1080
  %v1104 = vtanh.pop %v1083
  %v1105 = vtanh.pop %v1086
  %v1106 = vtanh.pop %v1089
  %v1107 = vld [vmem:[%s7] sm:$0x1f]
  %v1108 = vld [vmem:[%s8] sm:$0x1]
  %v1110 = vperm.slane %v1108, 0
  %v1113 = vsel %vm1022, %v1107, 0
  %1115 = vmatpush.msra.mxu0 0.0
  %1116 = vmatpush.msra.mxu0 0.0
  %1117 = vmatpush.msra.mxu0 0.0
  %1118 = vmatpush.msra.mxu0 0.0
  %1119 = vmatpush.msra.mxu0 0.0
  %1120 = vmatpush.msra.mxu0 0.0
  %1121 = vmatpush.msra.mxu0 0.0
  %1122 = vmatpush.msra.mxu0 0.0
  %1123 = vmatpush.msra.mxu0 0.0
  %1124 = vmatpush.msra.mxu0 0.0
  %1125 = vmatpush.msra.mxu0 0.0
  %1126 = vmatpush.msra.mxu0 0.0
  %1127 = vmatpush.msra.mxu0 0.0
  %1128 = vmatpush.msra.mxu0 0.0
  %1129 = vmatpush.msra.mxu0 0.0
  %1130 = vmatpush.msra.mxu0 %v1113
  %1131 = vmatmul.f32.gmra.mxu0 %v975
  %v1132 = vpop.f32.mrf.mxu0
  %v1133 = vadd.f32 %v1110, %v1132
  %1134 = vmatmul.f32.gmra.mxu0 %v978
  %v1135 = vpop.f32.mrf.mxu0
  %v1136 = vadd.f32 %v1110, %v1135
  %1137 = vmatmul.f32.gmra.mxu0 %v981
  %v1138 = vpop.f32.mrf.mxu0
  %v1139 = vadd.f32 %v1110, %v1138
  %1140 = vmatmul.f32.gmra.mxu0 %v984
  %v1141 = vpop.f32.mrf.mxu0
  %v1142 = vadd.f32 %v1110, %v1141
  %1143 = vmatmul.f32.gmra.mxu0 %v987
  %v1144 = vpop.f32.mrf.mxu0
  %v1145 = vadd.f32 %v1110, %v1144
  %1146 = vmatmul.f32.gmra.mxu0 %v990
  %v1147 = vpop.f32.mrf.mxu0
  %v1148 = vadd.f32 %v1110, %v1147
  %1149 = vmatmul.f32.gmra.mxu0 %v993
  %v1150 = vpop.f32.mrf.mxu0
  %v1151 = vadd.f32 %v1110, %v1150
  %1152 = vmatmul.f32.gmra.mxu0 %v996
  %v1153 = vpop.f32.mrf.mxu0
  %v1154 = vadd.f32 %v1110, %v1153
  %1155 = vmatmul.f32.gmra.mxu0 %v999
  %v1156 = vpop.f32.mrf.mxu0
  %v1157 = vadd.f32 %v1110, %v1156
  %1158 = vmatmul.f32.gmra.mxu0 %v1002
  %v1159 = vpop.f32.mrf.mxu0
  %v1160 = vadd.f32 %v1110, %v1159
  %1161 = vmatmul.f32.gmra.mxu0 %v1005
  %v1162 = vpop.f32.mrf.mxu0
  %v1163 = vadd.f32 %v1110, %v1162
  %1164 = vmatmul.f32.gmra.mxu0 %v1008
  %v1165 = vpop.f32.mrf.mxu0
  %v1166 = vadd.f32 %v1110, %v1165
  %1167 = vmatmul.f32.gmra.mxu0 %v1011
  %v1168 = vpop.f32.mrf.mxu0
  %v1169 = vadd.f32 %v1110, %v1168
  %1170 = vmatmul.f32.gmra.mxu0 %v1014
  %v1171 = vpop.f32.mrf.mxu0
  %v1172 = vadd.f32 %v1110, %v1171
  %1173 = vmatmul.f32.gmra.mxu0 %v1017
  %v1174 = vpop.f32.mrf.mxu0
  %v1175 = vadd.f32 %v1110, %v1174
  %1176 = vmatmul.f32.gmra.mxu0 %v1020
  %v1177 = vpop.f32.mrf.mxu0
  %v1178 = vadd.f32 %v1110, %v1177
  %1179 = vdwg.mxu0
  %v1180 = vtanh.pop %v1133
  %v1181 = vtanh.pop %v1136
  %v1182 = vtanh.pop %v1139
  %v1183 = vtanh.pop %v1142
  %v1184 = vtanh.pop %v1145
  %v1185 = vtanh.pop %v1148
  %v1186 = vtanh.pop %v1151
  %v1187 = vtanh.pop %v1154
  %v1188 = vtanh.pop %v1157
  %v1189 = vtanh.pop %v1160
  %v1190 = vtanh.pop %v1163
  %v1191 = vtanh.pop %v1166
  %v1192 = vtanh.pop %v1169
  %v1193 = vtanh.pop %v1172
  %v1194 = vtanh.pop %v1175
  %v1195 = vtanh.pop %v1178
  %v1196 = vmul.f32 %v1091, %v1180
  %v1197 = vmul.f32 %v1092, %v1181
  %v1198 = vmul.f32 %v1093, %v1182
  %v1199 = vmul.f32 %v1094, %v1183
  %v1200 = vmul.f32 %v1095, %v1184
  %v1201 = vmul.f32 %v1096, %v1185
  %v1202 = vmul.f32 %v1097, %v1186
  %v1203 = vmul.f32 %v1098, %v1187
  %v1204 = vmul.f32 %v1099, %v1188
  %v1205 = vmul.f32 %v1100, %v1189
  %v1206 = vmul.f32 %v1101, %v1190
  %v1207 = vmul.f32 %v1102, %v1191
  %v1208 = vmul.f32 %v1103, %v1192
  %v1209 = vmul.f32 %v1104, %v1193
  %v1210 = vmul.f32 %v1105, %v1194
  %v1211 = vmul.f32 %v1106, %v1195
  %1228 = vrot.lane.b32.xlu0 %v1196, 64
  %v1229 = vpop.permute.xlu0 %1228
  %1230 = vrot.lane.b32.xlu0 %v1197, 64
  %v1231 = vpop.permute.xlu0 %1230
  %1232 = vrot.lane.b32.xlu0 %v1198, 64
  %v1233 = vpop.permute.xlu0 %1232
  %1234 = vrot.lane.b32.xlu0 %v1199, 64
  %v1235 = vpop.permute.xlu0 %1234
  %1236 = vrot.lane.b32.xlu0 %v1200, 64
  %v1237 = vpop.permute.xlu0 %1236
  %1238 = vrot.lane.b32.xlu0 %v1201, 64
  %v1239 = vpop.permute.xlu0 %1238
  %1240 = vrot.lane.b32.xlu0 %v1202, 64
  %v1241 = vpop.permute.xlu0 %1240
  %1242 = vrot.lane.b32.xlu0 %v1203, 64
  %v1243 = vpop.permute.xlu0 %1242
  %1244 = vrot.lane.b32.xlu0 %v1204, 64
  %v1245 = vpop.permute.xlu0 %1244
  %1246 = vrot.lane.b32.xlu0 %v1205, 64
  %v1247 = vpop.permute.xlu0 %1246
  %1248 = vrot.lane.b32.xlu0 %v1206, 64
  %v1249 = vpop.permute.xlu0 %1248
  %1250 = vrot.lane.b32.xlu0 %v1207, 64
  %v1251 = vpop.permute.xlu0 %1250
  %1252 = vrot.lane.b32.xlu0 %v1208, 64
  %v1253 = vpop.permute.xlu0 %1252
  %1254 = vrot.lane.b32.xlu0 %v1209, 64
  %v1255 = vpop.permute.xlu0 %1254
  %1256 = vrot.lane.b32.xlu0 %v1210, 64
  %v1257 = vpop.permute.xlu0 %1256
  %1258 = vrot.lane.b32.xlu0 %v1211, 64
  %v1259 = vpop.permute.xlu0 %1258
  %vm1276 = vcmask 523264
  %v1277 = vsel %vm1276, %v953, %v1229
  %v1278 = vsel %vm1276, %v954, %v1231
  %v1279 = vsel %vm1276, %v955, %v1233
  %v1280 = vsel %vm1276, %v956, %v1235
  %v1281 = vsel %vm1276, %v957, %v1237
  %v1282 = vsel %vm1276, %v958, %v1239
  %v1283 = vsel %vm1276, %v959, %v1241
  %v1284 = vsel %vm1276, %v960, %v1243
  %v1285 = vsel %vm1276, %v961, %v1245
  %v1286 = vsel %vm1276, %v962, %v1247
  %v1287 = vsel %vm1276, %v963, %v1249
  %v1288 = vsel %vm1276, %v964, %v1251
  %v1289 = vsel %vm1276, %v965, %v1253
  %v1290 = vsel %vm1276, %v966, %v1255
  %v1291 = vsel %vm1276, %v967, %v1257
  %v1292 = vsel %vm1276, %v968, %v1259
  %1293 = vmatpush.msra.mxu0 %v1292
  %1294 = vmatpush.msra.mxu0 %v1291
  %1295 = vmatpush.msra.mxu0 %v1290
  %1296 = vmatpush.msra.mxu0 %v1289
  %1297 = vmatpush.msra.mxu0 %v1288
  %1298 = vmatpush.msra.mxu0 %v1287
  %1299 = vmatpush.msra.mxu0 %v1286
  %1300 = vmatpush.msra.mxu0 %v1285
  %1301 = vmatpush.msra.mxu0 %v1284
  %1302 = vmatpush.msra.mxu0 %v1283
  %1303 = vmatpush.msra.mxu0 %v1282
  %1304 = vmatpush.msra.mxu0 %v1281
  %1305 = vmatpush.msra.mxu0 %v1280
  %1306 = vmatpush.msra.mxu0 %v1279
  %1307 = vmatpush.msra.mxu0 %v1278
  %1308 = vmatpush.msra.mxu0 %v1277
  %1309 = vmatmul.f32.gmra.mxu0 %v82
  %v1310 = vpop.f32.mrf.mxu0
  %v1311 = vadd.f32 0.0, %v1310
  %1312 = vmatmul.f32.gmra.mxu0 %v83
  %v1313 = vpop.f32.mrf.mxu0
  %v1314 = vadd.f32 0.0, %v1313
  %1315 = vmatmul.f32.gmra.mxu0 %v84
  %v1316 = vpop.f32.mrf.mxu0
  %v1317 = vadd.f32 0.0, %v1316
  %1318 = vmatmul.f32.gmra.mxu0 %v85
  %v1319 = vpop.f32.mrf.mxu0
  %v1320 = vadd.f32 0.0, %v1319
  %1321 = vmatmul.f32.gmra.mxu0 %v86
  %v1322 = vpop.f32.mrf.mxu0
  %v1323 = vadd.f32 0.0, %v1322
  %1324 = vmatmul.f32.gmra.mxu0 %v87
  %v1325 = vpop.f32.mrf.mxu0
  %v1326 = vadd.f32 0.0, %v1325
  %1327 = vmatmul.f32.gmra.mxu0 %v88
  %v1328 = vpop.f32.mrf.mxu0
  %v1329 = vadd.f32 0.0, %v1328
  %1330 = vmatmul.f32.gmra.mxu0 %v89
  %v1331 = vpop.f32.mrf.mxu0
  %v1332 = vadd.f32 0.0, %v1331
  %1333 = vmatmul.f32.gmra.mxu0 %v90
  %v1334 = vpop.f32.mrf.mxu0
  %v1335 = vadd.f32 0.0, %v1334
  %1336 = vmatmul.f32.gmra.mxu0 %v91
  %v1337 = vpop.f32.mrf.mxu0
  %v1338 = vadd.f32 0.0, %v1337
  %1339 = vmatmul.f32.gmra.mxu0 %v92
  %v1340 = vpop.f32.mrf.mxu0
  %v1341 = vadd.f32 0.0, %v1340
  %1342 = vmatmul.f32.gmra.mxu0 %v93
  %v1343 = vpop.f32.mrf.mxu0
  %v1344 = vadd.f32 0.0, %v1343
  %1345 = vmatmul.f32.gmra.mxu0 %v94
  %v1346 = vpop.f32.mrf.mxu0
  %v1347 = vadd.f32 0.0, %v1346
  %1348 = vmatmul.f32.gmra.mxu0 %v95
  %v1349 = vpop.f32.mrf.mxu0
  %v1350 = vadd.f32 0.0, %v1349
  %1351 = vmatmul.f32.gmra.mxu0 %v96
  %v1352 = vpop.f32.mrf.mxu0
  %v1353 = vadd.f32 0.0, %v1352
  %1354 = vmatmul.f32.gmra.mxu0 %v97
  %v1355 = vpop.f32.mrf.mxu0
  %v1356 = vadd.f32 0.0, %v1355
  %1357 = vdwg.mxu0
  %1358 = vmatpush.msra.mxu0 %v1292
  %1359 = vmatpush.msra.mxu0 %v1291
  %1360 = vmatpush.msra.mxu0 %v1290
  %1361 = vmatpush.msra.mxu0 %v1289
  %1362 = vmatpush.msra.mxu0 %v1288
  %1363 = vmatpush.msra.mxu0 %v1287
  %1364 = vmatpush.msra.mxu0 %v1286
  %1365 = vmatpush.msra.mxu0 %v1285
  %1366 = vmatpush.msra.mxu0 %v1284
  %1367 = vmatpush.msra.mxu0 %v1283
  %1368 = vmatpush.msra.mxu0 %v1282
  %1369 = vmatpush.msra.mxu0 %v1281
  %1370 = vmatpush.msra.mxu0 %v1280
  %1371 = vmatpush.msra.mxu0 %v1279
  %1372 = vmatpush.msra.mxu0 %v1278
  %1373 = vmatpush.msra.mxu0 %v1277
  %1374 = vmatmul.f32.gmra.mxu0 %v98
  %v1375 = vpop.f32.mrf.mxu0
  %v1376 = vadd.f32 0.0, %v1375
  %1377 = vmatmul.f32.gmra.mxu0 %v99
  %v1378 = vpop.f32.mrf.mxu0
  %v1379 = vadd.f32 0.0, %v1378
  %1380 = vmatmul.f32.gmra.mxu0 %v100
  %v1381 = vpop.f32.mrf.mxu0
  %v1382 = vadd.f32 0.0, %v1381
  %1383 = vmatmul.f32.gmra.mxu0 %v101
  %v1384 = vpop.f32.mrf.mxu0
  %v1385 = vadd.f32 0.0, %v1384
  %1386 = vmatmul.f32.gmra.mxu0 %v102
  %v1387 = vpop.f32.mrf.mxu0
  %v1388 = vadd.f32 0.0, %v1387
  %1389 = vmatmul.f32.gmra.mxu0 %v103
  %v1390 = vpop.f32.mrf.mxu0
  %v1391 = vadd.f32 0.0, %v1390
  %1392 = vmatmul.f32.gmra.mxu0 %v104
  %v1393 = vpop.f32.mrf.mxu0
  %v1394 = vadd.f32 0.0, %v1393
  %1395 = vmatmul.f32.gmra.mxu0 %v105
  %v1396 = vpop.f32.mrf.mxu0
  %v1397 = vadd.f32 0.0, %v1396
  %1398 = vmatmul.f32.gmra.mxu0 %v106
  %v1399 = vpop.f32.mrf.mxu0
  %v1400 = vadd.f32 0.0, %v1399
  %1401 = vmatmul.f32.gmra.mxu0 %v107
  %v1402 = vpop.f32.mrf.mxu0
  %v1403 = vadd.f32 0.0, %v1402
  %1404 = vmatmul.f32.gmra.mxu0 %v108
  %v1405 = vpop.f32.mrf.mxu0
  %v1406 = vadd.f32 0.0, %v1405
  %1407 = vmatmul.f32.gmra.mxu0 %v109
  %v1408 = vpop.f32.mrf.mxu0
  %v1409 = vadd.f32 0.0, %v1408
  %1410 = vmatmul.f32.gmra.mxu0 %v110
  %v1411 = vpop.f32.mrf.mxu0
  %v1412 = vadd.f32 0.0, %v1411
  %1413 = vmatmul.f32.gmra.mxu0 %v111
  %v1414 = vpop.f32.mrf.mxu0
  %v1415 = vadd.f32 0.0, %v1414
  %1416 = vmatmul.f32.gmra.mxu0 %v112
  %v1417 = vpop.f32.mrf.mxu0
  %v1418 = vadd.f32 0.0, %v1417
  %1419 = vmatmul.f32.gmra.mxu0 %v113
  %v1420 = vpop.f32.mrf.mxu0
  %v1421 = vadd.f32 0.0, %v1420
  %1422 = vdwg.mxu0
  %1423 = vmatpush.msra.mxu0 %v1292
  %1424 = vmatpush.msra.mxu0 %v1291
  %1425 = vmatpush.msra.mxu0 %v1290
  %1426 = vmatpush.msra.mxu0 %v1289
  %1427 = vmatpush.msra.mxu0 %v1288
  %1428 = vmatpush.msra.mxu0 %v1287
  %1429 = vmatpush.msra.mxu0 %v1286
  %1430 = vmatpush.msra.mxu0 %v1285
  %1431 = vmatpush.msra.mxu0 %v1284
  %1432 = vmatpush.msra.mxu0 %v1283
  %1433 = vmatpush.msra.mxu0 %v1282
  %1434 = vmatpush.msra.mxu0 %v1281
  %1435 = vmatpush.msra.mxu0 %v1280
  %1436 = vmatpush.msra.mxu0 %v1279
  %1437 = vmatpush.msra.mxu0 %v1278
  %1438 = vmatpush.msra.mxu0 %v1277
  %1439 = vmatmul.f32.gmra.mxu0 %v114
  %v1440 = vpop.f32.mrf.mxu0
  %v1441 = vadd.f32 0.0, %v1440
  %1442 = vmatmul.f32.gmra.mxu0 %v115
  %v1443 = vpop.f32.mrf.mxu0
  %v1444 = vadd.f32 0.0, %v1443
  %1445 = vmatmul.f32.gmra.mxu0 %v116
  %v1446 = vpop.f32.mrf.mxu0
  %v1447 = vadd.f32 0.0, %v1446
  %1448 = vmatmul.f32.gmra.mxu0 %v117
  %v1449 = vpop.f32.mrf.mxu0
  %v1450 = vadd.f32 0.0, %v1449
  %1451 = vmatmul.f32.gmra.mxu0 %v118
  %v1452 = vpop.f32.mrf.mxu0
  %v1453 = vadd.f32 0.0, %v1452
  %1454 = vmatmul.f32.gmra.mxu0 %v119
  %v1455 = vpop.f32.mrf.mxu0
  %v1456 = vadd.f32 0.0, %v1455
  %1457 = vmatmul.f32.gmra.mxu0 %v120
  %v1458 = vpop.f32.mrf.mxu0
  %v1459 = vadd.f32 0.0, %v1458
  %1460 = vmatmul.f32.gmra.mxu0 %v121
  %v1461 = vpop.f32.mrf.mxu0
  %v1462 = vadd.f32 0.0, %v1461
  %1463 = vmatmul.f32.gmra.mxu0 %v122
  %v1464 = vpop.f32.mrf.mxu0
  %v1465 = vadd.f32 0.0, %v1464
  %1466 = vmatmul.f32.gmra.mxu0 %v123
  %v1467 = vpop.f32.mrf.mxu0
  %v1468 = vadd.f32 0.0, %v1467
  %1469 = vmatmul.f32.gmra.mxu0 %v124
  %v1470 = vpop.f32.mrf.mxu0
  %v1471 = vadd.f32 0.0, %v1470
  %1472 = vmatmul.f32.gmra.mxu0 %v125
  %v1473 = vpop.f32.mrf.mxu0
  %v1474 = vadd.f32 0.0, %v1473
  %1475 = vmatmul.f32.gmra.mxu0 %v126
  %v1476 = vpop.f32.mrf.mxu0
  %v1477 = vadd.f32 0.0, %v1476
  %1478 = vmatmul.f32.gmra.mxu0 %v127
  %v1479 = vpop.f32.mrf.mxu0
  %v1480 = vadd.f32 0.0, %v1479
  %1481 = vmatmul.f32.gmra.mxu0 %v128
  %v1482 = vpop.f32.mrf.mxu0
  %v1483 = vadd.f32 0.0, %v1482
  %1484 = vmatmul.f32.gmra.mxu0 %v129
  %v1485 = vpop.f32.mrf.mxu0
  %v1486 = vadd.f32 0.0, %v1485
  %1487 = vdwg.mxu0
  %1488 = vmatpush.msra.mxu0 %v1292
  %1489 = vmatpush.msra.mxu0 %v1291
  %1490 = vmatpush.msra.mxu0 %v1290
  %1491 = vmatpush.msra.mxu0 %v1289
  %1492 = vmatpush.msra.mxu0 %v1288
  %1493 = vmatpush.msra.mxu0 %v1287
  %1494 = vmatpush.msra.mxu0 %v1286
  %1495 = vmatpush.msra.mxu0 %v1285
  %1496 = vmatpush.msra.mxu0 %v1284
  %1497 = vmatpush.msra.mxu0 %v1283
  %1498 = vmatpush.msra.mxu0 %v1282
  %1499 = vmatpush.msra.mxu0 %v1281
  %1500 = vmatpush.msra.mxu0 %v1280
  %1501 = vmatpush.msra.mxu0 %v1279
  %1502 = vmatpush.msra.mxu0 %v1278
  %1503 = vmatpush.msra.mxu0 %v1277
  %1504 = vmatmul.f32.gmra.mxu0 %v130
  %v1505 = vpop.f32.mrf.mxu0
  %v1506 = vadd.f32 0.0, %v1505
  %1507 = vmatmul.f32.gmra.mxu0 %v131
  %v1508 = vpop.f32.mrf.mxu0
  %v1509 = vadd.f32 0.0, %v1508
  %1510 = vmatmul.f32.gmra.mxu0 %v132
  %v1511 = vpop.f32.mrf.mxu0
  %v1512 = vadd.f32 0.0, %v1511
  %1513 = vmatmul.f32.gmra.mxu0 %v133
  %v1514 = vpop.f32.mrf.mxu0
  %v1515 = vadd.f32 0.0, %v1514
  %1516 = vmatmul.f32.gmra.mxu0 %v134
  %v1517 = vpop.f32.mrf.mxu0
  %v1518 = vadd.f32 0.0, %v1517
  %1519 = vmatmul.f32.gmra.mxu0 %v135
  %v1520 = vpop.f32.mrf.mxu0
  %v1521 = vadd.f32 0.0, %v1520
  %1522 = vmatmul.f32.gmra.mxu0 %v136
  %v1523 = vpop.f32.mrf.mxu0
  %v1524 = vadd.f32 0.0, %v1523
  %1525 = vmatmul.f32.gmra.mxu0 %v137
  %v1526 = vpop.f32.mrf.mxu0
  %v1527 = vadd.f32 0.0, %v1526
  %1528 = vmatmul.f32.gmra.mxu0 %v138
  %v1529 = vpop.f32.mrf.mxu0
  %v1530 = vadd.f32 0.0, %v1529
  %1531 = vmatmul.f32.gmra.mxu0 %v139
  %v1532 = vpop.f32.mrf.mxu0
  %v1533 = vadd.f32 0.0, %v1532
  %1534 = vmatmul.f32.gmra.mxu0 %v140
  %v1535 = vpop.f32.mrf.mxu0
  %v1536 = vadd.f32 0.0, %v1535
  %1537 = vmatmul.f32.gmra.mxu0 %v141
  %v1538 = vpop.f32.mrf.mxu0
  %v1539 = vadd.f32 0.0, %v1538
  %1540 = vmatmul.f32.gmra.mxu0 %v142
  %v1541 = vpop.f32.mrf.mxu0
  %v1542 = vadd.f32 0.0, %v1541
  %1543 = vmatmul.f32.gmra.mxu0 %v143
  %v1544 = vpop.f32.mrf.mxu0
  %v1545 = vadd.f32 0.0, %v1544
  %1546 = vmatmul.f32.gmra.mxu0 %v144
  %v1547 = vpop.f32.mrf.mxu0
  %v1548 = vadd.f32 0.0, %v1547
  %1549 = vmatmul.f32.gmra.mxu0 %v145
  %v1550 = vpop.f32.mrf.mxu0
  %v1551 = vadd.f32 0.0, %v1550
  %1552 = vdwg.mxu0
  %1553 = vmatpush.msra.mxu0 %v1292
  %1554 = vmatpush.msra.mxu0 %v1291
  %1555 = vmatpush.msra.mxu0 %v1290
  %1556 = vmatpush.msra.mxu0 %v1289
  %1557 = vmatpush.msra.mxu0 %v1288
  %1558 = vmatpush.msra.mxu0 %v1287
  %1559 = vmatpush.msra.mxu0 %v1286
  %1560 = vmatpush.msra.mxu0 %v1285
  %1561 = vmatpush.msra.mxu0 %v1284
  %1562 = vmatpush.msra.mxu0 %v1283
  %1563 = vmatpush.msra.mxu0 %v1282
  %1564 = vmatpush.msra.mxu0 %v1281
  %1565 = vmatpush.msra.mxu0 %v1280
  %1566 = vmatpush.msra.mxu0 %v1279
  %1567 = vmatpush.msra.mxu0 %v1278
  %1568 = vmatpush.msra.mxu0 %v1277
  %1569 = vmatmul.f32.gmra.mxu0 %v146
  %v1570 = vpop.f32.mrf.mxu0
  %v1571 = vadd.f32 0.0, %v1570
  %1572 = vmatmul.f32.gmra.mxu0 %v147
  %v1573 = vpop.f32.mrf.mxu0
  %v1574 = vadd.f32 0.0, %v1573
  %1575 = vmatmul.f32.gmra.mxu0 %v148
  %v1576 = vpop.f32.mrf.mxu0
  %v1577 = vadd.f32 0.0, %v1576
  %1578 = vmatmul.f32.gmra.mxu0 %v149
  %v1579 = vpop.f32.mrf.mxu0
  %v1580 = vadd.f32 0.0, %v1579
  %1581 = vmatmul.f32.gmra.mxu0 %v150
  %v1582 = vpop.f32.mrf.mxu0
  %v1583 = vadd.f32 0.0, %v1582
  %1584 = vmatmul.f32.gmra.mxu0 %v151
  %v1585 = vpop.f32.mrf.mxu0
  %v1586 = vadd.f32 0.0, %v1585
  %1587 = vmatmul.f32.gmra.mxu0 %v152
  %v1588 = vpop.f32.mrf.mxu0
  %v1589 = vadd.f32 0.0, %v1588
  %1590 = vmatmul.f32.gmra.mxu0 %v153
  %v1591 = vpop.f32.mrf.mxu0
  %v1592 = vadd.f32 0.0, %v1591
  %1593 = vmatmul.f32.gmra.mxu0 %v154
  %v1594 = vpop.f32.mrf.mxu0
  %v1595 = vadd.f32 0.0, %v1594
  %1596 = vmatmul.f32.gmra.mxu0 %v155
  %v1597 = vpop.f32.mrf.mxu0
  %v1598 = vadd.f32 0.0, %v1597
  %1599 = vmatmul.f32.gmra.mxu0 %v156
  %v1600 = vpop.f32.mrf.mxu0
  %v1601 = vadd.f32 0.0, %v1600
  %1602 = vmatmul.f32.gmra.mxu0 %v157
  %v1603 = vpop.f32.mrf.mxu0
  %v1604 = vadd.f32 0.0, %v1603
  %1605 = vmatmul.f32.gmra.mxu0 %v158
  %v1606 = vpop.f32.mrf.mxu0
  %v1607 = vadd.f32 0.0, %v1606
  %1608 = vmatmul.f32.gmra.mxu0 %v159
  %v1609 = vpop.f32.mrf.mxu0
  %v1610 = vadd.f32 0.0, %v1609
  %1611 = vmatmul.f32.gmra.mxu0 %v160
  %v1612 = vpop.f32.mrf.mxu0
  %v1613 = vadd.f32 0.0, %v1612
  %1614 = vmatmul.f32.gmra.mxu0 %v161
  %v1615 = vpop.f32.mrf.mxu0
  %v1616 = vadd.f32 0.0, %v1615
  %1617 = vdwg.mxu0
  %1634 = vrot.lane.b32.xlu0 %v1376, 66
  %v1635 = vpop.permute.xlu0 %1634
  %1636 = vrot.lane.b32.xlu0 %v1379, 66
  %v1637 = vpop.permute.xlu0 %1636
  %1638 = vrot.lane.b32.xlu0 %v1382, 66
  %v1639 = vpop.permute.xlu0 %1638
  %1640 = vrot.lane.b32.xlu0 %v1385, 66
  %v1641 = vpop.permute.xlu0 %1640
  %1642 = vrot.lane.b32.xlu0 %v1388, 66
  %v1643 = vpop.permute.xlu0 %1642
  %1644 = vrot.lane.b32.xlu0 %v1391, 66
  %v1645 = vpop.permute.xlu0 %1644
  %1646 = vrot.lane.b32.xlu0 %v1394, 66
  %v1647 = vpop.permute.xlu0 %1646
  %1648 = vrot.lane.b32.xlu0 %v1397, 66
  %v1649 = vpop.permute.xlu0 %1648
  %1650 = vrot.lane.b32.xlu0 %v1400, 66
  %v1651 = vpop.permute.xlu0 %1650
  %1652 = vrot.lane.b32.xlu0 %v1403, 66
  %v1653 = vpop.permute.xlu0 %1652
  %1654 = vrot.lane.b32.xlu0 %v1406, 66
  %v1655 = vpop.permute.xlu0 %1654
  %1656 = vrot.lane.b32.xlu0 %v1409, 66
  %v1657 = vpop.permute.xlu0 %1656
  %1658 = vrot.lane.b32.xlu0 %v1412, 66
  %v1659 = vpop.permute.xlu0 %1658
  %1660 = vrot.lane.b32.xlu0 %v1415, 66
  %v1661 = vpop.permute.xlu0 %1660
  %1662 = vrot.lane.b32.xlu0 %v1418, 66
  %v1663 = vpop.permute.xlu0 %1662
  %1664 = vrot.lane.b32.xlu0 %v1421, 66
  %v1665 = vpop.permute.xlu0 %1664
  %1698 = vrot.lane.b32.xlu0 %v1441, 4
  %v1699 = vpop.permute.xlu0 %1698
  %1700 = vrot.lane.b32.xlu0 %v1444, 4
  %v1701 = vpop.permute.xlu0 %1700
  %1702 = vrot.lane.b32.xlu0 %v1447, 4
  %v1703 = vpop.permute.xlu0 %1702
  %1704 = vrot.lane.b32.xlu0 %v1450, 4
  %v1705 = vpop.permute.xlu0 %1704
  %1706 = vrot.lane.b32.xlu0 %v1453, 4
  %v1707 = vpop.permute.xlu0 %1706
  %1708 = vrot.lane.b32.xlu0 %v1456, 4
  %v1709 = vpop.permute.xlu0 %1708
  %1710 = vrot.lane.b32.xlu0 %v1459, 4
  %v1711 = vpop.permute.xlu0 %1710
  %1712 = vrot.lane.b32.xlu0 %v1462, 4
  %v1713 = vpop.permute.xlu0 %1712
  %1714 = vrot.lane.b32.xlu0 %v1465, 4
  %v1715 = vpop.permute.xlu0 %1714
  %1716 = vrot.lane.b32.xlu0 %v1468, 4
  %v1717 = vpop.permute.xlu0 %1716
  %1718 = vrot.lane.b32.xlu0 %v1471, 4
  %v1719 = vpop.permute.xlu0 %1718
  %1720 = vrot.lane.b32.xlu0 %v1474, 4
  %v1721 = vpop.permute.xlu0 %1720
  %1722 = vrot.lane.b32.xlu0 %v1477, 4
  %v1723 = vpop.permute.xlu0 %1722
  %1724 = vrot.lane.b32.xlu0 %v1480, 4
  %v1725 = vpop.permute.xlu0 %1724
  %1726 = vrot.lane.b32.xlu0 %v1483, 4
  %v1727 = vpop.permute.xlu0 %1726
  %1728 = vrot.lane.b32.xlu0 %v1486, 4
  %v1729 = vpop.permute.xlu0 %1728
  %1762 = vrot.lane.b32.xlu0 %v1506, 70
  %v1763 = vpop.permute.xlu0 %1762
  %1764 = vrot.lane.b32.xlu0 %v1509, 70
  %v1765 = vpop.permute.xlu0 %1764
  %1766 = vrot.lane.b32.xlu0 %v1512, 70
  %v1767 = vpop.permute.xlu0 %1766
  %1768 = vrot.lane.b32.xlu0 %v1515, 70
  %v1769 = vpop.permute.xlu0 %1768
  %1770 = vrot.lane.b32.xlu0 %v1518, 70
  %v1771 = vpop.permute.xlu0 %1770
  %1772 = vrot.lane.b32.xlu0 %v1521, 70
  %v1773 = vpop.permute.xlu0 %1772
  %1774 = vrot.lane.b32.xlu0 %v1524, 70
  %v1775 = vpop.permute.xlu0 %1774
  %1776 = vrot.lane.b32.xlu0 %v1527, 70
  %v1777 = vpop.permute.xlu0 %1776
  %1778 = vrot.lane.b32.xlu0 %v1530, 70
  %v1779 = vpop.permute.xlu0 %1778
  %1780 = vrot.lane.b32.xlu0 %v1533, 70
  %v1781 = vpop.permute.xlu0 %1780
  %1782 = vrot.lane.b32.xlu0 %v1536, 70
  %v1783 = vpop.permute.xlu0 %1782
  %1784 = vrot.lane.b32.xlu0 %v1539, 70
  %v1785 = vpop.permute.xlu0 %1784
  %1786 = vrot.lane.b32.xlu0 %v1542, 70
  %v1787 = vpop.permute.xlu0 %1786
  %1788 = vrot.lane.b32.xlu0 %v1545, 70
  %v1789 = vpop.permute.xlu0 %1788
  %1790 = vrot.lane.b32.xlu0 %v1548, 70
  %v1791 = vpop.permute.xlu0 %1790
  %1792 = vrot.lane.b32.xlu0 %v1551, 70
  %v1793 = vpop.permute.xlu0 %1792
  %1826 = vrot.lane.b32.xlu0 %v1571, 8
  %v1827 = vpop.permute.xlu0 %1826
  %1828 = vrot.lane.b32.xlu0 %v1574, 8
  %v1829 = vpop.permute.xlu0 %1828
  %1830 = vrot.lane.b32.xlu0 %v1577, 8
  %v1831 = vpop.permute.xlu0 %1830
  %1832 = vrot.lane.b32.xlu0 %v1580, 8
  %v1833 = vpop.permute.xlu0 %1832
  %1834 = vrot.lane.b32.xlu0 %v1583, 8
  %v1835 = vpop.permute.xlu0 %1834
  %1836 = vrot.lane.b32.xlu0 %v1586, 8
  %v1837 = vpop.permute.xlu0 %1836
  %1838 = vrot.lane.b32.xlu0 %v1589, 8
  %v1839 = vpop.permute.xlu0 %1838
  %1840 = vrot.lane.b32.xlu0 %v1592, 8
  %v1841 = vpop.permute.xlu0 %1840
  %1842 = vrot.lane.b32.xlu0 %v1595, 8
  %v1843 = vpop.permute.xlu0 %1842
  %1844 = vrot.lane.b32.xlu0 %v1598, 8
  %v1845 = vpop.permute.xlu0 %1844
  %1846 = vrot.lane.b32.xlu0 %v1601, 8
  %v1847 = vpop.permute.xlu0 %1846
  %1848 = vrot.lane.b32.xlu0 %v1604, 8
  %v1849 = vpop.permute.xlu0 %1848
  %1850 = vrot.lane.b32.xlu0 %v1607, 8
  %v1851 = vpop.permute.xlu0 %1850
  %1852 = vrot.lane.b32.xlu0 %v1610, 8
  %v1853 = vpop.permute.xlu0 %1852
  %1854 = vrot.lane.b32.xlu0 %v1613, 8
  %v1855 = vpop.permute.xlu0 %1854
  %1856 = vrot.lane.b32.xlu0 %v1616, 8
  %v1857 = vpop.permute.xlu0 %1856
  %vm1874 = vcmask 539648
  %v1875 = vsel %vm1874, %v1311, %v1635
  %v1876 = vsel %vm1874, %v1314, %v1637
  %v1877 = vsel %vm1874, %v1317, %v1639
  %v1878 = vsel %vm1874, %v1320, %v1641
  %v1879 = vsel %vm1874, %v1323, %v1643
  %v1880 = vsel %vm1874, %v1326, %v1645
  %v1881 = vsel %vm1874, %v1329, %v1647
  %v1882 = vsel %vm1874, %v1332, %v1649
  %v1883 = vsel %vm1874, %v1335, %v1651
  %v1884 = vsel %vm1874, %v1338, %v1653
  %v1885 = vsel %vm1874, %v1341, %v1655
  %v1886 = vsel %vm1874, %v1344, %v1657
  %v1887 = vsel %vm1874, %v1347, %v1659
  %v1888 = vsel %vm1874, %v1350, %v1661
  %v1889 = vsel %vm1874, %v1353, %v1663
  %v1890 = vsel %vm1874, %v1356, %v1665
  %vm1891 = vcmask 31744
  %v1892 = vsel %vm1891, %v1635, %v1699
  %v1893 = vsel %vm1891, %v1637, %v1701
  %v1894 = vsel %vm1891, %v1639, %v1703
  %v1895 = vsel %vm1891, %v1641, %v1705
  %v1896 = vsel %vm1891, %v1643, %v1707
  %v1897 = vsel %vm1891, %v1645, %v1709
  %v1898 = vsel %vm1891, %v1647, %v1711
  %v1899 = vsel %vm1891, %v1649, %v1713
  %v1900 = vsel %vm1891, %v1651, %v1715
  %v1901 = vsel %vm1891, %v1653, %v1717
  %v1902 = vsel %vm1891, %v1655, %v1719
  %v1903 = vsel %vm1891, %v1657, %v1721
  %v1904 = vsel %vm1891, %v1659, %v1723
  %v1905 = vsel %vm1891, %v1661, %v1725
  %v1906 = vsel %vm1891, %v1663, %v1727
  %v1907 = vsel %vm1891, %v1665, %v1729
  %vm1908 = vcmask 572416
  %v1909 = vsel %vm1908, %v1892, %v1763
  %v1910 = vsel %vm1908, %v1893, %v1765
  %v1911 = vsel %vm1908, %v1894, %v1767
  %v1912 = vsel %vm1908, %v1895, %v1769
  %v1913 = vsel %vm1908, %v1896, %v1771
  %v1914 = vsel %vm1908, %v1897, %v1773
  %v1915 = vsel %vm1908, %v1898, %v1775
  %v1916 = vsel %vm1908, %v1899, %v1777
  %v1917 = vsel %vm1908, %v1900, %v1779
  %v1918 = vsel %vm1908, %v1901, %v1781
  %v1919 = vsel %vm1908, %v1902, %v1783
  %v1920 = vsel %vm1908, %v1903, %v1785
  %v1921 = vsel %vm1908, %v1904, %v1787
  %v1922 = vsel %vm1908, %v1905, %v1789
  %v1923 = vsel %vm1908, %v1906, %v1791
  %v1924 = vsel %vm1908, %v1907, %v1793
  %vm1925 = vcmask 64512
  %v1926 = vsel %vm1925, %v1763, %v1827
  %v1927 = vsel %vm1925, %v1765, %v1829
  %v1928 = vsel %vm1925, %v1767, %v1831
  %v1929 = vsel %vm1925, %v1769, %v1833
  %v1930 = vsel %vm1925, %v1771, %v1835
  %v1931 = vsel %vm1925, %v1773, %v1837
  %v1932 = vsel %vm1925, %v1775, %v1839
  %v1933 = vsel %vm1925, %v1777, %v1841
  %v1934 = vsel %vm1925, %v1779, %v1843
  %v1935 = vsel %vm1925, %v1781, %v1845
  %v1936 = vsel %vm1925, %v1783, %v1847
  %v1937 = vsel %vm1925, %v1785, %v1849
  %v1938 = vsel %vm1925, %v1787, %v1851
  %v1939 = vsel %vm1925, %v1789, %v1853
  %v1940 = vsel %vm1925, %v1791, %v1855
  %v1941 = vsel %vm1925, %v1793, %v1857
  %v1942 = vld [vmem:[%s9] sm:$0xff]
  %v1943 = vld [vmem:[%s9 + $0x8] sm:$0xff]
  %v1944 = vld [vmem:[%s9 + $0x10] sm:$0xff]
  %v1945 = vld [vmem:[%s9 + $0x18] sm:$0xff]
  %v1946 = vld [vmem:[%s9 + $0x20] sm:$0xff]
  %v1947 = vld [vmem:[%s9 + $0x28] sm:$0xff]
  %v1948 = vld [vmem:[%s9 + $0x30] sm:$0xff]
  %v1949 = vld [vmem:[%s9 + $0x38] sm:$0xff]
  %v1950 = vld [vmem:[%s9 + $0x40] sm:$0xff]
  %v1951 = vld [vmem:[%s9 + $0x48] sm:$0xff]
  %v1952 = vld [vmem:[%s9 + $0x50] sm:$0xff]
  %v1953 = vld [vmem:[%s9 + $0x58] sm:$0xff]
  %v1954 = vld [vmem:[%s9 + $0x60] sm:$0xff]
  %v1955 = vld [vmem:[%s9 + $0x68] sm:$0xff]
  %v1956 = vld [vmem:[%s9 + $0x70] sm:$0xff]
  %v1957 = vld [vmem:[%s9 + $0x78] sm:$0xff]
  %v1958 = vld [vmem:[%s9 + $0x80] sm:$0xff]
  %v1959 = vld [vmem:[%s9 + $0x88] sm:$0xff]
  %v1960 = vld [vmem:[%s9 + $0x90] sm:$0xff]
  %v1961 = vld [vmem:[%s9 + $0x98] sm:$0xff]
  %v1962 = vld [vmem:[%s9 + $0xa0] sm:$0xff]
  %v1963 = vld [vmem:[%s9 + $0xa8] sm:$0xff]
  %v1964 = vld [vmem:[%s9 + $0xb0] sm:$0xff]
  %v1965 = vld [vmem:[%s9 + $0xb8] sm:$0xff]
  %v1966 = vld [vmem:[%s9 + $0xc0] sm:$0xff]
  %v1967 = vld [vmem:[%s9 + $0xc8] sm:$0xff]
  %v1968 = vld [vmem:[%s9 + $0xd0] sm:$0xff]
  %v1969 = vld [vmem:[%s9 + $0xd8] sm:$0xff]
  %v1970 = vld [vmem:[%s9 + $0xe0] sm:$0xff]
  %v1971 = vld [vmem:[%s9 + $0xe8] sm:$0xff]
  %v1972 = vld [vmem:[%s9 + $0xf0] sm:$0xff]
  %v1973 = vld [vmem:[%s9 + $0xf8] sm:$0xff]
  %v1974 = vld [vmem:[%s9 + $0x100] sm:$0xff]
  %v1975 = vld [vmem:[%s9 + $0x108] sm:$0xff]
  %v1976 = vld [vmem:[%s9 + $0x110] sm:$0xff]
  %v1977 = vld [vmem:[%s9 + $0x118] sm:$0xff]
  %v1978 = vld [vmem:[%s9 + $0x120] sm:$0xff]
  %v1979 = vld [vmem:[%s9 + $0x128] sm:$0xff]
  %v1980 = vld [vmem:[%s9 + $0x130] sm:$0xff]
  %v1981 = vld [vmem:[%s9 + $0x138] sm:$0xff]
  %v1982 = vld [vmem:[%s9 + $0x140] sm:$0xff]
  %v1983 = vld [vmem:[%s9 + $0x148] sm:$0x3]
  %v1984 = vld [vmem:[%s10] sm:$0x1]
  %v1986 = vperm.slane %v1984, 0
  %vm1988 = vcmask 605184
  %v1990 = vsel %vm1988, %v1926, 0
  %v1993 = vsel %vm1988, %v1927, 0
  %v1996 = vsel %vm1988, %v1928, 0
  %v1999 = vsel %vm1988, %v1929, 0
  %v2002 = vsel %vm1988, %v1930, 0
  %v2005 = vsel %vm1988, %v1931, 0
  %v2008 = vsel %vm1988, %v1932, 0
  %v2011 = vsel %vm1988, %v1933, 0
  %v2014 = vsel %vm1988, %v1934, 0
  %v2017 = vsel %vm1988, %v1935, 0
  %v2020 = vsel %vm1988, %v1936, 0
  %v2023 = vsel %vm1988, %v1937, 0
  %v2026 = vsel %vm1988, %v1938, 0
  %v2029 = vsel %vm1988, %v1939, 0
  %v2032 = vsel %vm1988, %v1940, 0
  %v2035 = vsel %vm1988, %v1941, 0
  %vm2037 = vcmask 1041408
  %v2039 = vsel %vm2037, %v1983, 0
  %2041 = vmatpush.msra.mxu0 %v1957
  %2042 = vmatpush.msra.mxu0 %v1956
  %2043 = vmatpush.msra.mxu0 %v1955
  %2044 = vmatpush.msra.mxu0 %v1954
  %2045 = vmatpush.msra.mxu0 %v1953
  %2046 = vmatpush.msra.mxu0 %v1952
  %2047 = vmatpush.msra.mxu0 %v1951
  %2048 = vmatpush.msra.mxu0 %v1950
  %2049 = vmatpush.msra.mxu0 %v1949
  %2050 = vmatpush.msra.mxu0 %v1948
  %2051 = vmatpush.msra.mxu0 %v1947
  %2052 = vmatpush.msra.mxu0 %v1946
  %2053 = vmatpush.msra.mxu0 %v1945
  %2054 = vmatpush.msra.mxu0 %v1944
  %2055 = vmatpush.msra.mxu0 %v1943
  %2056 = vmatpush.msra.mxu0 %v1942
  %2057 = vmatmul.f32.gmra.mxu0 %v1875
  %v2058 = vpop.f32.mrf.mxu0
  %v2059 = vadd.f32 %v1986, %v2058
  %2060 = vmatmul.f32.gmra.mxu0 %v1876
  %v2061 = vpop.f32.mrf.mxu0
  %v2062 = vadd.f32 %v1986, %v2061
  %2063 = vmatmul.f32.gmra.mxu0 %v1877
  %v2064 = vpop.f32.mrf.mxu0
  %v2065 = vadd.f32 %v1986, %v2064
  %2066 = vmatmul.f32.gmra.mxu0 %v1878
  %v2067 = vpop.f32.mrf.mxu0
  %v2068 = vadd.f32 %v1986, %v2067
  %2069 = vmatmul.f32.gmra.mxu0 %v1879
  %v2070 = vpop.f32.mrf.mxu0
  %v2071 = vadd.f32 %v1986, %v2070
  %2072 = vmatmul.f32.gmra.mxu0 %v1880
  %v2073 = vpop.f32.mrf.mxu0
  %v2074 = vadd.f32 %v1986, %v2073
  %2075 = vmatmul.f32.gmra.mxu0 %v1881
  %v2076 = vpop.f32.mrf.mxu0
  %v2077 = vadd.f32 %v1986, %v2076
  %2078 = vmatmul.f32.gmra.mxu0 %v1882
  %v2079 = vpop.f32.mrf.mxu0
  %v2080 = vadd.f32 %v1986, %v2079
  %2081 = vmatmul.f32.gmra.mxu0 %v1883
  %v2082 = vpop.f32.mrf.mxu0
  %v2083 = vadd.f32 %v1986, %v2082
  %2084 = vmatmul.f32.gmra.mxu0 %v1884
  %v2085 = vpop.f32.mrf.mxu0
  %v2086 = vadd.f32 %v1986, %v2085
  %2087 = vmatmul.f32.gmra.mxu0 %v1885
  %v2088 = vpop.f32.mrf.mxu0
  %v2089 = vadd.f32 %v1986, %v2088
  %2090 = vmatmul.f32.gmra.mxu0 %v1886
  %v2091 = vpop.f32.mrf.mxu0
  %v2092 = vadd.f32 %v1986, %v2091
  %2093 = vmatmul.f32.gmra.mxu0 %v1887
  %v2094 = vpop.f32.mrf.mxu0
  %v2095 = vadd.f32 %v1986, %v2094
  %2096 = vmatmul.f32.gmra.mxu0 %v1888
  %v2097 = vpop.f32.mrf.mxu0
  %v2098 = vadd.f32 %v1986, %v2097
  %2099 = vmatmul.f32.gmra.mxu0 %v1889
  %v2100 = vpop.f32.mrf.mxu0
  %v2101 = vadd.f32 %v1986, %v2100
  %2102 = vmatmul.f32.gmra.mxu0 %v1890
  %v2103 = vpop.f32.mrf.mxu0
  %v2104 = vadd.f32 %v1986, %v2103
  %2105 = vdwg.mxu0
  %2106 = vmatpush.msra.mxu0 %v1973
  %2107 = vmatpush.msra.mxu0 %v1972
  %2108 = vmatpush.msra.mxu0 %v1971
  %2109 = vmatpush.msra.mxu0 %v1970
  %2110 = vmatpush.msra.mxu0 %v1969
  %2111 = vmatpush.msra.mxu0 %v1968
  %2112 = vmatpush.msra.mxu0 %v1967
  %2113 = vmatpush.msra.mxu0 %v1966
  %2114 = vmatpush.msra.mxu0 %v1965
  %2115 = vmatpush.msra.mxu0 %v1964
  %2116 = vmatpush.msra.mxu0 %v1963
  %2117 = vmatpush.msra.mxu0 %v1962
  %2118 = vmatpush.msra.mxu0 %v1961
  %2119 = vmatpush.msra.mxu0 %v1960
  %2120 = vmatpush.msra.mxu0 %v1959
  %2121 = vmatpush.msra.mxu0 %v1958
  %2122 = vmatmul.f32.gmra.mxu0 %v1909
  %v2123 = vpop.f32.mrf.mxu0
  %v2124 = vadd.f32 %v2059, %v2123
  %2125 = vmatmul.f32.gmra.mxu0 %v1910
  %v2126 = vpop.f32.mrf.mxu0
  %v2127 = vadd.f32 %v2062, %v2126
  %2128 = vmatmul.f32.gmra.mxu0 %v1911
  %v2129 = vpop.f32.mrf.mxu0
  %v2130 = vadd.f32 %v2065, %v2129
  %2131 = vmatmul.f32.gmra.mxu0 %v1912
  %v2132 = vpop.f32.mrf.mxu0
  %v2133 = vadd.f32 %v2068, %v2132
  %2134 = vmatmul.f32.gmra.mxu0 %v1913
  %v2135 = vpop.f32.mrf.mxu0
  %v2136 = vadd.f32 %v2071, %v2135
  %2137 = vmatmul.f32.gmra.mxu0 %v1914
  %v2138 = vpop.f32.mrf.mxu0
  %v2139 = vadd.f32 %v2074, %v2138
  %2140 = vmatmul.f32.gmra.mxu0 %v1915
  %v2141 = vpop.f32.mrf.mxu0
  %v2142 = vadd.f32 %v2077, %v2141
  %2143 = vmatmul.f32.gmra.mxu0 %v1916
  %v2144 = vpop.f32.mrf.mxu0
  %v2145 = vadd.f32 %v2080, %v2144
  %2146 = vmatmul.f32.gmra.mxu0 %v1917
  %v2147 = vpop.f32.mrf.mxu0
  %v2148 = vadd.f32 %v2083, %v2147
  %2149 = vmatmul.f32.gmra.mxu0 %v1918
  %v2150 = vpop.f32.mrf.mxu0
  %v2151 = vadd.f32 %v2086, %v2150
  %2152 = vmatmul.f32.gmra.mxu0 %v1919
  %v2153 = vpop.f32.mrf.mxu0
  %v2154 = vadd.f32 %v2089, %v2153
  %2155 = vmatmul.f32.gmra.mxu0 %v1920
  %v2156 = vpop.f32.mrf.mxu0
  %v2157 = vadd.f32 %v2092, %v2156
  %2158 = vmatmul.f32.gmra.mxu0 %v1921
  %v2159 = vpop.f32.mrf.mxu0
  %v2160 = vadd.f32 %v2095, %v2159
  %2161 = vmatmul.f32.gmra.mxu0 %v1922
  %v2162 = vpop.f32.mrf.mxu0
  %v2163 = vadd.f32 %v2098, %v2162
  %2164 = vmatmul.f32.gmra.mxu0 %v1923
  %v2165 = vpop.f32.mrf.mxu0
  %v2166 = vadd.f32 %v2101, %v2165
  %2167 = vmatmul.f32.gmra.mxu0 %v1924
  %v2168 = vpop.f32.mrf.mxu0
  %v2169 = vadd.f32 %v2104, %v2168
  %2170 = vdwg.mxu0
  %2171 = vmatpush.msra.mxu0 0.0
  %2172 = vmatpush.msra.mxu0 0.0
  %2173 = vmatpush.msra.mxu0 0.0
  %2174 = vmatpush.msra.mxu0 0.0
  %2175 = vmatpush.msra.mxu0 0.0
  %2176 = vmatpush.msra.mxu0 0.0
  %2177 = vmatpush.msra.mxu0 %v2039
  %2178 = vmatpush.msra.mxu0 %v1982
  %2179 = vmatpush.msra.mxu0 %v1981
  %2180 = vmatpush.msra.mxu0 %v1980
  %2181 = vmatpush.msra.mxu0 %v1979
  %2182 = vmatpush.msra.mxu0 %v1978
  %2183 = vmatpush.msra.mxu0 %v1977
  %2184 = vmatpush.msra.mxu0 %v1976
  %2185 = vmatpush.msra.mxu0 %v1975
  %2186 = vmatpush.msra.mxu0 %v1974
  %2187 = vmatmul.f32.gmra.mxu0 %v1990
  %v2188 = vpop.f32.mrf.mxu0
  %v2189 = vadd.f32 %v2124, %v2188
  %2190 = vmatmul.f32.gmra.mxu0 %v1993
  %v2191 = vpop.f32.mrf.mxu0
  %v2192 = vadd.f32 %v2127, %v2191
  %2193 = vmatmul.f32.gmra.mxu0 %v1996
  %v2194 = vpop.f32.mrf.mxu0
  %v2195 = vadd.f32 %v2130, %v2194
  %2196 = vmatmul.f32.gmra.mxu0 %v1999
  %v2197 = vpop.f32.mrf.mxu0
  %v2198 = vadd.f32 %v2133, %v2197
  %2199 = vmatmul.f32.gmra.mxu0 %v2002
  %v2200 = vpop.f32.mrf.mxu0
  %v2201 = vadd.f32 %v2136, %v2200
  %2202 = vmatmul.f32.gmra.mxu0 %v2005
  %v2203 = vpop.f32.mrf.mxu0
  %v2204 = vadd.f32 %v2139, %v2203
  %2205 = vmatmul.f32.gmra.mxu0 %v2008
  %v2206 = vpop.f32.mrf.mxu0
  %v2207 = vadd.f32 %v2142, %v2206
  %2208 = vmatmul.f32.gmra.mxu0 %v2011
  %v2209 = vpop.f32.mrf.mxu0
  %v2210 = vadd.f32 %v2145, %v2209
  %2211 = vmatmul.f32.gmra.mxu0 %v2014
  %v2212 = vpop.f32.mrf.mxu0
  %v2213 = vadd.f32 %v2148, %v2212
  %2214 = vmatmul.f32.gmra.mxu0 %v2017
  %v2215 = vpop.f32.mrf.mxu0
  %v2216 = vadd.f32 %v2151, %v2215
  %2217 = vmatmul.f32.gmra.mxu0 %v2020
  %v2218 = vpop.f32.mrf.mxu0
  %v2219 = vadd.f32 %v2154, %v2218
  %2220 = vmatmul.f32.gmra.mxu0 %v2023
  %v2221 = vpop.f32.mrf.mxu0
  %v2222 = vadd.f32 %v2157, %v2221
  %2223 = vmatmul.f32.gmra.mxu0 %v2026
  %v2224 = vpop.f32.mrf.mxu0
  %v2225 = vadd.f32 %v2160, %v2224
  %2226 = vmatmul.f32.gmra.mxu0 %v2029
  %v2227 = vpop.f32.mrf.mxu0
  %v2228 = vadd.f32 %v2163, %v2227
  %2229 = vmatmul.f32.gmra.mxu0 %v2032
  %v2230 = vpop.f32.mrf.mxu0
  %v2231 = vadd.f32 %v2166, %v2230
  %2232 = vmatmul.f32.gmra.mxu0 %v2035
  %v2233 = vpop.f32.mrf.mxu0
  %v2234 = vadd.f32 %v2169, %v2233
  %2235 = vdwg.mxu0
  %v2236 = vmax.f32 %v2189, 0.0
  %v2237 = vmax.f32 %v2192, 0.0
  %v2238 = vmax.f32 %v2195, 0.0
  %v2239 = vmax.f32 %v2198, 0.0
  %v2240 = vmax.f32 %v2201, 0.0
  %v2241 = vmax.f32 %v2204, 0.0
  %v2242 = vmax.f32 %v2207, 0.0
  %v2243 = vmax.f32 %v2210, 0.0
  %v2244 = vmax.f32 %v2213, 0.0
  %v2245 = vmax.f32 %v2216, 0.0
  %v2246 = vmax.f32 %v2219, 0.0
  %v2247 = vmax.f32 %v2222, 0.0
  %v2248 = vmax.f32 %v2225, 0.0
  %v2249 = vmax.f32 %v2228, 0.0
  %v2250 = vmax.f32 %v2231, 0.0
  %v2251 = vmax.f32 %v2234, 0.0
  %v2252 = vld [vmem:[%s11] sm:$0xff]
  %v2253 = vld [vmem:[%s11 + $0x8] sm:$0xff]
  %v2254 = vld [vmem:[%s11 + $0x10] sm:$0xff]
  %v2255 = vld [vmem:[%s11 + $0x18] sm:$0xff]
  %v2256 = vld [vmem:[%s11 + $0x20] sm:$0xff]
  %v2257 = vld [vmem:[%s11 + $0x28] sm:$0xff]
  %v2258 = vld [vmem:[%s11 + $0x30] sm:$0xff]
  %v2259 = vld [vmem:[%s11 + $0x38] sm:$0xff]
  %v2260 = vld [vmem:[%s11 + $0x40] sm:$0x3]
  %v2261 = vld [vmem:[%s12] sm:$0x1]
  %v2263 = vperm.slane %v2261, 0
  %v2266 = vsel %vm1874, %v1277, 0
  %v2269 = vsel %vm1874, %v1278, 0
  %v2272 = vsel %vm1874, %v1279, 0
  %v2275 = vsel %vm1874, %v1280, 0
  %v2278 = vsel %vm1874, %v1281, 0
  %v2281 = vsel %vm1874, %v1282, 0
  %v2284 = vsel %vm1874, %v1283, 0
  %v2287 = vsel %vm1874, %v1284, 0
  %v2290 = vsel %vm1874, %v1285, 0
  %v2293 = vsel %vm1874, %v1286, 0
  %v2296 = vsel %vm1874, %v1287, 0
  %v2299 = vsel %vm1874, %v1288, 0
  %v2302 = vsel %vm1874, %v1289, 0
  %v2305 = vsel %vm1874, %v1290, 0
  %v2308 = vsel %vm1874, %v1291, 0
  %v2311 = vsel %vm1874, %v1292, 0
  %v2314 = vsel %vm2037, %v2260, 0
  %2316 = vmatpush.msra.mxu0 0.0
  %2317 = vmatpush.msra.mxu0 0.0
  %2318 = vmatpush.msra.mxu0 0.0
  %2319 = vmatpush.msra.mxu0 0.0
  %2320 = vmatpush.msra.mxu0 0.0
  %2321 = vmatpush.msra.mxu0 0.0
  %2322 = vmatpush.msra.mxu0 0.0
  %2323 = vmatpush.msra.mxu0 %v2314
  %2324 = vmatpush.msra.mxu0 %v2259
  %2325 = vmatpush.msra.mxu0 %v2258
  %2326 = vmatpush.msra.mxu0 %v2257
  %2327 = vmatpush.msra.mxu0 %v2256
  %2328 = vmatpush.msra.mxu0 %v2255
  %2329 = vmatpush.msra.mxu0 %v2254
  %2330 = vmatpush.msra.mxu0 %v2253
  %2331 = vmatpush.msra.mxu0 %v2252
  %2332 = vmatmul.f32.gmra.mxu0 %v2266
  %v2333 = vpop.f32.mrf.mxu0
  %v2334 = vadd.f32 %v2263, %v2333
  %2335 = vmatmul.f32.gmra.mxu0 %v2269
  %v2336 = vpop.f32.mrf.mxu0
  %v2337 = vadd.f32 %v2263, %v2336
  %2338 = vmatmul.f32.gmra.mxu0 %v2272
  %v2339 = vpop.f32.mrf.mxu0
  %v2340 = vadd.f32 %v2263, %v2339
  %2341 = vmatmul.f32.gmra.mxu0 %v2275
  %v2342 = vpop.f32.mrf.mxu0
  %v2343 = vadd.f32 %v2263, %v2342
  %2344 = vmatmul.f32.gmra.mxu0 %v2278
  %v2345 = vpop.f32.mrf.mxu0
  %v2346 = vadd.f32 %v2263, %v2345
  %2347 = vmatmul.f32.gmra.mxu0 %v2281
  %v2348 = vpop.f32.mrf.mxu0
  %v2349 = vadd.f32 %v2263, %v2348
  %2350 = vmatmul.f32.gmra.mxu0 %v2284
  %v2351 = vpop.f32.mrf.mxu0
  %v2352 = vadd.f32 %v2263, %v2351
  %2353 = vmatmul.f32.gmra.mxu0 %v2287
  %v2354 = vpop.f32.mrf.mxu0
  %v2355 = vadd.f32 %v2263, %v2354
  %2356 = vmatmul.f32.gmra.mxu0 %v2290
  %v2357 = vpop.f32.mrf.mxu0
  %v2358 = vadd.f32 %v2263, %v2357
  %2359 = vmatmul.f32.gmra.mxu0 %v2293
  %v2360 = vpop.f32.mrf.mxu0
  %v2361 = vadd.f32 %v2263, %v2360
  %2362 = vmatmul.f32.gmra.mxu0 %v2296
  %v2363 = vpop.f32.mrf.mxu0
  %v2364 = vadd.f32 %v2263, %v2363
  %2365 = vmatmul.f32.gmra.mxu0 %v2299
  %v2366 = vpop.f32.mrf.mxu0
  %v2367 = vadd.f32 %v2263, %v2366
  %2368 = vmatmul.f32.gmra.mxu0 %v2302
  %v2369 = vpop.f32.mrf.mxu0
  %v2370 = vadd.f32 %v2263, %v2369
  %2371 = vmatmul.f32.gmra.mxu0 %v2305
  %v2372 = vpop.f32.mrf.mxu0
  %v2373 = vadd.f32 %v2263, %v2372
  %2374 = vmatmul.f32.gmra.mxu0 %v2308
  %v2375 = vpop.f32.mrf.mxu0
  %v2376 = vadd.f32 %v2263, %v2375
  %2377 = vmatmul.f32.gmra.mxu0 %v2311
  %v2378 = vpop.f32.mrf.mxu0
  %v2379 = vadd.f32 %v2263, %v2378
  %2380 = vdwg.mxu0
  %v2381 = vtanh.pop %v2334
  %v2382 = vtanh.pop %v2337
  %v2383 = vtanh.pop %v2340
  %v2384 = vtanh.pop %v2343
  %v2385 = vtanh.pop %v2346
  %v2386 = vtanh.pop %v2349
  %v2387 = vtanh.pop %v2352
  %v2388 = vtanh.pop %v2355
  %v2389 = vtanh.pop %v2358
  %v2390 = vtanh.pop %v2361
  %v2391 = vtanh.pop %v2364
  %v2392 = vtanh.pop %v2367
  %v2393 = vtanh.pop %v2370
  %v2394 = vtanh.pop %v2373
  %v2395 = vtanh.pop %v2376
  %v2396 = vtanh.pop %v2379
  %v2397 = vld [vmem:[%s13] sm:$0xff]
  %v2398 = vld [vmem:[%s13 + $0x8] sm:$0xff]
  %v2399 = vld [vmem:[%s13 + $0x10] sm:$0xff]
  %v2400 = vld [vmem:[%s13 + $0x18] sm:$0xff]
  %v2401 = vld [vmem:[%s13 + $0x20] sm:$0xff]
  %v2402 = vld [vmem:[%s13 + $0x28] sm:$0xff]
  %v2403 = vld [vmem:[%s13 + $0x30] sm:$0xff]
  %v2404 = vld [vmem:[%s13 + $0x38] sm:$0xff]
  %v2405 = vld [vmem:[%s13 + $0x40] sm:$0x3]
  %v2406 = vld [vmem:[%s14] sm:$0x1]
  %v2408 = vperm.slane %v2406, 0
  %v2411 = vsel %vm2037, %v2405, 0
  %2413 = vmatpush.msra.mxu0 0.0
  %2414 = vmatpush.msra.mxu0 0.0
  %2415 = vmatpush.msra.mxu0 0.0
  %2416 = vmatpush.msra.mxu0 0.0
  %2417 = vmatpush.msra.mxu0 0.0
  %2418 = vmatpush.msra.mxu0 0.0
  %2419 = vmatpush.msra.mxu0 0.0
  %2420 = vmatpush.msra.mxu0 %v2411
  %2421 = vmatpush.msra.mxu0 %v2404
  %2422 = vmatpush.msra.mxu0 %v2403
  %2423 = vmatpush.msra.mxu0 %v2402
  %2424 = vmatpush.msra.mxu0 %v2401
  %2425 = vmatpush.msra.mxu0 %v2400
  %2426 = vmatpush.msra.mxu0 %v2399
  %2427 = vmatpush.msra.mxu0 %v2398
  %2428 = vmatpush.msra.mxu0 %v2397
  %2429 = vmatmul.f32.gmra.mxu0 %v2266
  %v2430 = vpop.f32.mrf.mxu0
  %v2431 = vadd.f32 %v2408, %v2430
  %2432 = vmatmul.f32.gmra.mxu0 %v2269
  %v2433 = vpop.f32.mrf.mxu0
  %v2434 = vadd.f32 %v2408, %v2433
  %2435 = vmatmul.f32.gmra.mxu0 %v2272
  %v2436 = vpop.f32.mrf.mxu0
  %v2437 = vadd.f32 %v2408, %v2436
  %2438 = vmatmul.f32.gmra.mxu0 %v2275
  %v2439 = vpop.f32.mrf.mxu0
  %v2440 = vadd.f32 %v2408, %v2439
  %2441 = vmatmul.f32.gmra.mxu0 %v2278
  %v2442 = vpop.f32.mrf.mxu0
  %v2443 = vadd.f32 %v2408, %v2442
  %2444 = vmatmul.f32.gmra.mxu0 %v2281
  %v2445 = vpop.f32.mrf.mxu0
  %v2446 = vadd.f32 %v2408, %v2445
  %2447 = vmatmul.f32.gmra.mxu0 %v2284
  %v2448 = vpop.f32.mrf.mxu0
  %v2449 = vadd.f32 %v2408, %v2448
  %2450 = vmatmul.f32.gmra.mxu0 %v2287
  %v2451 = vpop.f32.mrf.mxu0
  %v2452 = vadd.f32 %v2408, %v2451
  %2453 = vmatmul.f32.gmra.mxu0 %v2290
  %v2454 = vpop.f32.mrf.mxu0
  %v2455 = vadd.f32 %v2408, %v2454
  %2456 = vmatmul.f32.gmra.mxu0 %v2293
  %v2457 = vpop.f32.mrf.mxu0
  %v2458 = vadd.f32 %v2408, %v2457
  %2459 = vmatmul.f32.gmra.mxu0 %v2296
  %v2460 = vpop.f32.mrf.mxu0
  %v2461 = vadd.f32 %v2408, %v2460
  %2462 = vmatmul.f32.gmra.mxu0 %v2299
  %v2463 = vpop.f32.mrf.mxu0
  %v2464 = vadd.f32 %v2408, %v2463
  %2465 = vmatmul.f32.gmra.mxu0 %v2302
  %v2466 = vpop.f32.mrf.mxu0
  %v2467 = vadd.f32 %v2408, %v2466
  %2468 = vmatmul.f32.gmra.mxu0 %v2305
  %v2469 = vpop.f32.mrf.mxu0
  %v2470 = vadd.f32 %v2408, %v2469
  %2471 = vmatmul.f32.gmra.mxu0 %v2308
  %v2472 = vpop.f32.mrf.mxu0
  %v2473 = vadd.f32 %v2408, %v2472
  %2474 = vmatmul.f32.gmra.mxu0 %v2311
  %v2475 = vpop.f32.mrf.mxu0
  %v2476 = vadd.f32 %v2408, %v2475
  %2477 = vdwg.mxu0
  %v2478 = vtanh.pop %v2431
  %v2479 = vtanh.pop %v2434
  %v2480 = vtanh.pop %v2437
  %v2481 = vtanh.pop %v2440
  %v2482 = vtanh.pop %v2443
  %v2483 = vtanh.pop %v2446
  %v2484 = vtanh.pop %v2449
  %v2485 = vtanh.pop %v2452
  %v2486 = vtanh.pop %v2455
  %v2487 = vtanh.pop %v2458
  %v2488 = vtanh.pop %v2461
  %v2489 = vtanh.pop %v2464
  %v2490 = vtanh.pop %v2467
  %v2491 = vtanh.pop %v2470
  %v2492 = vtanh.pop %v2473
  %v2493 = vtanh.pop %v2476
  %v2494 = vmul.f32 %v2381, %v2478
  %v2495 = vmul.f32 %v2382, %v2479
  %v2496 = vmul.f32 %v2383, %v2480
  %v2497 = vmul.f32 %v2384, %v2481
  %v2498 = vmul.f32 %v2385, %v2482
  %v2499 = vmul.f32 %v2386, %v2483
  %v2500 = vmul.f32 %v2387, %v2484
  %v2501 = vmul.f32 %v2388, %v2485
  %v2502 = vmul.f32 %v2389, %v2486
  %v2503 = vmul.f32 %v2390, %v2487
  %v2504 = vmul.f32 %v2391, %v2488
  %v2505 = vmul.f32 %v2392, %v2489
  %v2506 = vmul.f32 %v2393, %v2490
  %v2507 = vmul.f32 %v2394, %v2491
  %v2508 = vmul.f32 %v2395, %v2492
  %v2509 = vmul.f32 %v2396, %v2493
  %2526 = vrot.lane.b32.xlu0 %v2494, 64
  %v2527 = vpop.permute.xlu0 %2526
  %2528 = vrot.lane.b32.xlu0 %v2495, 64
  %v2529 = vpop.permute.xlu0 %2528
  %2530 = vrot.lane.b32.xlu0 %v2496, 64
  %v2531 = vpop.permute.xlu0 %2530
  %2532 = vrot.lane.b32.xlu0 %v2497, 64
  %v2533 = vpop.permute.xlu0 %2532
  %2534 = vrot.lane.b32.xlu0 %v2498, 64
  %v2535 = vpop.permute.xlu0 %2534
  %2536 = vrot.lane.b32.xlu0 %v2499, 64
  %v2537 = vpop.permute.xlu0 %2536
  %2538 = vrot.lane.b32.xlu0 %v2500, 64
  %v2539 = vpop.permute.xlu0 %2538
  %2540 = vrot.lane.b32.xlu0 %v2501, 64
  %v2541 = vpop.permute.xlu0 %2540
  %2542 = vrot.lane.b32.xlu0 %v2502, 64
  %v2543 = vpop.permute.xlu0 %2542
  %2544 = vrot.lane.b32.xlu0 %v2503, 64
  %v2545 = vpop.permute.xlu0 %2544
  %2546 = vrot.lane.b32.xlu0 %v2504, 64
  %v2547 = vpop.permute.xlu0 %2546
  %2548 = vrot.lane.b32.xlu0 %v2505, 64
  %v2549 = vpop.permute.xlu0 %2548
  %2550 = vrot.lane.b32.xlu0 %v2506, 64
  %v2551 = vpop.permute.xlu0 %2550
  %2552 = vrot.lane.b32.xlu0 %v2507, 64
  %v2553 = vpop.permute.xlu0 %2552
  %2554 = vrot.lane.b32.xlu0 %v2508, 64
  %v2555 = vpop.permute.xlu0 %2554
  %2556 = vrot.lane.b32.xlu0 %v2509, 64
  %v2557 = vpop.permute.xlu0 %2556
  %v2574 = vsel %vm1276, %v2236, %v2527
  %v2575 = vsel %vm1276, %v2237, %v2529
  %v2576 = vsel %vm1276, %v2238, %v2531
  %v2577 = vsel %vm1276, %v2239, %v2533
  %v2578 = vsel %vm1276, %v2240, %v2535
  %v2579 = vsel %vm1276, %v2241, %v2537
  %v2580 = vsel %vm1276, %v2242, %v2539
  %v2581 = vsel %vm1276, %v2243, %v2541
  %v2582 = vsel %vm1276, %v2244, %v2543
  %v2583 = vsel %vm1276, %v2245, %v2545
  %v2584 = vsel %vm1276, %v2246, %v2547
  %v2585 = vsel %vm1276, %v2247, %v2549
  %v2586 = vsel %vm1276, %v2248, %v2551
  %v2587 = vsel %vm1276, %v2249, %v2553
  %v2588 = vsel %vm1276, %v2250, %v2555
  %v2589 = vsel %vm1276, %v2251, %v2557
  %2590 = vmatpush.msra.mxu0 %v2589
  %2591 = vmatpush.msra.mxu0 %v2588
  %2592 = vmatpush.msra.mxu0 %v2587
  %2593 = vmatpush.msra.mxu0 %v2586
  %2594 = vmatpush.msra.mxu0 %v2585
  %2595 = vmatpush.msra.mxu0 %v2584
  %2596 = vmatpush.msra.mxu0 %v2583
  %2597 = vmatpush.msra.mxu0 %v2582
  %2598 = vmatpush.msra.mxu0 %v2581
  %2599 = vmatpush.msra.mxu0 %v2580
  %2600 = vmatpush.msra.mxu0 %v2579
  %2601 = vmatpush.msra.mxu0 %v2578
  %2602 = vmatpush.msra.mxu0 %v2577
  %2603 = vmatpush.msra.mxu0 %v2576
  %2604 = vmatpush.msra.mxu0 %v2575
  %2605 = vmatpush.msra.mxu0 %v2574
  %2606 = vmatmul.f32.gmra.mxu0 %v82
  %v2607 = vpop.f32.mrf.mxu0
  %v2608 = vadd.f32 0.0, %v2607
  %2609 = vmatmul.f32.gmra.mxu0 %v83
  %v2610 = vpop.f32.mrf.mxu0
  %v2611 = vadd.f32 0.0, %v2610
  %2612 = vmatmul.f32.gmra.mxu0 %v84
  %v2613 = vpop.f32.mrf.mxu0
  %v2614 = vadd.f32 0.0, %v2613
  %2615 = vmatmul.f32.gmra.mxu0 %v85
  %v2616 = vpop.f32.mrf.mxu0
  %v2617 = vadd.f32 0.0, %v2616
  %2618 = vmatmul.f32.gmra.mxu0 %v86
  %v2619 = vpop.f32.mrf.mxu0
  %v2620 = vadd.f32 0.0, %v2619
  %2621 = vmatmul.f32.gmra.mxu0 %v87
  %v2622 = vpop.f32.mrf.mxu0
  %v2623 = vadd.f32 0.0, %v2622
  %2624 = vmatmul.f32.gmra.mxu0 %v88
  %v2625 = vpop.f32.mrf.mxu0
  %v2626 = vadd.f32 0.0, %v2625
  %2627 = vmatmul.f32.gmra.mxu0 %v89
  %v2628 = vpop.f32.mrf.mxu0
  %v2629 = vadd.f32 0.0, %v2628
  %2630 = vmatmul.f32.gmra.mxu0 %v90
  %v2631 = vpop.f32.mrf.mxu0
  %v2632 = vadd.f32 0.0, %v2631
  %2633 = vmatmul.f32.gmra.mxu0 %v91
  %v2634 = vpop.f32.mrf.mxu0
  %v2635 = vadd.f32 0.0, %v2634
  %2636 = vmatmul.f32.gmra.mxu0 %v92
  %v2637 = vpop.f32.mrf.mxu0
  %v2638 = vadd.f32 0.0, %v2637
  %2639 = vmatmul.f32.gmra.mxu0 %v93
  %v2640 = vpop.f32.mrf.mxu0
  %v2641 = vadd.f32 0.0, %v2640
  %2642 = vmatmul.f32.gmra.mxu0 %v94
  %v2643 = vpop.f32.mrf.mxu0
  %v2644 = vadd.f32 0.0, %v2643
  %2645 = vmatmul.f32.gmra.mxu0 %v95
  %v2646 = vpop.f32.mrf.mxu0
  %v2647 = vadd.f32 0.0, %v2646
  %2648 = vmatmul.f32.gmra.mxu0 %v96
  %v2649 = vpop.f32.mrf.mxu0
  %v2650 = vadd.f32 0.0, %v2649
  %2651 = vmatmul.f32.gmra.mxu0 %v97
  %v2652 = vpop.f32.mrf.mxu0
  %v2653 = vadd.f32 0.0, %v2652
  %2654 = vdwg.mxu0
  %2655 = vmatpush.msra.mxu0 %v2589
  %2656 = vmatpush.msra.mxu0 %v2588
  %2657 = vmatpush.msra.mxu0 %v2587
  %2658 = vmatpush.msra.mxu0 %v2586
  %2659 = vmatpush.msra.mxu0 %v2585
  %2660 = vmatpush.msra.mxu0 %v2584
  %2661 = vmatpush.msra.mxu0 %v2583
  %2662 = vmatpush.msra.mxu0 %v2582
  %2663 = vmatpush.msra.mxu0 %v2581
  %2664 = vmatpush.msra.mxu0 %v2580
  %2665 = vmatpush.msra.mxu0 %v2579
  %2666 = vmatpush.msra.mxu0 %v2578
  %2667 = vmatpush.msra.mxu0 %v2577
  %2668 = vmatpush.msra.mxu0 %v2576
  %2669 = vmatpush.msra.mxu0 %v2575
  %2670 = vmatpush.msra.mxu0 %v2574
  %2671 = vmatmul.f32.gmra.mxu0 %v98
  %v2672 = vpop.f32.mrf.mxu0
  %v2673 = vadd.f32 0.0, %v2672
  %2674 = vmatmul.f32.gmra.mxu0 %v99
  %v2675 = vpop.f32.mrf.mxu0
  %v2676 = vadd.f32 0.0, %v2675
  %2677 = vmatmul.f32.gmra.mxu0 %v100
  %v2678 = vpop.f32.mrf.mxu0
  %v2679 = vadd.f32 0.0, %v2678
  %2680 = vmatmul.f32.gmra.mxu0 %v101
  %v2681 = vpop.f32.mrf.mxu0
  %v2682 = vadd.f32 0.0, %v2681
  %2683 = vmatmul.f32.gmra.mxu0 %v102
  %v2684 = vpop.f32.mrf.mxu0
  %v2685 = vadd.f32 0.0, %v2684
  %2686 = vmatmul.f32.gmra.mxu0 %v103
  %v2687 = vpop.f32.mrf.mxu0
  %v2688 = vadd.f32 0.0, %v2687
  %2689 = vmatmul.f32.gmra.mxu0 %v104
  %v2690 = vpop.f32.mrf.mxu0
  %v2691 = vadd.f32 0.0, %v2690
  %2692 = vmatmul.f32.gmra.mxu0 %v105
  %v2693 = vpop.f32.mrf.mxu0
  %v2694 = vadd.f32 0.0, %v2693
  %2695 = vmatmul.f32.gmra.mxu0 %v106
  %v2696 = vpop.f32.mrf.mxu0
  %v2697 = vadd.f32 0.0, %v2696
  %2698 = vmatmul.f32.gmra.mxu0 %v107
  %v2699 = vpop.f32.mrf.mxu0
  %v2700 = vadd.f32 0.0, %v2699
  %2701 = vmatmul.f32.gmra.mxu0 %v108
  %v2702 = vpop.f32.mrf.mxu0
  %v2703 = vadd.f32 0.0, %v2702
  %2704 = vmatmul.f32.gmra.mxu0 %v109
  %v2705 = vpop.f32.mrf.mxu0
  %v2706 = vadd.f32 0.0, %v2705
  %2707 = vmatmul.f32.gmra.mxu0 %v110
  %v2708 = vpop.f32.mrf.mxu0
  %v2709 = vadd.f32 0.0, %v2708
  %2710 = vmatmul.f32.gmra.mxu0 %v111
  %v2711 = vpop.f32.mrf.mxu0
  %v2712 = vadd.f32 0.0, %v2711
  %2713 = vmatmul.f32.gmra.mxu0 %v112
  %v2714 = vpop.f32.mrf.mxu0
  %v2715 = vadd.f32 0.0, %v2714
  %2716 = vmatmul.f32.gmra.mxu0 %v113
  %v2717 = vpop.f32.mrf.mxu0
  %v2718 = vadd.f32 0.0, %v2717
  %2719 = vdwg.mxu0
  %2720 = vmatpush.msra.mxu0 %v2589
  %2721 = vmatpush.msra.mxu0 %v2588
  %2722 = vmatpush.msra.mxu0 %v2587
  %2723 = vmatpush.msra.mxu0 %v2586
  %2724 = vmatpush.msra.mxu0 %v2585
  %2725 = vmatpush.msra.mxu0 %v2584
  %2726 = vmatpush.msra.mxu0 %v2583
  %2727 = vmatpush.msra.mxu0 %v2582
  %2728 = vmatpush.msra.mxu0 %v2581
  %2729 = vmatpush.msra.mxu0 %v2580
  %2730 = vmatpush.msra.mxu0 %v2579
  %2731 = vmatpush.msra.mxu0 %v2578
  %2732 = vmatpush.msra.mxu0 %v2577
  %2733 = vmatpush.msra.mxu0 %v2576
  %2734 = vmatpush.msra.mxu0 %v2575
  %2735 = vmatpush.msra.mxu0 %v2574
  %2736 = vmatmul.f32.gmra.mxu0 %v114
  %v2737 = vpop.f32.mrf.mxu0
  %v2738 = vadd.f32 0.0, %v2737
  %2739 = vmatmul.f32.gmra.mxu0 %v115
  %v2740 = vpop.f32.mrf.mxu0
  %v2741 = vadd.f32 0.0, %v2740
  %2742 = vmatmul.f32.gmra.mxu0 %v116
  %v2743 = vpop.f32.mrf.mxu0
  %v2744 = vadd.f32 0.0, %v2743
  %2745 = vmatmul.f32.gmra.mxu0 %v117
  %v2746 = vpop.f32.mrf.mxu0
  %v2747 = vadd.f32 0.0, %v2746
  %2748 = vmatmul.f32.gmra.mxu0 %v118
  %v2749 = vpop.f32.mrf.mxu0
  %v2750 = vadd.f32 0.0, %v2749
  %2751 = vmatmul.f32.gmra.mxu0 %v119
  %v2752 = vpop.f32.mrf.mxu0
  %v2753 = vadd.f32 0.0, %v2752
  %2754 = vmatmul.f32.gmra.mxu0 %v120
  %v2755 = vpop.f32.mrf.mxu0
  %v2756 = vadd.f32 0.0, %v2755
  %2757 = vmatmul.f32.gmra.mxu0 %v121
  %v2758 = vpop.f32.mrf.mxu0
  %v2759 = vadd.f32 0.0, %v2758
  %2760 = vmatmul.f32.gmra.mxu0 %v122
  %v2761 = vpop.f32.mrf.mxu0
  %v2762 = vadd.f32 0.0, %v2761
  %2763 = vmatmul.f32.gmra.mxu0 %v123
  %v2764 = vpop.f32.mrf.mxu0
  %v2765 = vadd.f32 0.0, %v2764
  %2766 = vmatmul.f32.gmra.mxu0 %v124
  %v2767 = vpop.f32.mrf.mxu0
  %v2768 = vadd.f32 0.0, %v2767
  %2769 = vmatmul.f32.gmra.mxu0 %v125
  %v2770 = vpop.f32.mrf.mxu0
  %v2771 = vadd.f32 0.0, %v2770
  %2772 = vmatmul.f32.gmra.mxu0 %v126
  %v2773 = vpop.f32.mrf.mxu0
  %v2774 = vadd.f32 0.0, %v2773
  %2775 = vmatmul.f32.gmra.mxu0 %v127
  %v2776 = vpop.f32.mrf.mxu0
  %v2777 = vadd.f32 0.0, %v2776
  %2778 = vmatmul.f32.gmra.mxu0 %v128
  %v2779 = vpop.f32.mrf.mxu0
  %v2780 = vadd.f32 0.0, %v2779
  %2781 = vmatmul.f32.gmra.mxu0 %v129
  %v2782 = vpop.f32.mrf.mxu0
  %v2783 = vadd.f32 0.0, %v2782
  %2784 = vdwg.mxu0
  %2785 = vmatpush.msra.mxu0 %v2589
  %2786 = vmatpush.msra.mxu0 %v2588
  %2787 = vmatpush.msra.mxu0 %v2587
  %2788 = vmatpush.msra.mxu0 %v2586
  %2789 = vmatpush.msra.mxu0 %v2585
  %2790 = vmatpush.msra.mxu0 %v2584
  %2791 = vmatpush.msra.mxu0 %v2583
  %2792 = vmatpush.msra.mxu0 %v2582
  %2793 = vmatpush.msra.mxu0 %v2581
  %2794 = vmatpush.msra.mxu0 %v2580
  %2795 = vmatpush.msra.mxu0 %v2579
  %2796 = vmatpush.msra.mxu0 %v2578
  %2797 = vmatpush.msra.mxu0 %v2577
  %2798 = vmatpush.msra.mxu0 %v2576
  %2799 = vmatpush.msra.mxu0 %v2575
  %2800 = vmatpush.msra.mxu0 %v2574
  %2801 = vmatmul.f32.gmra.mxu0 %v130
  %v2802 = vpop.f32.mrf.mxu0
  %v2803 = vadd.f32 0.0, %v2802
  %2804 = vmatmul.f32.gmra.mxu0 %v131
  %v2805 = vpop.f32.mrf.mxu0
  %v2806 = vadd.f32 0.0, %v2805
  %2807 = vmatmul.f32.gmra.mxu0 %v132
  %v2808 = vpop.f32.mrf.mxu0
  %v2809 = vadd.f32 0.0, %v2808
  %2810 = vmatmul.f32.gmra.mxu0 %v133
  %v2811 = vpop.f32.mrf.mxu0
  %v2812 = vadd.f32 0.0, %v2811
  %2813 = vmatmul.f32.gmra.mxu0 %v134
  %v2814 = vpop.f32.mrf.mxu0
  %v2815 = vadd.f32 0.0, %v2814
  %2816 = vmatmul.f32.gmra.mxu0 %v135
  %v2817 = vpop.f32.mrf.mxu0
  %v2818 = vadd.f32 0.0, %v2817
  %2819 = vmatmul.f32.gmra.mxu0 %v136
  %v2820 = vpop.f32.mrf.mxu0
  %v2821 = vadd.f32 0.0, %v2820
  %2822 = vmatmul.f32.gmra.mxu0 %v137
  %v2823 = vpop.f32.mrf.mxu0
  %v2824 = vadd.f32 0.0, %v2823
  %2825 = vmatmul.f32.gmra.mxu0 %v138
  %v2826 = vpop.f32.mrf.mxu0
  %v2827 = vadd.f32 0.0, %v2826
  %2828 = vmatmul.f32.gmra.mxu0 %v139
  %v2829 = vpop.f32.mrf.mxu0
  %v2830 = vadd.f32 0.0, %v2829
  %2831 = vmatmul.f32.gmra.mxu0 %v140
  %v2832 = vpop.f32.mrf.mxu0
  %v2833 = vadd.f32 0.0, %v2832
  %2834 = vmatmul.f32.gmra.mxu0 %v141
  %v2835 = vpop.f32.mrf.mxu0
  %v2836 = vadd.f32 0.0, %v2835
  %2837 = vmatmul.f32.gmra.mxu0 %v142
  %v2838 = vpop.f32.mrf.mxu0
  %v2839 = vadd.f32 0.0, %v2838
  %2840 = vmatmul.f32.gmra.mxu0 %v143
  %v2841 = vpop.f32.mrf.mxu0
  %v2842 = vadd.f32 0.0, %v2841
  %2843 = vmatmul.f32.gmra.mxu0 %v144
  %v2844 = vpop.f32.mrf.mxu0
  %v2845 = vadd.f32 0.0, %v2844
  %2846 = vmatmul.f32.gmra.mxu0 %v145
  %v2847 = vpop.f32.mrf.mxu0
  %v2848 = vadd.f32 0.0, %v2847
  %2849 = vdwg.mxu0
  %2850 = vmatpush.msra.mxu0 %v2589
  %2851 = vmatpush.msra.mxu0 %v2588
  %2852 = vmatpush.msra.mxu0 %v2587
  %2853 = vmatpush.msra.mxu0 %v2586
  %2854 = vmatpush.msra.mxu0 %v2585
  %2855 = vmatpush.msra.mxu0 %v2584
  %2856 = vmatpush.msra.mxu0 %v2583
  %2857 = vmatpush.msra.mxu0 %v2582
  %2858 = vmatpush.msra.mxu0 %v2581
  %2859 = vmatpush.msra.mxu0 %v2580
  %2860 = vmatpush.msra.mxu0 %v2579
  %2861 = vmatpush.msra.mxu0 %v2578
  %2862 = vmatpush.msra.mxu0 %v2577
  %2863 = vmatpush.msra.mxu0 %v2576
  %2864 = vmatpush.msra.mxu0 %v2575
  %2865 = vmatpush.msra.mxu0 %v2574
  %2866 = vmatmul.f32.gmra.mxu0 %v146
  %v2867 = vpop.f32.mrf.mxu0
  %v2868 = vadd.f32 0.0, %v2867
  %2869 = vmatmul.f32.gmra.mxu0 %v147
  %v2870 = vpop.f32.mrf.mxu0
  %v2871 = vadd.f32 0.0, %v2870
  %2872 = vmatmul.f32.gmra.mxu0 %v148
  %v2873 = vpop.f32.mrf.mxu0
  %v2874 = vadd.f32 0.0, %v2873
  %2875 = vmatmul.f32.gmra.mxu0 %v149
  %v2876 = vpop.f32.mrf.mxu0
  %v2877 = vadd.f32 0.0, %v2876
  %2878 = vmatmul.f32.gmra.mxu0 %v150
  %v2879 = vpop.f32.mrf.mxu0
  %v2880 = vadd.f32 0.0, %v2879
  %2881 = vmatmul.f32.gmra.mxu0 %v151
  %v2882 = vpop.f32.mrf.mxu0
  %v2883 = vadd.f32 0.0, %v2882
  %2884 = vmatmul.f32.gmra.mxu0 %v152
  %v2885 = vpop.f32.mrf.mxu0
  %v2886 = vadd.f32 0.0, %v2885
  %2887 = vmatmul.f32.gmra.mxu0 %v153
  %v2888 = vpop.f32.mrf.mxu0
  %v2889 = vadd.f32 0.0, %v2888
  %2890 = vmatmul.f32.gmra.mxu0 %v154
  %v2891 = vpop.f32.mrf.mxu0
  %v2892 = vadd.f32 0.0, %v2891
  %2893 = vmatmul.f32.gmra.mxu0 %v155
  %v2894 = vpop.f32.mrf.mxu0
  %v2895 = vadd.f32 0.0, %v2894
  %2896 = vmatmul.f32.gmra.mxu0 %v156
  %v2897 = vpop.f32.mrf.mxu0
  %v2898 = vadd.f32 0.0, %v2897
  %2899 = vmatmul.f32.gmra.mxu0 %v157
  %v2900 = vpop.f32.mrf.mxu0
  %v2901 = vadd.f32 0.0, %v2900
  %2902 = vmatmul.f32.gmra.mxu0 %v158
  %v2903 = vpop.f32.mrf.mxu0
  %v2904 = vadd.f32 0.0, %v2903
  %2905 = vmatmul.f32.gmra.mxu0 %v159
  %v2906 = vpop.f32.mrf.mxu0
  %v2907 = vadd.f32 0.0, %v2906
  %2908 = vmatmul.f32.gmra.mxu0 %v160
  %v2909 = vpop.f32.mrf.mxu0
  %v2910 = vadd.f32 0.0, %v2909
  %2911 = vmatmul.f32.gmra.mxu0 %v161
  %v2912 = vpop.f32.mrf.mxu0
  %v2913 = vadd.f32 0.0, %v2912
  %2914 = vdwg.mxu0
  %2931 = vrot.lane.b32.xlu0 %v2673, 66
  %v2932 = vpop.permute.xlu0 %2931
  %2933 = vrot.lane.b32.xlu0 %v2676, 66
  %v2934 = vpop.permute.xlu0 %2933
  %2935 = vrot.lane.b32.xlu0 %v2679, 66
  %v2936 = vpop.permute.xlu0 %2935
  %2937 = vrot.lane.b32.xlu0 %v2682, 66
  %v2938 = vpop.permute.xlu0 %2937
  %2939 = vrot.lane.b32.xlu0 %v2685, 66
  %v2940 = vpop.permute.xlu0 %2939
  %2941 = vrot.lane.b32.xlu0 %v2688, 66
  %v2942 = vpop.permute.xlu0 %2941
  %2943 = vrot.lane.b32.xlu0 %v2691, 66
  %v2944 = vpop.permute.xlu0 %2943
  %2945 = vrot.lane.b32.xlu0 %v2694, 66
  %v2946 = vpop.permute.xlu0 %2945
  %2947 = vrot.lane.b32.xlu0 %v2697, 66
  %v2948 = vpop.permute.xlu0 %2947
  %2949 = vrot.lane.b32.xlu0 %v2700, 66
  %v2950 = vpop.permute.xlu0 %2949
  %2951 = vrot.lane.b32.xlu0 %v2703, 66
  %v2952 = vpop.permute.xlu0 %2951
  %2953 = vrot.lane.b32.xlu0 %v2706, 66
  %v2954 = vpop.permute.xlu0 %2953
  %2955 = vrot.lane.b32.xlu0 %v2709, 66
  %v2956 = vpop.permute.xlu0 %2955
  %2957 = vrot.lane.b32.xlu0 %v2712, 66
  %v2958 = vpop.permute.xlu0 %2957
  %2959 = vrot.lane.b32.xlu0 %v2715, 66
  %v2960 = vpop.permute.xlu0 %2959
  %2961 = vrot.lane.b32.xlu0 %v2718, 66
  %v2962 = vpop.permute.xlu0 %2961
  %2995 = vrot.lane.b32.xlu0 %v2738, 4
  %v2996 = vpop.permute.xlu0 %2995
  %2997 = vrot.lane.b32.xlu0 %v2741, 4
  %v2998 = vpop.permute.xlu0 %2997
  %2999 = vrot.lane.b32.xlu0 %v2744, 4
  %v3000 = vpop.permute.xlu0 %2999
  %3001 = vrot.lane.b32.xlu0 %v2747, 4
  %v3002 = vpop.permute.xlu0 %3001
  %3003 = vrot.lane.b32.xlu0 %v2750, 4
  %v3004 = vpop.permute.xlu0 %3003
  %3005 = vrot.lane.b32.xlu0 %v2753, 4
  %v3006 = vpop.permute.xlu0 %3005
  %3007 = vrot.lane.b32.xlu0 %v2756, 4
  %v3008 = vpop.permute.xlu0 %3007
  %3009 = vrot.lane.b32.xlu0 %v2759, 4
  %v3010 = vpop.permute.xlu0 %3009
  %3011 = vrot.lane.b32.xlu0 %v2762, 4
  %v3012 = vpop.permute.xlu0 %3011
  %3013 = vrot.lane.b32.xlu0 %v2765, 4
  %v3014 = vpop.permute.xlu0 %3013
  %3015 = vrot.lane.b32.xlu0 %v2768, 4
  %v3016 = vpop.permute.xlu0 %3015
  %3017 = vrot.lane.b32.xlu0 %v2771, 4
  %v3018 = vpop.permute.xlu0 %3017
  %3019 = vrot.lane.b32.xlu0 %v2774, 4
  %v3020 = vpop.permute.xlu0 %3019
  %3021 = vrot.lane.b32.xlu0 %v2777, 4
  %v3022 = vpop.permute.xlu0 %3021
  %3023 = vrot.lane.b32.xlu0 %v2780, 4
  %v3024 = vpop.permute.xlu0 %3023
  %3025 = vrot.lane.b32.xlu0 %v2783, 4
  %v3026 = vpop.permute.xlu0 %3025
  %3059 = vrot.lane.b32.xlu0 %v2803, 70
  %v3060 = vpop.permute.xlu0 %3059
  %3061 = vrot.lane.b32.xlu0 %v2806, 70
  %v3062 = vpop.permute.xlu0 %3061
  %3063 = vrot.lane.b32.xlu0 %v2809, 70
  %v3064 = vpop.permute.xlu0 %3063
  %3065 = vrot.lane.b32.xlu0 %v2812, 70
  %v3066 = vpop.permute.xlu0 %3065
  %3067 = vrot.lane.b32.xlu0 %v2815, 70
  %v3068 = vpop.permute.xlu0 %3067
  %3069 = vrot.lane.b32.xlu0 %v2818, 70
  %v3070 = vpop.permute.xlu0 %3069
  %3071 = vrot.lane.b32.xlu0 %v2821, 70
  %v3072 = vpop.permute.xlu0 %3071
  %3073 = vrot.lane.b32.xlu0 %v2824, 70
  %v3074 = vpop.permute.xlu0 %3073
  %3075 = vrot.lane.b32.xlu0 %v2827, 70
  %v3076 = vpop.permute.xlu0 %3075
  %3077 = vrot.lane.b32.xlu0 %v2830, 70
  %v3078 = vpop.permute.xlu0 %3077
  %3079 = vrot.lane.b32.xlu0 %v2833, 70
  %v3080 = vpop.permute.xlu0 %3079
  %3081 = vrot.lane.b32.xlu0 %v2836, 70
  %v3082 = vpop.permute.xlu0 %3081
  %3083 = vrot.lane.b32.xlu0 %v2839, 70
  %v3084 = vpop.permute.xlu0 %3083
  %3085 = vrot.lane.b32.xlu0 %v2842, 70
  %v3086 = vpop.permute.xlu0 %3085
  %3087 = vrot.lane.b32.xlu0 %v2845, 70
  %v3088 = vpop.permute.xlu0 %3087
  %3089 = vrot.lane.b32.xlu0 %v2848, 70
  %v3090 = vpop.permute.xlu0 %3089
  %3123 = vrot.lane.b32.xlu0 %v2868, 8
  %v3124 = vpop.permute.xlu0 %3123
  %3125 = vrot.lane.b32.xlu0 %v2871, 8
  %v3126 = vpop.permute.xlu0 %3125
  %3127 = vrot.lane.b32.xlu0 %v2874, 8
  %v3128 = vpop.permute.xlu0 %3127
  %3129 = vrot.lane.b32.xlu0 %v2877, 8
  %v3130 = vpop.permute.xlu0 %3129
  %3131 = vrot.lane.b32.xlu0 %v2880, 8
  %v3132 = vpop.permute.xlu0 %3131
  %3133 = vrot.lane.b32.xlu0 %v2883, 8
  %v3134 = vpop.permute.xlu0 %3133
  %3135 = vrot.lane.b32.xlu0 %v2886, 8
  %v3136 = vpop.permute.xlu0 %3135
  %3137 = vrot.lane.b32.xlu0 %v2889, 8
  %v3138 = vpop.permute.xlu0 %3137
  %3139 = vrot.lane.b32.xlu0 %v2892, 8
  %v3140 = vpop.permute.xlu0 %3139
  %3141 = vrot.lane.b32.xlu0 %v2895, 8
  %v3142 = vpop.permute.xlu0 %3141
  %3143 = vrot.lane.b32.xlu0 %v2898, 8
  %v3144 = vpop.permute.xlu0 %3143
  %3145 = vrot.lane.b32.xlu0 %v2901, 8
  %v3146 = vpop.permute.xlu0 %3145
  %3147 = vrot.lane.b32.xlu0 %v2904, 8
  %v3148 = vpop.permute.xlu0 %3147
  %3149 = vrot.lane.b32.xlu0 %v2907, 8
  %v3150 = vpop.permute.xlu0 %3149
  %3151 = vrot.lane.b32.xlu0 %v2910, 8
  %v3152 = vpop.permute.xlu0 %3151
  %3153 = vrot.lane.b32.xlu0 %v2913, 8
  %v3154 = vpop.permute.xlu0 %3153
  %v3171 = vsel %vm1874, %v2608, %v2932
  %v3172 = vsel %vm1874, %v2611, %v2934
  %v3173 = vsel %vm1874, %v2614, %v2936
  %v3174 = vsel %vm1874, %v2617, %v2938
  %v3175 = vsel %vm1874, %v2620, %v2940
  %v3176 = vsel %vm1874, %v2623, %v2942
  %v3177 = vsel %vm1874, %v2626, %v2944
  %v3178 = vsel %vm1874, %v2629, %v2946
  %v3179 = vsel %vm1874, %v2632, %v2948
  %v3180 = vsel %vm1874, %v2635, %v2950
  %v3181 = vsel %vm1874, %v2638, %v2952
  %v3182 = vsel %vm1874, %v2641, %v2954
  %v3183 = vsel %vm1874, %v2644, %v2956
  %v3184 = vsel %vm1874, %v2647, %v2958
  %v3185 = vsel %vm1874, %v2650, %v2960
  %v3186 = vsel %vm1874, %v2653, %v2962
  %v3187 = vsel %vm1891, %v2932, %v2996
  %v3188 = vsel %vm1891, %v2934, %v2998
  %v3189 = vsel %vm1891, %v2936, %v3000
  %v3190 = vsel %vm1891, %v2938, %v3002
  %v3191 = vsel %vm1891, %v2940, %v3004
  %v3192 = vsel %vm1891, %v2942, %v3006
  %v3193 = vsel %vm1891, %v2944, %v3008
  %v3194 = vsel %vm1891, %v2946, %v3010
  %v3195 = vsel %vm1891, %v2948, %v3012
  %v3196 = vsel %vm1891, %v2950, %v3014
  %v3197 = vsel %vm1891, %v2952, %v3016
  %v3198 = vsel %vm1891, %v2954, %v3018
  %v3199 = vsel %vm1891, %v2956, %v3020
  %v3200 = vsel %vm1891, %v2958, %v3022
  %v3201 = vsel %vm1891, %v2960, %v3024
  %v3202 = vsel %vm1891, %v2962, %v3026
  %v3203 = vsel %vm1908, %v3187, %v3060
  %v3204 = vsel %vm1908, %v3188, %v3062
  %v3205 = vsel %vm1908, %v3189, %v3064
  %v3206 = vsel %vm1908, %v3190, %v3066
  %v3207 = vsel %vm1908, %v3191, %v3068
  %v3208 = vsel %vm1908, %v3192, %v3070
  %v3209 = vsel %vm1908, %v3193, %v3072
  %v3210 = vsel %vm1908, %v3194, %v3074
  %v3211 = vsel %vm1908, %v3195, %v3076
  %v3212 = vsel %vm1908, %v3196, %v3078
  %v3213 = vsel %vm1908, %v3197, %v3080
  %v3214 = vsel %vm1908, %v3198, %v3082
  %v3215 = vsel %vm1908, %v3199, %v3084
  %v3216 = vsel %vm1908, %v3200, %v3086
  %v3217 = vsel %vm1908, %v3201, %v3088
  %v3218 = vsel %vm1908, %v3202, %v3090
  %v3219 = vsel %vm1925, %v3060, %v3124
  %v3220 = vsel %vm1925, %v3062, %v3126
  %v3221 = vsel %vm1925, %v3064, %v3128
  %v3222 = vsel %vm1925, %v3066, %v3130
  %v3223 = vsel %vm1925, %v3068, %v3132
  %v3224 = vsel %vm1925, %v3070, %v3134
  %v3225 = vsel %vm1925, %v3072, %v3136
  %v3226 = vsel %vm1925, %v3074, %v3138
  %v3227 = vsel %vm1925, %v3076, %v3140
  %v3228 = vsel %vm1925, %v3078, %v3142
  %v3229 = vsel %vm1925, %v3080, %v3144
  %v3230 = vsel %vm1925, %v3082, %v3146
  %v3231 = vsel %vm1925, %v3084, %v3148
  %v3232 = vsel %vm1925, %v3086, %v3150
  %v3233 = vsel %vm1925, %v3088, %v3152
  %v3234 = vsel %vm1925, %v3090, %v3154
  %v3235 = vld [vmem:[%s15] sm:$0xff]
  %v3236 = vld [vmem:[%s15 + $0x8] sm:$0xff]
  %v3237 = vld [vmem:[%s15 + $0x10] sm:$0xff]
  %v3238 = vld [vmem:[%s15 + $0x18] sm:$0xff]
  %v3239 = vld [vmem:[%s15 + $0x20] sm:$0xff]
  %v3240 = vld [vmem:[%s15 + $0x28] sm:$0xff]
  %v3241 = vld [vmem:[%s15 + $0x30] sm:$0xff]
  %v3242 = vld [vmem:[%s15 + $0x38] sm:$0xff]
  %v3243 = vld [vmem:[%s15 + $0x40] sm:$0xff]
  %v3244 = vld [vmem:[%s15 + $0x48] sm:$0xff]
  %v3245 = vld [vmem:[%s15 + $0x50] sm:$0xff]
  %v3246 = vld [vmem:[%s15 + $0x58] sm:$0xff]
  %v3247 = vld [vmem:[%s15 + $0x60] sm:$0xff]
  %v3248 = vld [vmem:[%s15 + $0x68] sm:$0xff]
  %v3249 = vld [vmem:[%s15 + $0x70] sm:$0xff]
  %v3250 = vld [vmem:[%s15 + $0x78] sm:$0xff]
  %v3251 = vld [vmem:[%s15 + $0x80] sm:$0xff]
  %v3252 = vld [vmem:[%s15 + $0x88] sm:$0xff]
  %v3253 = vld [vmem:[%s15 + $0x90] sm:$0xff]
  %v3254 = vld [vmem:[%s15 + $0x98] sm:$0xff]
  %v3255 = vld [vmem:[%s15 + $0xa0] sm:$0xff]
  %v3256 = vld [vmem:[%s15 + $0xa8] sm:$0xff]
  %v3257 = vld [vmem:[%s15 + $0xb0] sm:$0xff]
  %v3258 = vld [vmem:[%s15 + $0xb8] sm:$0xff]
  %v3259 = vld [vmem:[%s15 + $0xc0] sm:$0xff]
  %v3260 = vld [vmem:[%s15 + $0xc8] sm:$0xff]
  %v3261 = vld [vmem:[%s15 + $0xd0] sm:$0xff]
  %v3262 = vld [vmem:[%s15 + $0xd8] sm:$0xff]
  %v3263 = vld [vmem:[%s15 + $0xe0] sm:$0xff]
  %v3264 = vld [vmem:[%s15 + $0xe8] sm:$0xff]
  %v3265 = vld [vmem:[%s15 + $0xf0] sm:$0xff]
  %v3266 = vld [vmem:[%s15 + $0xf8] sm:$0xff]
  %v3267 = vld [vmem:[%s15 + $0x100] sm:$0xff]
  %v3268 = vld [vmem:[%s15 + $0x108] sm:$0xff]
  %v3269 = vld [vmem:[%s15 + $0x110] sm:$0xff]
  %v3270 = vld [vmem:[%s15 + $0x118] sm:$0xff]
  %v3271 = vld [vmem:[%s15 + $0x120] sm:$0xff]
  %v3272 = vld [vmem:[%s15 + $0x128] sm:$0xff]
  %v3273 = vld [vmem:[%s15 + $0x130] sm:$0xff]
  %v3274 = vld [vmem:[%s15 + $0x138] sm:$0xff]
  %v3275 = vld [vmem:[%s15 + $0x140] sm:$0xff]
  %v3276 = vld [vmem:[%s15 + $0x148] sm:$0x3]
  %v3277 = vld [vmem:[%s16] sm:$0x1]
  %v3279 = vperm.slane %v3277, 0
  %v3282 = vsel %vm1988, %v3219, 0
  %v3285 = vsel %vm1988, %v3220, 0
  %v3288 = vsel %vm1988, %v3221, 0
  %v3291 = vsel %vm1988, %v3222, 0
  %v3294 = vsel %vm1988, %v3223, 0
  %v3297 = vsel %vm1988, %v3224, 0
  %v3300 = vsel %vm1988, %v3225, 0
  %v3303 = vsel %vm1988, %v3226, 0
  %v3306 = vsel %vm1988, %v3227, 0
  %v3309 = vsel %vm1988, %v3228, 0
  %v3312 = vsel %vm1988, %v3229, 0
  %v3315 = vsel %vm1988, %v3230, 0
  %v3318 = vsel %vm1988, %v3231, 0
  %v3321 = vsel %vm1988, %v3232, 0
  %v3324 = vsel %vm1988, %v3233, 0
  %v3327 = vsel %vm1988, %v3234, 0
  %v3330 = vsel %vm2037, %v3276, 0
  %3332 = vmatpush.msra.mxu0 %v3250
  %3333 = vmatpush.msra.mxu0 %v3249
  %3334 = vmatpush.msra.mxu0 %v3248
  %3335 = vmatpush.msra.mxu0 %v3247
  %3336 = vmatpush.msra.mxu0 %v3246
  %3337 = vmatpush.msra.mxu0 %v3245
  %3338 = vmatpush.msra.mxu0 %v3244
  %3339 = vmatpush.msra.mxu0 %v3243
  %3340 = vmatpush.msra.mxu0 %v3242
  %3341 = vmatpush.msra.mxu0 %v3241
  %3342 = vmatpush.msra.mxu0 %v3240
  %3343 = vmatpush.msra.mxu0 %v3239
  %3344 = vmatpush.msra.mxu0 %v3238
  %3345 = vmatpush.msra.mxu0 %v3237
  %3346 = vmatpush.msra.mxu0 %v3236
  %3347 = vmatpush.msra.mxu0 %v3235
  %3348 = vmatmul.f32.gmra.mxu0 %v3171
  %v3349 = vpop.f32.mrf.mxu0
  %v3350 = vadd.f32 %v3279, %v3349
  %3351 = vmatmul.f32.gmra.mxu0 %v3172
  %v3352 = vpop.f32.mrf.mxu0
  %v3353 = vadd.f32 %v3279, %v3352
  %3354 = vmatmul.f32.gmra.mxu0 %v3173
  %v3355 = vpop.f32.mrf.mxu0
  %v3356 = vadd.f32 %v3279, %v3355
  %3357 = vmatmul.f32.gmra.mxu0 %v3174
  %v3358 = vpop.f32.mrf.mxu0
  %v3359 = vadd.f32 %v3279, %v3358
  %3360 = vmatmul.f32.gmra.mxu0 %v3175
  %v3361 = vpop.f32.mrf.mxu0
  %v3362 = vadd.f32 %v3279, %v3361
  %3363 = vmatmul.f32.gmra.mxu0 %v3176
  %v3364 = vpop.f32.mrf.mxu0
  %v3365 = vadd.f32 %v3279, %v3364
  %3366 = vmatmul.f32.gmra.mxu0 %v3177
  %v3367 = vpop.f32.mrf.mxu0
  %v3368 = vadd.f32 %v3279, %v3367
  %3369 = vmatmul.f32.gmra.mxu0 %v3178
  %v3370 = vpop.f32.mrf.mxu0
  %v3371 = vadd.f32 %v3279, %v3370
  %3372 = vmatmul.f32.gmra.mxu0 %v3179
  %v3373 = vpop.f32.mrf.mxu0
  %v3374 = vadd.f32 %v3279, %v3373
  %3375 = vmatmul.f32.gmra.mxu0 %v3180
  %v3376 = vpop.f32.mrf.mxu0
  %v3377 = vadd.f32 %v3279, %v3376
  %3378 = vmatmul.f32.gmra.mxu0 %v3181
  %v3379 = vpop.f32.mrf.mxu0
  %v3380 = vadd.f32 %v3279, %v3379
  %3381 = vmatmul.f32.gmra.mxu0 %v3182
  %v3382 = vpop.f32.mrf.mxu0
  %v3383 = vadd.f32 %v3279, %v3382
  %3384 = vmatmul.f32.gmra.mxu0 %v3183
  %v3385 = vpop.f32.mrf.mxu0
  %v3386 = vadd.f32 %v3279, %v3385
  %3387 = vmatmul.f32.gmra.mxu0 %v3184
  %v3388 = vpop.f32.mrf.mxu0
  %v3389 = vadd.f32 %v3279, %v3388
  %3390 = vmatmul.f32.gmra.mxu0 %v3185
  %v3391 = vpop.f32.mrf.mxu0
  %v3392 = vadd.f32 %v3279, %v3391
  %3393 = vmatmul.f32.gmra.mxu0 %v3186
  %v3394 = vpop.f32.mrf.mxu0
  %v3395 = vadd.f32 %v3279, %v3394
  %3396 = vdwg.mxu0
  %3397 = vmatpush.msra.mxu0 %v3266
  %3398 = vmatpush.msra.mxu0 %v3265
  %3399 = vmatpush.msra.mxu0 %v3264
  %3400 = vmatpush.msra.mxu0 %v3263
  %3401 = vmatpush.msra.mxu0 %v3262
  %3402 = vmatpush.msra.mxu0 %v3261
  %3403 = vmatpush.msra.mxu0 %v3260
  %3404 = vmatpush.msra.mxu0 %v3259
  %3405 = vmatpush.msra.mxu0 %v3258
  %3406 = vmatpush.msra.mxu0 %v3257
  %3407 = vmatpush.msra.mxu0 %v3256
  %3408 = vmatpush.msra.mxu0 %v3255
  %3409 = vmatpush.msra.mxu0 %v3254
  %3410 = vmatpush.msra.mxu0 %v3253
  %3411 = vmatpush.msra.mxu0 %v3252
  %3412 = vmatpush.msra.mxu0 %v3251
  %3413 = vmatmul.f32.gmra.mxu0 %v3203
  %v3414 = vpop.f32.mrf.mxu0
  %v3415 = vadd.f32 %v3350, %v3414
  %3416 = vmatmul.f32.gmra.mxu0 %v3204
  %v3417 = vpop.f32.mrf.mxu0
  %v3418 = vadd.f32 %v3353, %v3417
  %3419 = vmatmul.f32.gmra.mxu0 %v3205
  %v3420 = vpop.f32.mrf.mxu0
  %v3421 = vadd.f32 %v3356, %v3420
  %3422 = vmatmul.f32.gmra.mxu0 %v3206
  %v3423 = vpop.f32.mrf.mxu0
  %v3424 = vadd.f32 %v3359, %v3423
  %3425 = vmatmul.f32.gmra.mxu0 %v3207
  %v3426 = vpop.f32.mrf.mxu0
  %v3427 = vadd.f32 %v3362, %v3426
  %3428 = vmatmul.f32.gmra.mxu0 %v3208
  %v3429 = vpop.f32.mrf.mxu0
  %v3430 = vadd.f32 %v3365, %v3429
  %3431 = vmatmul.f32.gmra.mxu0 %v3209
  %v3432 = vpop.f32.mrf.mxu0
  %v3433 = vadd.f32 %v3368, %v3432
  %3434 = vmatmul.f32.gmra.mxu0 %v3210
  %v3435 = vpop.f32.mrf.mxu0
  %v3436 = vadd.f32 %v3371, %v3435
  %3437 = vmatmul.f32.gmra.mxu0 %v3211
  %v3438 = vpop.f32.mrf.mxu0
  %v3439 = vadd.f32 %v3374, %v3438
  %3440 = vmatmul.f32.gmra.mxu0 %v3212
  %v3441 = vpop.f32.mrf.mxu0
  %v3442 = vadd.f32 %v3377, %v3441
  %3443 = vmatmul.f32.gmra.mxu0 %v3213
  %v3444 = vpop.f32.mrf.mxu0
  %v3445 = vadd.f32 %v3380, %v3444
  %3446 = vmatmul.f32.gmra.mxu0 %v3214
  %v3447 = vpop.f32.mrf.mxu0
  %v3448 = vadd.f32 %v3383, %v3447
  %3449 = vmatmul.f32.gmra.mxu0 %v3215
  %v3450 = vpop.f32.mrf.mxu0
  %v3451 = vadd.f32 %v3386, %v3450
  %3452 = vmatmul.f32.gmra.mxu0 %v3216
  %v3453 = vpop.f32.mrf.mxu0
  %v3454 = vadd.f32 %v3389, %v3453
  %3455 = vmatmul.f32.gmra.mxu0 %v3217
  %v3456 = vpop.f32.mrf.mxu0
  %v3457 = vadd.f32 %v3392, %v3456
  %3458 = vmatmul.f32.gmra.mxu0 %v3218
  %v3459 = vpop.f32.mrf.mxu0
  %v3460 = vadd.f32 %v3395, %v3459
  %3461 = vdwg.mxu0
  %3462 = vmatpush.msra.mxu0 0.0
  %3463 = vmatpush.msra.mxu0 0.0
  %3464 = vmatpush.msra.mxu0 0.0
  %3465 = vmatpush.msra.mxu0 0.0
  %3466 = vmatpush.msra.mxu0 0.0
  %3467 = vmatpush.msra.mxu0 0.0
  %3468 = vmatpush.msra.mxu0 %v3330
  %3469 = vmatpush.msra.mxu0 %v3275
  %3470 = vmatpush.msra.mxu0 %v3274
  %3471 = vmatpush.msra.mxu0 %v3273
  %3472 = vmatpush.msra.mxu0 %v3272
  %3473 = vmatpush.msra.mxu0 %v3271
  %3474 = vmatpush.msra.mxu0 %v3270
  %3475 = vmatpush.msra.mxu0 %v3269
  %3476 = vmatpush.msra.mxu0 %v3268
  %3477 = vmatpush.msra.mxu0 %v3267
  %3478 = vmatmul.f32.gmra.mxu0 %v3282
  %v3479 = vpop.f32.mrf.mxu0
  %v3480 = vadd.f32 %v3415, %v3479
  %3481 = vmatmul.f32.gmra.mxu0 %v3285
  %v3482 = vpop.f32.mrf.mxu0
  %v3483 = vadd.f32 %v3418, %v3482
  %3484 = vmatmul.f32.gmra.mxu0 %v3288
  %v3485 = vpop.f32.mrf.mxu0
  %v3486 = vadd.f32 %v3421, %v3485
  %3487 = vmatmul.f32.gmra.mxu0 %v3291
  %v3488 = vpop.f32.mrf.mxu0
  %v3489 = vadd.f32 %v3424, %v3488
  %3490 = vmatmul.f32.gmra.mxu0 %v3294
  %v3491 = vpop.f32.mrf.mxu0
  %v3492 = vadd.f32 %v3427, %v3491
  %3493 = vmatmul.f32.gmra.mxu0 %v3297
  %v3494 = vpop.f32.mrf.mxu0
  %v3495 = vadd.f32 %v3430, %v3494
  %3496 = vmatmul.f32.gmra.mxu0 %v3300
  %v3497 = vpop.f32.mrf.mxu0
  %v3498 = vadd.f32 %v3433, %v3497
  %3499 = vmatmul.f32.gmra.mxu0 %v3303
  %v3500 = vpop.f32.mrf.mxu0
  %v3501 = vadd.f32 %v3436, %v3500
  %3502 = vmatmul.f32.gmra.mxu0 %v3306
  %v3503 = vpop.f32.mrf.mxu0
  %v3504 = vadd.f32 %v3439, %v3503
  %3505 = vmatmul.f32.gmra.mxu0 %v3309
  %v3506 = vpop.f32.mrf.mxu0
  %v3507 = vadd.f32 %v3442, %v3506
  %3508 = vmatmul.f32.gmra.mxu0 %v3312
  %v3509 = vpop.f32.mrf.mxu0
  %v3510 = vadd.f32 %v3445, %v3509
  %3511 = vmatmul.f32.gmra.mxu0 %v3315
  %v3512 = vpop.f32.mrf.mxu0
  %v3513 = vadd.f32 %v3448, %v3512
  %3514 = vmatmul.f32.gmra.mxu0 %v3318
  %v3515 = vpop.f32.mrf.mxu0
  %v3516 = vadd.f32 %v3451, %v3515
  %3517 = vmatmul.f32.gmra.mxu0 %v3321
  %v3518 = vpop.f32.mrf.mxu0
  %v3519 = vadd.f32 %v3454, %v3518
  %3520 = vmatmul.f32.gmra.mxu0 %v3324
  %v3521 = vpop.f32.mrf.mxu0
  %v3522 = vadd.f32 %v3457, %v3521
  %3523 = vmatmul.f32.gmra.mxu0 %v3327
  %v3524 = vpop.f32.mrf.mxu0
  %v3525 = vadd.f32 %v3460, %v3524
  %3526 = vdwg.mxu0
  %v3527 = vmax.f32 %v3480, 0.0
  %v3528 = vmax.f32 %v3483, 0.0
  %v3529 = vmax.f32 %v3486, 0.0
  %v3530 = vmax.f32 %v3489, 0.0
  %v3531 = vmax.f32 %v3492, 0.0
  %v3532 = vmax.f32 %v3495, 0.0
  %v3533 = vmax.f32 %v3498, 0.0
  %v3534 = vmax.f32 %v3501, 0.0
  %v3535 = vmax.f32 %v3504, 0.0
  %v3536 = vmax.f32 %v3507, 0.0
  %v3537 = vmax.f32 %v3510, 0.0
  %v3538 = vmax.f32 %v3513, 0.0
  %v3539 = vmax.f32 %v3516, 0.0
  %v3540 = vmax.f32 %v3519, 0.0
  %v3541 = vmax.f32 %v3522, 0.0
  %v3542 = vmax.f32 %v3525, 0.0
  %v3543 = vld [vmem:[%s17] sm:$0xff]
  %v3544 = vld [vmem:[%s17 + $0x8] sm:$0xff]
  %v3545 = vld [vmem:[%s17 + $0x10] sm:$0xff]
  %v3546 = vld [vmem:[%s17 + $0x18] sm:$0xff]
  %v3547 = vld [vmem:[%s17 + $0x20] sm:$0xff]
  %v3548 = vld [vmem:[%s17 + $0x28] sm:$0xff]
  %v3549 = vld [vmem:[%s17 + $0x30] sm:$0xff]
  %v3550 = vld [vmem:[%s17 + $0x38] sm:$0xff]
  %v3551 = vld [vmem:[%s17 + $0x40] sm:$0x3]
  %v3552 = vld [vmem:[%s18] sm:$0x1]
  %v3554 = vperm.slane %v3552, 0
  %v3557 = vsel %vm1874, %v2574, 0
  %v3560 = vsel %vm1874, %v2575, 0
  %v3563 = vsel %vm1874, %v2576, 0
  %v3566 = vsel %vm1874, %v2577, 0
  %v3569 = vsel %vm1874, %v2578, 0
  %v3572 = vsel %vm1874, %v2579, 0
  %v3575 = vsel %vm1874, %v2580, 0
  %v3578 = vsel %vm1874, %v2581, 0
  %v3581 = vsel %vm1874, %v2582, 0
  %v3584 = vsel %vm1874, %v2583, 0
  %v3587 = vsel %vm1874, %v2584, 0
  %v3590 = vsel %vm1874, %v2585, 0
  %v3593 = vsel %vm1874, %v2586, 0
  %v3596 = vsel %vm1874, %v2587, 0
  %v3599 = vsel %vm1874, %v2588, 0
  %v3602 = vsel %vm1874, %v2589, 0
  %v3605 = vsel %vm2037, %v3551, 0
  %3607 = vmatpush.msra.mxu0 0.0
  %3608 = vmatpush.msra.mxu0 0.0
  %3609 = vmatpush.msra.mxu0 0.0
  %3610 = vmatpush.msra.mxu0 0.0
  %3611 = vmatpush.msra.mxu0 0.0
  %3612 = vmatpush.msra.mxu0 0.0
  %3613 = vmatpush.msra.mxu0 0.0
  %3614 = vmatpush.msra.mxu0 %v3605
  %3615 = vmatpush.msra.mxu0 %v3550
  %3616 = vmatpush.msra.mxu0 %v3549
  %3617 = vmatpush.msra.mxu0 %v3548
  %3618 = vmatpush.msra.mxu0 %v3547
  %3619 = vmatpush.msra.mxu0 %v3546
  %3620 = vmatpush.msra.mxu0 %v3545
  %3621 = vmatpush.msra.mxu0 %v3544
  %3622 = vmatpush.msra.mxu0 %v3543
  %3623 = vmatmul.f32.gmra.mxu0 %v3557
  %v3624 = vpop.f32.mrf.mxu0
  %v3625 = vadd.f32 %v3554, %v3624
  %3626 = vmatmul.f32.gmra.mxu0 %v3560
  %v3627 = vpop.f32.mrf.mxu0
  %v3628 = vadd.f32 %v3554, %v3627
  %3629 = vmatmul.f32.gmra.mxu0 %v3563
  %v3630 = vpop.f32.mrf.mxu0
  %v3631 = vadd.f32 %v3554, %v3630
  %3632 = vmatmul.f32.gmra.mxu0 %v3566
  %v3633 = vpop.f32.mrf.mxu0
  %v3634 = vadd.f32 %v3554, %v3633
  %3635 = vmatmul.f32.gmra.mxu0 %v3569
  %v3636 = vpop.f32.mrf.mxu0
  %v3637 = vadd.f32 %v3554, %v3636
  %3638 = vmatmul.f32.gmra.mxu0 %v3572
  %v3639 = vpop.f32.mrf.mxu0
  %v3640 = vadd.f32 %v3554, %v3639
  %3641 = vmatmul.f32.gmra.mxu0 %v3575
  %v3642 = vpop.f32.mrf.mxu0
  %v3643 = vadd.f32 %v3554, %v3642
  %3644 = vmatmul.f32.gmra.mxu0 %v3578
  %v3645 = vpop.f32.mrf.mxu0
  %v3646 = vadd.f32 %v3554, %v3645
  %3647 = vmatmul.f32.gmra.mxu0 %v3581
  %v3648 = vpop.f32.mrf.mxu0
  %v3649 = vadd.f32 %v3554, %v3648
  %3650 = vmatmul.f32.gmra.mxu0 %v3584
  %v3651 = vpop.f32.mrf.mxu0
  %v3652 = vadd.f32 %v3554, %v3651
  %3653 = vmatmul.f32.gmra.mxu0 %v3587
  %v3654 = vpop.f32.mrf.mxu0
  %v3655 = vadd.f32 %v3554, %v3654
  %3656 = vmatmul.f32.gmra.mxu0 %v3590
  %v3657 = vpop.f32.mrf.mxu0
  %v3658 = vadd.f32 %v3554, %v3657
  %3659 = vmatmul.f32.gmra.mxu0 %v3593
  %v3660 = vpop.f32.mrf.mxu0
  %v3661 = vadd.f32 %v3554, %v3660
  %3662 = vmatmul.f32.gmra.mxu0 %v3596
  %v3663 = vpop.f32.mrf.mxu0
  %v3664 = vadd.f32 %v3554, %v3663
  %3665 = vmatmul.f32.gmra.mxu0 %v3599
  %v3666 = vpop.f32.mrf.mxu0
  %v3667 = vadd.f32 %v3554, %v3666
  %3668 = vmatmul.f32.gmra.mxu0 %v3602
  %v3669 = vpop.f32.mrf.mxu0
  %v3670 = vadd.f32 %v3554, %v3669
  %3671 = vdwg.mxu0
  %v3672 = vtanh.pop %v3625
  %v3673 = vtanh.pop %v3628
  %v3674 = vtanh.pop %v3631
  %v3675 = vtanh.pop %v3634
  %v3676 = vtanh.pop %v3637
  %v3677 = vtanh.pop %v3640
  %v3678 = vtanh.pop %v3643
  %v3679 = vtanh.pop %v3646
  %v3680 = vtanh.pop %v3649
  %v3681 = vtanh.pop %v3652
  %v3682 = vtanh.pop %v3655
  %v3683 = vtanh.pop %v3658
  %v3684 = vtanh.pop %v3661
  %v3685 = vtanh.pop %v3664
  %v3686 = vtanh.pop %v3667
  %v3687 = vtanh.pop %v3670
  %v3688 = vld [vmem:[%s19] sm:$0xff]
  %v3689 = vld [vmem:[%s19 + $0x8] sm:$0xff]
  %v3690 = vld [vmem:[%s19 + $0x10] sm:$0xff]
  %v3691 = vld [vmem:[%s19 + $0x18] sm:$0xff]
  %v3692 = vld [vmem:[%s19 + $0x20] sm:$0xff]
  %v3693 = vld [vmem:[%s19 + $0x28] sm:$0xff]
  %v3694 = vld [vmem:[%s19 + $0x30] sm:$0xff]
  %v3695 = vld [vmem:[%s19 + $0x38] sm:$0xff]
  %v3696 = vld [vmem:[%s19 + $0x40] sm:$0x3]
  %v3697 = vld [vmem:[%s20] sm:$0x1]
  %v3699 = vperm.slane %v3697, 0
  %v3702 = vsel %vm2037, %v3696, 0
  %3704 = vmatpush.msra.mxu0 0.0
  %3705 = vmatpush.msra.mxu0 0.0
  %3706 = vmatpush.msra.mxu0 0.0
  %3707 = vmatpush.msra.mxu0 0.0
  %3708 = vmatpush.msra.mxu0 0.0
  %3709 = vmatpush.msra.mxu0 0.0
  %3710 = vmatpush.msra.mxu0 0.0
  %3711 = vmatpush.msra.mxu0 %v3702
  %3712 = vmatpush.msra.mxu0 %v3695
  %3713 = vmatpush.msra.mxu0 %v3694
  %3714 = vmatpush.msra.mxu0 %v3693
  %3715 = vmatpush.msra.mxu0 %v3692
  %3716 = vmatpush.msra.mxu0 %v3691
  %3717 = vmatpush.msra.mxu0 %v3690
  %3718 = vmatpush.msra.mxu0 %v3689
  %3719 = vmatpush.msra.mxu0 %v3688
  %3720 = vmatmul.f32.gmra.mxu0 %v3557
  %v3721 = vpop.f32.mrf.mxu0
  %v3722 = vadd.f32 %v3699, %v3721
  %3723 = vmatmul.f32.gmra.mxu0 %v3560
  %v3724 = vpop.f32.mrf.mxu0
  %v3725 = vadd.f32 %v3699, %v3724
  %3726 = vmatmul.f32.gmra.mxu0 %v3563
  %v3727 = vpop.f32.mrf.mxu0
  %v3728 = vadd.f32 %v3699, %v3727
  %3729 = vmatmul.f32.gmra.mxu0 %v3566
  %v3730 = vpop.f32.mrf.mxu0
  %v3731 = vadd.f32 %v3699, %v3730
  %3732 = vmatmul.f32.gmra.mxu0 %v3569
  %v3733 = vpop.f32.mrf.mxu0
  %v3734 = vadd.f32 %v3699, %v3733
  %3735 = vmatmul.f32.gmra.mxu0 %v3572
  %v3736 = vpop.f32.mrf.mxu0
  %v3737 = vadd.f32 %v3699, %v3736
  %3738 = vmatmul.f32.gmra.mxu0 %v3575
  %v3739 = vpop.f32.mrf.mxu0
  %v3740 = vadd.f32 %v3699, %v3739
  %3741 = vmatmul.f32.gmra.mxu0 %v3578
  %v3742 = vpop.f32.mrf.mxu0
  %v3743 = vadd.f32 %v3699, %v3742
  %3744 = vmatmul.f32.gmra.mxu0 %v3581
  %v3745 = vpop.f32.mrf.mxu0
  %v3746 = vadd.f32 %v3699, %v3745
  %3747 = vmatmul.f32.gmra.mxu0 %v3584
  %v3748 = vpop.f32.mrf.mxu0
  %v3749 = vadd.f32 %v3699, %v3748
  %3750 = vmatmul.f32.gmra.mxu0 %v3587
  %v3751 = vpop.f32.mrf.mxu0
  %v3752 = vadd.f32 %v3699, %v3751
  %3753 = vmatmul.f32.gmra.mxu0 %v3590
  %v3754 = vpop.f32.mrf.mxu0
  %v3755 = vadd.f32 %v3699, %v3754
  %3756 = vmatmul.f32.gmra.mxu0 %v3593
  %v3757 = vpop.f32.mrf.mxu0
  %v3758 = vadd.f32 %v3699, %v3757
  %3759 = vmatmul.f32.gmra.mxu0 %v3596
  %v3760 = vpop.f32.mrf.mxu0
  %v3761 = vadd.f32 %v3699, %v3760
  %3762 = vmatmul.f32.gmra.mxu0 %v3599
  %v3763 = vpop.f32.mrf.mxu0
  %v3764 = vadd.f32 %v3699, %v3763
  %3765 = vmatmul.f32.gmra.mxu0 %v3602
  %v3766 = vpop.f32.mrf.mxu0
  %v3767 = vadd.f32 %v3699, %v3766
  %3768 = vdwg.mxu0
  %v3769 = vtanh.pop %v3722
  %v3770 = vtanh.pop %v3725
  %v3771 = vtanh.pop %v3728
  %v3772 = vtanh.pop %v3731
  %v3773 = vtanh.pop %v3734
  %v3774 = vtanh.pop %v3737
  %v3775 = vtanh.pop %v3740
  %v3776 = vtanh.pop %v3743
  %v3777 = vtanh.pop %v3746
  %v3778 = vtanh.pop %v3749
  %v3779 = vtanh.pop %v3752
  %v3780 = vtanh.pop %v3755
  %v3781 = vtanh.pop %v3758
  %v3782 = vtanh.pop %v3761
  %v3783 = vtanh.pop %v3764
  %v3784 = vtanh.pop %v3767
  %v3785 = vmul.f32 %v3672, %v3769
  %v3786 = vmul.f32 %v3673, %v3770
  %v3787 = vmul.f32 %v3674, %v3771
  %v3788 = vmul.f32 %v3675, %v3772
  %v3789 = vmul.f32 %v3676, %v3773
  %v3790 = vmul.f32 %v3677, %v3774
  %v3791 = vmul.f32 %v3678, %v3775
  %v3792 = vmul.f32 %v3679, %v3776
  %v3793 = vmul.f32 %v3680, %v3777
  %v3794 = vmul.f32 %v3681, %v3778
  %v3795 = vmul.f32 %v3682, %v3779
  %v3796 = vmul.f32 %v3683, %v3780
  %v3797 = vmul.f32 %v3684, %v3781
  %v3798 = vmul.f32 %v3685, %v3782
  %v3799 = vmul.f32 %v3686, %v3783
  %v3800 = vmul.f32 %v3687, %v3784
  %3817 = vrot.lane.b32.xlu0 %v3785, 64
  %v3818 = vpop.permute.xlu0 %3817
  %3819 = vrot.lane.b32.xlu0 %v3786, 64
  %v3820 = vpop.permute.xlu0 %3819
  %3821 = vrot.lane.b32.xlu0 %v3787, 64
  %v3822 = vpop.permute.xlu0 %3821
  %3823 = vrot.lane.b32.xlu0 %v3788, 64
  %v3824 = vpop.permute.xlu0 %3823
  %3825 = vrot.lane.b32.xlu0 %v3789, 64
  %v3826 = vpop.permute.xlu0 %3825
  %3827 = vrot.lane.b32.xlu0 %v3790, 64
  %v3828 = vpop.permute.xlu0 %3827
  %3829 = vrot.lane.b32.xlu0 %v3791, 64
  %v3830 = vpop.permute.xlu0 %3829
  %3831 = vrot.lane.b32.xlu0 %v3792, 64
  %v3832 = vpop.permute.xlu0 %3831
  %3833 = vrot.lane.b32.xlu0 %v3793, 64
  %v3834 = vpop.permute.xlu0 %3833
  %3835 = vrot.lane.b32.xlu0 %v3794, 64
  %v3836 = vpop.permute.xlu0 %3835
  %3837 = vrot.lane.b32.xlu0 %v3795, 64
  %v3838 = vpop.permute.xlu0 %3837
  %3839 = vrot.lane.b32.xlu0 %v3796, 64
  %v3840 = vpop.permute.xlu0 %3839
  %3841 = vrot.lane.b32.xlu0 %v3797, 64
  %v3842 = vpop.permute.xlu0 %3841
  %3843 = vrot.lane.b32.xlu0 %v3798, 64
  %v3844 = vpop.permute.xlu0 %3843
  %3845 = vrot.lane.b32.xlu0 %v3799, 64
  %v3846 = vpop.permute.xlu0 %3845
  %3847 = vrot.lane.b32.xlu0 %v3800, 64
  %v3848 = vpop.permute.xlu0 %3847
  %v3865 = vsel %vm1276, %v3527, %v3818
  %v3866 = vsel %vm1276, %v3528, %v3820
  %v3867 = vsel %vm1276, %v3529, %v3822
  %v3868 = vsel %vm1276, %v3530, %v3824
  %v3869 = vsel %vm1276, %v3531, %v3826
  %v3870 = vsel %vm1276, %v3532, %v3828
  %v3871 = vsel %vm1276, %v3533, %v3830
  %v3872 = vsel %vm1276, %v3534, %v3832
  %v3873 = vsel %vm1276, %v3535, %v3834
  %v3874 = vsel %vm1276, %v3536, %v3836
  %v3875 = vsel %vm1276, %v3537, %v3838
  %v3876 = vsel %vm1276, %v3538, %v3840
  %v3877 = vsel %vm1276, %v3539, %v3842
  %v3878 = vsel %vm1276, %v3540, %v3844
  %v3879 = vsel %vm1276, %v3541, %v3846
  %v3880 = vsel %vm1276, %v3542, %v3848
  %v3881 = vld [vmem:[%s2] sm:$0xff]
  %v3882 = vld [vmem:[%s2 + $0x8] sm:$0xff]
  %v3883 = vld [vmem:[%s2 + $0x10] sm:$0xff]
  %v3884 = vld [vmem:[%s2 + $0x18] sm:$0xff]
  %v3885 = vld [vmem:[%s2 + $0x20] sm:$0xff]
  %v3886 = vld [vmem:[%s2 + $0x28] sm:$0xff]
  %v3887 = vld [vmem:[%s2 + $0x30] sm:$0xff]
  %v3888 = vld [vmem:[%s2 + $0x38] sm:$0xff]
  %v3889 = vld [vmem:[%s2 + $0x40] sm:$0xff]
  %v3890 = vld [vmem:[%s2 + $0x48] sm:$0xff]
  %v3891 = vld [vmem:[%s2 + $0x50] sm:$0xff]
  %v3892 = vld [vmem:[%s2 + $0x58] sm:$0xff]
  %v3893 = vld [vmem:[%s2 + $0x60] sm:$0xff]
  %v3894 = vld [vmem:[%s2 + $0x68] sm:$0xff]
  %v3895 = vld [vmem:[%s2 + $0x70] sm:$0xff]
  %v3896 = vld [vmem:[%s2 + $0x78] sm:$0xff]
  %3898 = vset.pattern.permute.xlu0 0
  %3899 = vperm.xlu0 %3898, %v3881
  %v3900 = vpop.permute.xlu0 %3899
  %3903 = vset.pattern.permute.xlu0 0
  %3904 = vperm.xlu0 %3903, %v3882
  %v3905 = vpop.permute.xlu0 %3904
  %3908 = vset.pattern.permute.xlu0 0
  %3909 = vperm.xlu0 %3908, %v3883
  %v3910 = vpop.permute.xlu0 %3909
  %3913 = vset.pattern.permute.xlu0 0
  %3914 = vperm.xlu0 %3913, %v3884
  %v3915 = vpop.permute.xlu0 %3914
  %3918 = vset.pattern.permute.xlu0 0
  %3919 = vperm.xlu0 %3918, %v3885
  %v3920 = vpop.permute.xlu0 %3919
  %3923 = vset.pattern.permute.xlu0 0
  %3924 = vperm.xlu0 %3923, %v3886
  %v3925 = vpop.permute.xlu0 %3924
  %3928 = vset.pattern.permute.xlu0 0
  %3929 = vperm.xlu0 %3928, %v3887
  %v3930 = vpop.permute.xlu0 %3929
  %3933 = vset.pattern.permute.xlu0 0
  %3934 = vperm.xlu0 %3933, %v3888
  %v3935 = vpop.permute.xlu0 %3934
  %3938 = vset.pattern.permute.xlu0 0
  %3939 = vperm.xlu0 %3938, %v3889
  %v3940 = vpop.permute.xlu0 %3939
  %3943 = vset.pattern.permute.xlu0 0
  %3944 = vperm.xlu0 %3943, %v3890
  %v3945 = vpop.permute.xlu0 %3944
  %3948 = vset.pattern.permute.xlu0 0
  %3949 = vperm.xlu0 %3948, %v3891
  %v3950 = vpop.permute.xlu0 %3949
  %3953 = vset.pattern.permute.xlu0 0
  %3954 = vperm.xlu0 %3953, %v3892
  %v3955 = vpop.permute.xlu0 %3954
  %3958 = vset.pattern.permute.xlu0 0
  %3959 = vperm.xlu0 %3958, %v3893
  %v3960 = vpop.permute.xlu0 %3959
  %3963 = vset.pattern.permute.xlu0 0
  %3964 = vperm.xlu0 %3963, %v3894
  %v3965 = vpop.permute.xlu0 %3964
  %3968 = vset.pattern.permute.xlu0 0
  %3969 = vperm.xlu0 %3968, %v3895
  %v3970 = vpop.permute.xlu0 %3969
  %3973 = vset.pattern.permute.xlu0 0
  %3974 = vperm.xlu0 %3973, %v3896
  %v3975 = vpop.permute.xlu0 %3974
  %v3977 = vmul.f32 %v3865, %v3900
  %v3978 = vmul.f32 %v3866, %v3905
  %v3979 = vmul.f32 %v3867, %v3910
  %v3980 = vmul.f32 %v3868, %v3915
  %v3981 = vmul.f32 %v3869, %v3920
  %v3982 = vmul.f32 %v3870, %v3925
  %v3983 = vmul.f32 %v3871, %v3930
  %v3984 = vmul.f32 %v3872, %v3935
  %v3985 = vmul.f32 %v3873, %v3940
  %v3986 = vmul.f32 %v3874, %v3945
  %v3987 = vmul.f32 %v3875, %v3950
  %v3988 = vmul.f32 %v3876, %v3955
  %v3989 = vmul.f32 %v3877, %v3960
  %v3990 = vmul.f32 %v3878, %v3965
  %v3991 = vmul.f32 %v3879, %v3970
  %v3992 = vmul.f32 %v3880, %v3975
  %v3993 = vsel %vm1874, %v3977, 0.0
  %v3994 = vsel %vm1874, %v3978, 0.0
  %v3995 = vadd.f32 %v3993, %v3994
  %v3996 = vsel %vm1874, %v3979, 0.0
  %v3997 = vadd.f32 %v3995, %v3996
  %v3998 = vsel %vm1874, %v3980, 0.0
  %v3999 = vadd.f32 %v3997, %v3998
  %v4000 = vsel %vm1874, %v3981, 0.0
  %v4001 = vadd.f32 %v3999, %v4000
  %v4002 = vsel %vm1874, %v3982, 0.0
  %v4003 = vadd.f32 %v4001, %v4002
  %v4004 = vsel %vm1874, %v3983, 0.0
  %v4005 = vadd.f32 %v4003, %v4004
  %v4006 = vsel %vm1874, %v3984, 0.0
  %v4007 = vadd.f32 %v4005, %v4006
  %v4008 = vrot.slane %v4007, 4
  %v4009 = vadd.f32 %v4007, %v4008
  %v4010 = vrot.slane %v4009, 2
  %v4011 = vadd.f32 %v4009, %v4010
  %v4012 = vrot.slane %v4011, 1
  %v4013 = vadd.f32 %v4011, %v4012
  %v4014 = vsel %vm1874, %v3985, 0.0
  %v4015 = vsel %vm1874, %v3986, 0.0
  %v4016 = vadd.f32 %v4014, %v4015
  %v4017 = vsel %vm1874, %v3987, 0.0
  %v4018 = vadd.f32 %v4016, %v4017
  %v4019 = vsel %vm1874, %v3988, 0.0
  %v4020 = vadd.f32 %v4018, %v4019
  %v4021 = vsel %vm1874, %v3989, 0.0
  %v4022 = vadd.f32 %v4020, %v4021
  %v4023 = vsel %vm1874, %v3990, 0.0
  %v4024 = vadd.f32 %v4022, %v4023
  %v4025 = vsel %vm1874, %v3991, 0.0
  %v4026 = vadd.f32 %v4024, %v4025
  %v4027 = vsel %vm1874, %v3992, 0.0
  %v4028 = vadd.f32 %v4026, %v4027
  %v4029 = vrot.slane %v4028, 4
  %v4030 = vadd.f32 %v4028, %v4029
  %v4031 = vrot.slane %v4030, 2
  %v4032 = vadd.f32 %v4030, %v4031
  %v4033 = vrot.slane %v4032, 1
  %v4034 = vadd.f32 %v4032, %v4033
  %vm4035 = vcmask 7168
  %v4036 = vsel %vm4035, %v3881, 0.0
  %v4037 = vsel %vm4035, %v3882, 0.0
  %v4038 = vadd.f32 %v4036, %v4037
  %v4039 = vsel %vm4035, %v3883, 0.0
  %v4040 = vadd.f32 %v4038, %v4039
  %v4041 = vsel %vm4035, %v3884, 0.0
  %v4042 = vadd.f32 %v4040, %v4041
  %v4043 = vsel %vm4035, %v3885, 0.0
  %v4044 = vadd.f32 %v4042, %v4043
  %v4045 = vsel %vm4035, %v3886, 0.0
  %v4046 = vadd.f32 %v4044, %v4045
  %v4047 = vsel %vm4035, %v3887, 0.0
  %v4048 = vadd.f32 %v4046, %v4047
  %v4049 = vsel %vm4035, %v3888, 0.0
  %v4050 = vadd.f32 %v4048, %v4049
  %v4051 = vrot.slane %v4050, 4
  %v4052 = vadd.f32 %v4050, %v4051
  %v4053 = vrot.slane %v4052, 2
  %v4054 = vadd.f32 %v4052, %v4053
  %v4055 = vrot.slane %v4054, 1
  %v4056 = vadd.f32 %v4054, %v4055
  %v4057 = vsel %vm4035, %v3889, 0.0
  %v4058 = vsel %vm4035, %v3890, 0.0
  %v4059 = vadd.f32 %v4057, %v4058
  %v4060 = vsel %vm4035, %v3891, 0.0
  %v4061 = vadd.f32 %v4059, %v4060
  %v4062 = vsel %vm4035, %v3892, 0.0
  %v4063 = vadd.f32 %v4061, %v4062
  %v4064 = vsel %vm4035, %v3893, 0.0
  %v4065 = vadd.f32 %v4063, %v4064
  %v4066 = vsel %vm4035, %v3894, 0.0
  %v4067 = vadd.f32 %v4065, %v4066
  %v4068 = vsel %vm4035, %v3895, 0.0
  %v4069 = vadd.f32 %v4067, %v4068
  %v4070 = vsel %vm4035, %v3896, 0.0
  %v4071 = vadd.f32 %v4069, %v4070
  %v4072 = vrot.slane %v4071, 4
  %v4073 = vadd.f32 %v4071, %v4072
  %v4074 = vrot.slane %v4073, 2
  %v4075 = vadd.f32 %v4073, %v4074
  %v4076 = vrot.slane %v4075, 1
  %v4077 = vadd.f32 %v4075, %v4076
  %4079 = vset.pattern.permute.xlu0 0
  %4080 = vperm.xlu0 %4079, %v4056
  %v4081 = vpop.permute.xlu0 %4080
  %4084 = vset.pattern.permute.xlu0 0
  %4085 = vperm.xlu0 %4084, %v4077
  %v4086 = vpop.permute.xlu0 %4085
  %v4088 = vrcp.pop %v4081
  %v4089 = vmul.f32 %v4081, %v4088
  %v4090 = vsub.f32 1.0, %v4089
  %v4091 = vmul.f32 %v4088, %v4090
  %v4092 = vadd.f32 %v4088, %v4091
  %vm4093 = vweird.f32 %v4081
  %vm4094 = vweird.f32 %v4088
  %vm4095 = vmor %vm4093, %vm4094
  %v4096 = vsel %vm4095, %v4088, %v4092
  %v4097 = vand.u32 2147483647, %v4081
  %vm4098 = vcmp.eq.f32.partialorder %v4097, 8.507059e+37
  %v4099 = vand.u32 %v4081, 2147483648
  %v4100 = vor.u32 1.1754944e-38, %v4099
  %v4101 = vsel %vm4098, %v4100, %v4096
  %v4102 = vmul.f32 %v4013, %v4101
  %v4103 = vrcp.pop %v4086
  %v4104 = vmul.f32 %v4086, %v4103
  %v4105 = vsub.f32 1.0, %v4104
  %v4106 = vmul.f32 %v4103, %v4105
  %v4107 = vadd.f32 %v4103, %v4106
  %vm4108 = vweird.f32 %v4086
  %vm4109 = vweird.f32 %v4103
  %vm4110 = vmor %vm4108, %vm4109
  %v4111 = vsel %vm4110, %v4103, %v4107
  %v4112 = vand.u32 2147483647, %v4086
  %vm4113 = vcmp.eq.f32.partialorder %v4112, 8.507059e+37
  %v4114 = vand.u32 %v4086, 2147483648
  %v4115 = vor.u32 1.1754944e-38, %v4114
  %v4116 = vsel %vm4113, %v4115, %v4111
  %v4117 = vmul.f32 %v4034, %v4116
  %v4118 = vld [vmem:[%s21] sm:$0xff]
  %v4119 = vld [vmem:[%s21 + $0x8] sm:$0xff]
  %v4120 = vld [vmem:[%s21 + $0x10] sm:$0xff]
  %v4121 = vld [vmem:[%s21 + $0x18] sm:$0xff]
  %v4122 = vld [vmem:[%s21 + $0x20] sm:$0xff]
  %v4123 = vld [vmem:[%s21 + $0x28] sm:$0xff]
  %v4124 = vld [vmem:[%s21 + $0x30] sm:$0xff]
  %v4125 = vld [vmem:[%s21 + $0x38] sm:$0xff]
  %v4126 = vld [vmem:[%s21 + $0x40] sm:$0x3]
  %v4127 = vld [vmem:[%s22] sm:$0x1]
  %v4129 = vperm.slane %v4127, 0
  %vm4133 = vcmask 1041409
  %v4134 = vsel %vm4133, %v4117, %v4102
  %v4135 = vsel %vm1874, %v4134, 0
  %v4138 = vsel %vm2037, %v4126, 0
  %4140 = vmatpush.msra.mxu0 0.0
  %4141 = vmatpush.msra.mxu0 0.0
  %4142 = vmatpush.msra.mxu0 0.0
  %4143 = vmatpush.msra.mxu0 0.0
  %4144 = vmatpush.msra.mxu0 0.0
  %4145 = vmatpush.msra.mxu0 0.0
  %4146 = vmatpush.msra.mxu0 0.0
  %4147 = vmatpush.msra.mxu0 %v4138
  %4148 = vmatpush.msra.mxu0 %v4125
  %4149 = vmatpush.msra.mxu0 %v4124
  %4150 = vmatpush.msra.mxu0 %v4123
  %4151 = vmatpush.msra.mxu0 %v4122
  %4152 = vmatpush.msra.mxu0 %v4121
  %4153 = vmatpush.msra.mxu0 %v4120
  %4154 = vmatpush.msra.mxu0 %v4119
  %4155 = vmatpush.msra.mxu0 %v4118
  %4156 = vmatmul.f32.gmra.mxu0 %v4135
  %v4157 = vpop.f32.mrf.mxu0
  %v4158 = vadd.f32 %v4129, %v4157
  %4159 = vdwg.mxu0
  %v4160 = vmax.f32 %v4158, 0.0
  %v4161 = vld [vmem:[%s23] sm:$0xff]
  %v4162 = vld [vmem:[%s23 + $0x8] sm:$0xff]
  %v4163 = vld [vmem:[%s23 + $0x10] sm:$0xff]
  %v4164 = vld [vmem:[%s23 + $0x18] sm:$0xff]
  %v4165 = vld [vmem:[#allocation2] sm:$0x1]
  %v4167 = vperm.slane %v4165, 0
  %vm4169 = vcmask 261120
  %v4171 = vsel %vm4169, %v4160, 0
  %4173 = vmatpush.msra.mxu0 0.0
  %4174 = vmatpush.msra.mxu0 0.0
  %4175 = vmatpush.msra.mxu0 0.0
  %4176 = vmatpush.msra.mxu0 0.0
  %4177 = vmatpush.msra.mxu0 0.0
  %4178 = vmatpush.msra.mxu0 0.0
  %4179 = vmatpush.msra.mxu0 0.0
  %4180 = vmatpush.msra.mxu0 0.0
  %4181 = vmatpush.msra.mxu0 0.0
  %4182 = vmatpush.msra.mxu0 0.0
  %4183 = vmatpush.msra.mxu0 0.0
  %4184 = vmatpush.msra.mxu0 0.0
  %4185 = vmatpush.msra.mxu0 %v4164
  %4186 = vmatpush.msra.mxu0 %v4163
  %4187 = vmatpush.msra.mxu0 %v4162
  %4188 = vmatpush.msra.mxu0 %v4161
  %4189 = vmatmul.f32.gmra.mxu0 %v4171
  %v4190 = vpop.f32.mrf.mxu0
  %v4191 = vadd.f32 %v4167, %v4190
  %4192 = vdwg.mxu0
  %vm4193 = vcmask 1024
  %4194 = vst.msk [vmem:[%s25] sm:$0x3] %vm4193, %v4191
  // Predicated region
  $region102: #{forward.1} parent=0 // pred_check
    _
  $region103: #{forward.1} parent=0 // pred_check_branch
    %4196 = sbr.rel (0) target = $region105
  $region104: #{forward.1} parent=0 // pred_region
    _
  $region105: #{forward.1} parent=0 // pred_fallthru
    _
  // Predicated region
  $region106: #{forward.1} parent=0 // pred_check
    _
  $region107: #{forward.1} parent=0 // pred_check_branch
    %4198 = sbr.rel (0) target = $region109
  $region108: #{forward.1} parent=0 // pred_region
    _
  $region109: #{forward.1} parent=0 // pred_fallthru
    _

</llo_original>
